<compile_context>
chip_gen: v6e
topology: v6e:2x2x1
jax: 0.10.0
libtpu: 0.0.40
codegen_flags: <defaults>
</compile_context>

<pallas_src>
import jax
import jax.numpy as jnp
from jax import lax
from jax.experimental import pallas as pl
from jax.experimental.pallas import tpu as pltpu

EPS = 1e-5                      # InstanceNorm3d default eps
VMEM_LIMIT = 64 * 1024 * 1024   # explicit scoped-VMEM limit (safe on v5e/v6e/v7x)


# ------------------------- fused per-layer Pallas kernel ------------------------- #

def _make_layer_kernel(stride, do_count, fuse_proj):
    """Fused Conv3d(k=3) + bias + InstanceNorm3d(affine) + ReLU (+ optional 1x1 conv).

    Ref shapes seen by the kernel (one grid step == one sample n):
      x_ref : (1, Dp, Ho*Wo, 9*Cin)   in-plane (kh,kw)-im2col, all padded depths
      w_ref : (3, 9*Cin, Cout)        conv weights grouped by depth tap kd
      b_ref / g_ref / be_ref : (1, Cout)
      [pw_ref : (Cout, Cfin), pb_ref : (1, Cfin)]   optional fused 1x1 conv
      o_ref : (1, Do, Ho*Wo, Cfin)
    """

    def kernel(*refs):
        if fuse_proj:
            x_ref, w_ref, b_ref, g_ref, be_ref, pw_ref, pb_ref, o_ref = refs
        else:
            x_ref, w_ref, b_ref, g_ref, be_ref, o_ref = refs

        hwo = x_ref.shape[2]
        cout = w_ref.shape[2]
        inv_l = 1.0 / float(do_count * hwo)

        # Pass 1: conv + bias.  Accumulate the 3 depth taps with MXU matmuls at default
        # precision (bf16 inputs, f32 accumulation).  Stage the pre-norm activations in the
        # VMEM-resident output block and accumulate per-channel sum / sum-of-squares.
        s1 = jnp.zeros((1, cout), jnp.float32)
        s2 = jnp.zeros((1, cout), jnp.float32)
        for do in range(do_count):
            acc = jnp.zeros((hwo, cout), jnp.float32)
            for kd in range(3):
                acc = acc + jnp.dot(x_ref[0, stride * do + kd, :, :],
                                    w_ref[kd, :, :],
                                    preferred_element_type=jnp.float32)
            acc = acc + b_ref[...]
            o_ref[0, do, :, :] = acc
            s1 = s1 + jnp.sum(acc, axis=0, keepdims=True)
            s2 = s2 + jnp.sum(acc * acc, axis=0, keepdims=True)

        # Instance statistics over L = Do*Ho*Wo (biased variance, like PyTorch IN).
        mean = s1 * inv_l
        var = s2 * inv_l - mean * mean
        scale = lax.rsqrt(var + EPS) * g_ref[...]
        shift = be_ref[...] - mean * scale

        # Pass 2 (VMEM only): normalise + affine + ReLU (+ fused 1x1 conv epilogue).
        for do in range(do_count):
            y = jnp.maximum(o_ref[0, do, :, :] * scale + shift, 0.0)
            if fuse_proj:
                y = jnp.dot(y, pw_ref[...],
                            preferred_element_type=jnp.float32) + pb_ref[...]
            o_ref[0, do, :, :] = y

    return kernel


def single_conv_fused(x, w, b, gamma, beta, stride, proj_w=None, proj_b=None):
    """SingleConv (Conv3d k=3, p=1, bias + InstanceNorm3d(affine) + ReLU), channels-last.

    x: (N, D, H, W, Cin),  w: (3, 3, 3, Cin, Cout),  b/gamma/beta: (Cout,).
    If proj_w/proj_b are given, a 1x1 conv (Cout -> Cfin) is fused as an epilogue.
    """
    N, D, H, W, Cin = x.shape
    Cout = w.shape[-1]
    Do = (D - 1) // stride + 1      # (D + 2*pad - k)//stride + 1 with pad=1, k=3
    Ho = (H - 1) // stride + 1
    Wo = (W - 1) // stride + 1
    Dp = D + 2

    # Spatial padding (pad=1) + in-plane (kh,kw) im2col at the JAX level.  This is the only
    # glue traffic (<= 9/stride^2 of this layer's input); the depth taps are accumulated
    # inside the Pallas kernel, so no 27x patches tensor ever hits HBM.
    xp = jnp.pad(x, ((0, 0), (1, 1), (1, 1), (1, 1), (0, 0)))
    cols = []
    for kh in range(3):
        for kw in range(3):
            cols.append(xp[:, :, kh:kh + stride * Ho:stride, kw:kw + stride * Wo:stride, :])
    xcol = jnp.concatenate(cols, axis=-1).reshape(N, Dp, Ho * Wo, 9 * Cin)

    wk = w.reshape(3, 9 * Cin, Cout)          # (kd, (kh, kw, ci), co) -- matches im2col order

    fuse = proj_w is not None
    if fuse:
        assert proj_w.shape[0] == Cout, "fused 1x1 conv must consume the conv output"
        Cfin = proj_w.shape[1]
    else:
        Cfin = Cout

    in_specs = [
        pl.BlockSpec((1, Dp, Ho * Wo, 9 * Cin), lambda n: (n, 0, 0, 0)),
        pl.BlockSpec((3, 9 * Cin, Cout), lambda n: (0, 0, 0)),
        pl.BlockSpec((1, Cout), lambda n: (0, 0)),
        pl.BlockSpec((1, Cout), lambda n: (0, 0)),
        pl.BlockSpec((1, Cout), lambda n: (0, 0)),
    ]
    args = [xcol, wk, b.reshape(1, Cout), gamma.reshape(1, Cout), beta.reshape(1, Cout)]
    if fuse:
        in_specs += [
            pl.BlockSpec((Cout, Cfin), lambda n: (0, 0)),
            pl.BlockSpec((1, Cfin), lambda n: (0, 0)),
        ]
        args += [proj_w, proj_b.reshape(1, Cfin)]

    # TODO(synk): for very large volumes (v7x has only 64 MiB VMEM/TC) tile the depth axis
    # with a (N, Do-tiles) grid plus scratch stat accumulators instead of one sample/step.
    out = pl.pallas_call(
        _make_layer_kernel(stride, Do, fuse),
        out_shape=jax.ShapeDtypeStruct((N, Do, Ho * Wo, Cfin), jnp.float32),
        grid=(N,),
        in_specs=in_specs,
        out_specs=pl.BlockSpec((1, Do, Ho * Wo, Cfin), lambda n: (n, 0, 0, 0)),
        compiler_params=pltpu.CompilerParams(
            dimension_semantics=("parallel",),      # shard samples across TCs on v7x
            vmem_limit_bytes=VMEM_LIMIT,
        ),
    )(*args)
    return out.reshape(N, Do, Ho, Wo, Cfin)


# --------------------------------- forward pass ---------------------------------- #

def patch_conv3d_forward(x_ncdhw, params, patch_size=(2, 4, 4)):
    """PatchConv3D.forward (norm_layer=None).  Input/output are NCDHW like PyTorch."""
    N, C, D, H, W = x_ncdhw.shape
    pd = (-D) % patch_size[0]
    ph = (-H) % patch_size[1]
    pw = (-W) % patch_size[2]
    x = jnp.pad(x_ncdhw, ((0, 0), (0, 0), (0, pd), (0, ph), (0, pw)))  # right-only, as F.pad
    x = jnp.transpose(x, (0, 2, 3, 4, 1))                              # NCDHW -> NDHWC

    x = single_conv_fused(x, params['w1'], params['b1'], params['g1'], params['be1'], stride=2)
    x = single_conv_fused(x, params['w2'], params['b2'], params['g2'], params['be2'], stride=2)
    # conv3x3 (stride 1) with the trailing 1x1 conv fused into the same kernel.
    x = single_conv_fused(x, params['w3'], params['b3'], params['g3'], params['be3'], stride=1,
                          proj_w=params['w4'], proj_b=params['b4'])

    # self.norm is None with the default norm_layer -> no trailing LayerNorm
    return jnp.transpose(x, (0, 4, 1, 2, 3))                           # back to NCDHW


# ----------------------------- pure-JAX reference --------------------------------- #

def _ref_forward(x_ncdhw, params, patch_size=(2, 4, 4)):
    def conv(x, w, b, stride, pad):
        w_oidhw = jnp.transpose(w, (4, 3, 0, 1, 2))
        y = lax.conv_general_dilated(
            x, w_oidhw, (stride,) * 3, [(pad, pad)] * 3,
            dimension_numbers=('NCDHW', 'OIDHW', 'NCDHW'),
            precision=lax.Precision.HIGHEST)
        return y + b.reshape(1, -1, 1, 1, 1)

    def in_relu(x, g, be):
        mean = x.mean(axis=(2, 3, 4), keepdims=True)
        var = ((x - mean) ** 2).mean(axis=(2, 3, 4), keepdims=True)
        y = (x - mean) * lax.rsqrt(var + EPS)
        y = y * g.reshape(1, -1, 1, 1, 1) + be.reshape(1, -1, 1, 1, 1)
        return jnp.maximum(y, 0.0)

    N, C, D, H, W = x_ncdhw.shape
    pd = (-D) % patch_size[0]
    ph = (-H) % patch_size[1]
    pw = (-W) % patch_size[2]
    x = jnp.pad(x_ncdhw, ((0, 0), (0, 0), (0, pd), (0, ph), (0, pw)))
    x = in_relu(conv(x, params['w1'], params['b1'], 2, 1), params['g1'], params['be1'])
    x = in_relu(conv(x, params['w2'], params['b2'], 2, 1), params['g2'], params['be2'])
    x = in_relu(conv(x, params['w3'], params['b3'], 1, 1), params['g3'], params['be3'])
    y = jnp.einsum('ncdhw,co->nodhw', x, params['w4'],
                   precision=lax.Precision.HIGHEST) + params['b4'].reshape(1, -1, 1, 1, 1)
    return y


# ------------------------------------- main ---------------------------------------- #

if __name__ == "__main__":
    # Small shapes consistent with the module: in_chans=3, embed_dim=32, patch=(2,4,4).
    in_chans, embed_dim = 3, 32
    c1, c2 = embed_dim // 4, embed_dim // 2       # 8, 16
    N, D, H, W = 2, 6, 10, 10                     # H,W not multiples of 4 -> exercises padding

    key = jax.random.PRNGKey(0)
    ks = jax.random.split(key, 16)

    def conv_w(k_, ksz, cin, cout):
        fan_in = ksz * ksz * ksz * cin
        return (jax.random.normal(k_, (ksz, ksz, ksz, cin, cout), jnp.float32)
                / jnp.sqrt(jnp.float32(fan_in)))

    params = {
        'w1': conv_w(ks[0], 3, in_chans, c1),
        'b1': 0.1 * jax.random.normal(ks[1], (c1,), jnp.float32),
        'g1': 1.0 + 0.1 * jax.random.normal(ks[2], (c1,), jnp.float32),
        'be1': 0.1 * jax.random.normal(ks[3], (c1,), jnp.float32),
        'w2': conv_w(ks[4], 3, c1, c2),
        'b2': 0.1 * jax.random.normal(ks[5], (c2,), jnp.float32),
        'g2': 1.0 + 0.1 * jax.random.normal(ks[6], (c2,), jnp.float32),
        'be2': 0.1 * jax.random.normal(ks[7], (c2,), jnp.float32),
        'w3': conv_w(ks[8], 3, c2, embed_dim),
        'b3': 0.1 * jax.random.normal(ks[9], (embed_dim,), jnp.float32),
        'g3': 1.0 + 0.1 * jax.random.normal(ks[10], (embed_dim,), jnp.float32),
        'be3': 0.1 * jax.random.normal(ks[11], (embed_dim,), jnp.float32),
        'w4': (jax.random.normal(ks[12], (embed_dim, embed_dim), jnp.float32)
               / jnp.sqrt(jnp.float32(embed_dim))),
        'b4': 0.1 * jax.random.normal(ks[13], (embed_dim,), jnp.float32),
    }

    x = jax.random.normal(ks[14], (N, in_chans, D, H, W), jnp.float32)

    out = jax.jit(patch_conv3d_forward)(x, params)
    out = jax.block_until_ready(out)

    ref = _ref_forward(x, params)
    assert out.shape == ref.shape == (N, embed_dim, 2, 3, 3), (out.shape, ref.shape)
    # Kernel matmuls use default MXU precision (bf16 inputs, f32 accumulation) per the
    # performance review; vs. the Precision.HIGHEST reference the expected error is a few
    # 1e-3, so compare with a correspondingly relaxed tolerance.
    max_err = float(jnp.max(jnp.abs(out - ref)))
    assert jnp.allclose(out, ref, atol=3e-2, rtol=3e-2), max_err

    print("KERNEL_OK")
</pallas_src>

<mosaic_0001>
module attributes {stable_mosaic.version = 11 : i64} {
  func.func @kernel(%arg0: i32, %arg1: memref<1x8x36x27xf32, #tpu.memory_space<vmem>>, %arg2: memref<3x27x8xf32, #tpu.memory_space<vmem>>, %arg3: memref<1x8xf32, #tpu.memory_space<vmem>>, %arg4: memref<1x8xf32, #tpu.memory_space<vmem>>, %arg5: memref<1x8xf32, #tpu.memory_space<vmem>>, %arg6: memref<1x3x36x8xf32, #tpu.memory_space<vmem>>) attributes {dimension_semantics = [#tpu.dimension_semantics<parallel>], iteration_bounds = array<i64: 2>, scalar_prefetch = 0 : i64, scratch_operands = 0 : i64, tpu.core_type = #tpu.core_type<tc>, window_params = [{transform_indices = @transform_0, window_bounds = array<i64: 1, 8, 36, 27>}, {pipeline_mode = #tpu.pipeline_mode<synchronous>, transform_indices = @transform_1, window_bounds = array<i64: 3, 27, 8>}, {pipeline_mode = #tpu.pipeline_mode<synchronous>, transform_indices = @transform_2, window_bounds = array<i64: 1, 8>}, {pipeline_mode = #tpu.pipeline_mode<synchronous>, transform_indices = @transform_3, window_bounds = array<i64: 1, 8>}, {pipeline_mode = #tpu.pipeline_mode<synchronous>, transform_indices = @transform_4, window_bounds = array<i64: 1, 8>}, {transform_indices = @transform_5, window_bounds = array<i64: 1, 3, 36, 8>}]} {
    %cst = arith.constant 0.000000e+00 : f32
    %0 = vector.broadcast %cst : f32 to vector<1x8xf32>
    %cst_0 = arith.constant 0.000000e+00 : f32
    %1 = vector.broadcast %cst_0 : f32 to vector<1x8xf32>
    %cst_1 = arith.constant 0.000000e+00 : f32
    %2 = vector.broadcast %cst_1 : f32 to vector<36x8xf32>
    %c0 = arith.constant 0 : index
    %c0_2 = arith.constant 0 : index
    %c0_3 = arith.constant 0 : index
    %c0_4 = arith.constant 0 : index
    %3 = vector.load %arg1[%c0, %c0_2, %c0_3, %c0_4] : memref<1x8x36x27xf32, #tpu.memory_space<vmem>>, vector<1x1x36x27xf32>
    %4 = vector.shape_cast %3 : vector<1x1x36x27xf32> to vector<36x27xf32>
    %c0_5 = arith.constant 0 : index
    %c0_6 = arith.constant 0 : index
    %c0_7 = arith.constant 0 : index
    %5 = vector.load %arg2[%c0_5, %c0_6, %c0_7] : memref<3x27x8xf32, #tpu.memory_space<vmem>>, vector<1x27x8xf32>
    %6 = vector.shape_cast %5 : vector<1x27x8xf32> to vector<27x8xf32>
    %cst_8 = arith.constant dense<0.000000e+00> : vector<36x8xf32>
    %7 = tpu.matmul %4, %6, %cst_8 {dimension_numbers = #tpu.dot_dimension_numbers<[1], [0], [0], [1], [0, 0, 1, 1], [], []>} : vector<36x27xf32>, vector<27x8xf32>, vector<36x8xf32> -> vector<36x8xf32>
    %8 = arith.addf %2, %7 : vector<36x8xf32>
    %c0_9 = arith.constant 0 : index
    %c1 = arith.constant 1 : index
    %c0_10 = arith.constant 0 : index
    %c0_11 = arith.constant 0 : index
    %9 = vector.load %arg1[%c0_9, %c1, %c0_10, %c0_11] : memref<1x8x36x27xf32, #tpu.memory_space<vmem>>, vector<1x1x36x27xf32>
    %10 = vector.shape_cast %9 : vector<1x1x36x27xf32> to vector<36x27xf32>
    %c1_12 = arith.constant 1 : index
    %c0_13 = arith.constant 0 : index
    %c0_14 = arith.constant 0 : index
    %11 = vector.load %arg2[%c1_12, %c0_13, %c0_14] : memref<3x27x8xf32, #tpu.memory_space<vmem>>, vector<1x27x8xf32>
    %12 = vector.shape_cast %11 : vector<1x27x8xf32> to vector<27x8xf32>
    %cst_15 = arith.constant dense<0.000000e+00> : vector<36x8xf32>
    %13 = tpu.matmul %10, %12, %cst_15 {dimension_numbers = #tpu.dot_dimension_numbers<[1], [0], [0], [1], [0, 0, 1, 1], [], []>} : vector<36x27xf32>, vector<27x8xf32>, vector<36x8xf32> -> vector<36x8xf32>
    %14 = arith.addf %8, %13 : vector<36x8xf32>
    %c0_16 = arith.constant 0 : index
    %c2 = arith.constant 2 : index
    %c0_17 = arith.constant 0 : index
    %c0_18 = arith.constant 0 : index
    %15 = vector.load %arg1[%c0_16, %c2, %c0_17, %c0_18] : memref<1x8x36x27xf32, #tpu.memory_space<vmem>>, vector<1x1x36x27xf32>
    %16 = vector.shape_cast %15 : vector<1x1x36x27xf32> to vector<36x27xf32>
    %c2_19 = arith.constant 2 : index
    %c0_20 = arith.constant 0 : index
    %c0_21 = arith.constant 0 : index
    %17 = vector.load %arg2[%c2_19, %c0_20, %c0_21] : memref<3x27x8xf32, #tpu.memory_space<vmem>>, vector<1x27x8xf32>
    %18 = vector.shape_cast %17 : vector<1x27x8xf32> to vector<27x8xf32>
    %cst_22 = arith.constant dense<0.000000e+00> : vector<36x8xf32>
    %19 = tpu.matmul %16, %18, %cst_22 {dimension_numbers = #tpu.dot_dimension_numbers<[1], [0], [0], [1], [0, 0, 1, 1], [], []>} : vector<36x27xf32>, vector<27x8xf32>, vector<36x8xf32> -> vector<36x8xf32>
    %20 = arith.addf %14, %19 : vector<36x8xf32>
    %c0_23 = arith.constant 0 : index
    %c0_24 = arith.constant 0 : index
    %21 = vector.load %arg3[%c0_23, %c0_24] : memref<1x8xf32, #tpu.memory_space<vmem>>, vector<1x8xf32>
    %22 = vector.broadcast %21 : vector<1x8xf32> to vector<36x8xf32>
    %23 = arith.addf %20, %22 : vector<36x8xf32>
    %c0_25 = arith.constant 0 : index
    %c0_26 = arith.constant 0 : index
    %c0_27 = arith.constant 0 : index
    %c0_28 = arith.constant 0 : index
    %24 = vector.load %arg6[%c0_25, %c0_26, %c0_27, %c0_28] : memref<1x3x36x8xf32, #tpu.memory_space<vmem>>, vector<1x1x36x8xf32>
    %25 = vector.shape_cast %24 : vector<1x1x36x8xf32> to vector<36x8xf32>
    %26 = vector.shape_cast %23 : vector<36x8xf32> to vector<1x1x36x8xf32>
    tpu.vector_store %arg6[%c0_25, %c0_26, %c0_27, %c0_28], %26 {strides = array<i32>} : memref<1x3x36x8xf32, #tpu.memory_space<vmem>>, vector<1x1x36x8xf32>,
    %cst_29 = arith.constant dense<0.000000e+00> : vector<8xf32>
    %27 = vector.multi_reduction <add>, %23, %cst_29 [0] : vector<36x8xf32> to vector<8xf32>
    %28 = vector.shape_cast %27 : vector<8xf32> to vector<1x8xf32>
    %29 = arith.addf %0, %28 : vector<1x8xf32>
    %30 = arith.mulf %23, %23 : vector<36x8xf32>
    %cst_30 = arith.constant dense<0.000000e+00> : vector<8xf32>
    %31 = vector.multi_reduction <add>, %30, %cst_30 [0] : vector<36x8xf32> to vector<8xf32>
    %32 = vector.shape_cast %31 : vector<8xf32> to vector<1x8xf32>
    %33 = arith.addf %1, %32 : vector<1x8xf32>
    %cst_31 = arith.constant 0.000000e+00 : f32
    %34 = vector.broadcast %cst_31 : f32 to vector<36x8xf32>
    %c0_32 = arith.constant 0 : index
    %c2_33 = arith.constant 2 : index
    %c0_34 = arith.constant 0 : index
    %c0_35 = arith.constant 0 : index
    %35 = vector.load %arg1[%c0_32, %c2_33, %c0_34, %c0_35] : memref<1x8x36x27xf32, #tpu.memory_space<vmem>>, vector<1x1x36x27xf32>
    %36 = vector.shape_cast %35 : vector<1x1x36x27xf32> to vector<36x27xf32>
    %c0_36 = arith.constant 0 : index
    %c0_37 = arith.constant 0 : index
    %c0_38 = arith.constant 0 : index
    %37 = vector.load %arg2[%c0_36, %c0_37, %c0_38] : memref<3x27x8xf32, #tpu.memory_space<vmem>>, vector<1x27x8xf32>
    %38 = vector.shape_cast %37 : vector<1x27x8xf32> to vector<27x8xf32>
    %cst_39 = arith.constant dense<0.000000e+00> : vector<36x8xf32>
    %39 = tpu.matmul %36, %38, %cst_39 {dimension_numbers = #tpu.dot_dimension_numbers<[1], [0], [0], [1], [0, 0, 1, 1], [], []>} : vector<36x27xf32>, vector<27x8xf32>, vector<36x8xf32> -> vector<36x8xf32>
    %40 = arith.addf %34, %39 : vector<36x8xf32>
    %c0_40 = arith.constant 0 : index
    %c3 = arith.constant 3 : index
    %c0_41 = arith.constant 0 : index
    %c0_42 = arith.constant 0 : index
    %41 = vector.load %arg1[%c0_40, %c3, %c0_41, %c0_42] : memref<1x8x36x27xf32, #tpu.memory_space<vmem>>, vector<1x1x36x27xf32>
    %42 = vector.shape_cast %41 : vector<1x1x36x27xf32> to vector<36x27xf32>
    %c1_43 = arith.constant 1 : index
    %c0_44 = arith.constant 0 : index
    %c0_45 = arith.constant 0 : index
    %43 = vector.load %arg2[%c1_43, %c0_44, %c0_45] : memref<3x27x8xf32, #tpu.memory_space<vmem>>, vector<1x27x8xf32>
    %44 = vector.shape_cast %43 : vector<1x27x8xf32> to vector<27x8xf32>
    %cst_46 = arith.constant dense<0.000000e+00> : vector<36x8xf32>
    %45 = tpu.matmul %42, %44, %cst_46 {dimension_numbers = #tpu.dot_dimension_numbers<[1], [0], [0], [1], [0, 0, 1, 1], [], []>} : vector<36x27xf32>, vector<27x8xf32>, vector<36x8xf32> -> vector<36x8xf32>
    %46 = arith.addf %40, %45 : vector<36x8xf32>
    %c0_47 = arith.constant 0 : index
    %c4 = arith.constant 4 : index
    %c0_48 = arith.constant 0 : index
    %c0_49 = arith.constant 0 : index
    %47 = vector.load %arg1[%c0_47, %c4, %c0_48, %c0_49] : memref<1x8x36x27xf32, #tpu.memory_space<vmem>>, vector<1x1x36x27xf32>
    %48 = vector.shape_cast %47 : vector<1x1x36x27xf32> to vector<36x27xf32>
    %c2_50 = arith.constant 2 : index
    %c0_51 = arith.constant 0 : index
    %c0_52 = arith.constant 0 : index
    %49 = vector.load %arg2[%c2_50, %c0_51, %c0_52] : memref<3x27x8xf32, #tpu.memory_space<vmem>>, vector<1x27x8xf32>
    %50 = vector.shape_cast %49 : vector<1x27x8xf32> to vector<27x8xf32>
    %cst_53 = arith.constant dense<0.000000e+00> : vector<36x8xf32>
    %51 = tpu.matmul %48, %50, %cst_53 {dimension_numbers = #tpu.dot_dimension_numbers<[1], [0], [0], [1], [0, 0, 1, 1], [], []>} : vector<36x27xf32>, vector<27x8xf32>, vector<36x8xf32> -> vector<36x8xf32>
    %52 = arith.addf %46, %51 : vector<36x8xf32>
    %c0_54 = arith.constant 0 : index
    %c0_55 = arith.constant 0 : index
    %53 = vector.load %arg3[%c0_54, %c0_55] : memref<1x8xf32, #tpu.memory_space<vmem>>, vector<1x8xf32>
    %54 = vector.broadcast %53 : vector<1x8xf32> to vector<36x8xf32>
    %55 = arith.addf %52, %54 : vector<36x8xf32>
    %c0_56 = arith.constant 0 : index
    %c1_57 = arith.constant 1 : index
    %c0_58 = arith.constant 0 : index
    %c0_59 = arith.constant 0 : index
    %56 = vector.load %arg6[%c0_56, %c1_57, %c0_58, %c0_59] : memref<1x3x36x8xf32, #tpu.memory_space<vmem>>, vector<1x1x36x8xf32>
    %57 = vector.shape_cast %56 : vector<1x1x36x8xf32> to vector<36x8xf32>
    %58 = vector.shape_cast %55 : vector<36x8xf32> to vector<1x1x36x8xf32>
    tpu.vector_store %arg6[%c0_56, %c1_57, %c0_58, %c0_59], %58 {strides = array<i32>} : memref<1x3x36x8xf32, #tpu.memory_space<vmem>>, vector<1x1x36x8xf32>,
    %cst_60 = arith.constant dense<0.000000e+00> : vector<8xf32>
    %59 = vector.multi_reduction <add>, %55, %cst_60 [0] : vector<36x8xf32> to vector<8xf32>
    %60 = vector.shape_cast %59 : vector<8xf32> to vector<1x8xf32>
    %61 = arith.addf %29, %60 : vector<1x8xf32>
    %62 = arith.mulf %55, %55 : vector<36x8xf32>
    %cst_61 = arith.constant dense<0.000000e+00> : vector<8xf32>
    %63 = vector.multi_reduction <add>, %62, %cst_61 [0] : vector<36x8xf32> to vector<8xf32>
    %64 = vector.shape_cast %63 : vector<8xf32> to vector<1x8xf32>
    %65 = arith.addf %33, %64 : vector<1x8xf32>
    %cst_62 = arith.constant 0.000000e+00 : f32
    %66 = vector.broadcast %cst_62 : f32 to vector<36x8xf32>
    %c0_63 = arith.constant 0 : index
    %c4_64 = arith.constant 4 : index
    %c0_65 = arith.constant 0 : index
    %c0_66 = arith.constant 0 : index
    %67 = vector.load %arg1[%c0_63, %c4_64, %c0_65, %c0_66] : memref<1x8x36x27xf32, #tpu.memory_space<vmem>>, vector<1x1x36x27xf32>
    %68 = vector.shape_cast %67 : vector<1x1x36x27xf32> to vector<36x27xf32>
    %c0_67 = arith.constant 0 : index
    %c0_68 = arith.constant 0 : index
    %c0_69 = arith.constant 0 : index
    %69 = vector.load %arg2[%c0_67, %c0_68, %c0_69] : memref<3x27x8xf32, #tpu.memory_space<vmem>>, vector<1x27x8xf32>
    %70 = vector.shape_cast %69 : vector<1x27x8xf32> to vector<27x8xf32>
    %cst_70 = arith.constant dense<0.000000e+00> : vector<36x8xf32>
    %71 = tpu.matmul %68, %70, %cst_70 {dimension_numbers = #tpu.dot_dimension_numbers<[1], [0], [0], [1], [0, 0, 1, 1], [], []>} : vector<36x27xf32>, vector<27x8xf32>, vector<36x8xf32> -> vector<36x8xf32>
    %72 = arith.addf %66, %71 : vector<36x8xf32>
    %c0_71 = arith.constant 0 : index
    %c5 = arith.constant 5 : index
    %c0_72 = arith.constant 0 : index
    %c0_73 = arith.constant 0 : index
    %73 = vector.load %arg1[%c0_71, %c5, %c0_72, %c0_73] : memref<1x8x36x27xf32, #tpu.memory_space<vmem>>, vector<1x1x36x27xf32>
    %74 = vector.shape_cast %73 : vector<1x1x36x27xf32> to vector<36x27xf32>
    %c1_74 = arith.constant 1 : index
    %c0_75 = arith.constant 0 : index
    %c0_76 = arith.constant 0 : index
    %75 = vector.load %arg2[%c1_74, %c0_75, %c0_76] : memref<3x27x8xf32, #tpu.memory_space<vmem>>, vector<1x27x8xf32>
    %76 = vector.shape_cast %75 : vector<1x27x8xf32> to vector<27x8xf32>
    %cst_77 = arith.constant dense<0.000000e+00> : vector<36x8xf32>
    %77 = tpu.matmul %74, %76, %cst_77 {dimension_numbers = #tpu.dot_dimension_numbers<[1], [0], [0], [1], [0, 0, 1, 1], [], []>} : vector<36x27xf32>, vector<27x8xf32>, vector<36x8xf32> -> vector<36x8xf32>
    %78 = arith.addf %72, %77 : vector<36x8xf32>
    %c0_78 = arith.constant 0 : index
    %c6 = arith.constant 6 : index
    %c0_79 = arith.constant 0 : index
    %c0_80 = arith.constant 0 : index
    %79 = vector.load %arg1[%c0_78, %c6, %c0_79, %c0_80] : memref<1x8x36x27xf32, #tpu.memory_space<vmem>>, vector<1x1x36x27xf32>
    %80 = vector.shape_cast %79 : vector<1x1x36x27xf32> to vector<36x27xf32>
    %c2_81 = arith.constant 2 : index
    %c0_82 = arith.constant 0 : index
    %c0_83 = arith.constant 0 : index
    %81 = vector.load %arg2[%c2_81, %c0_82, %c0_83] : memref<3x27x8xf32, #tpu.memory_space<vmem>>, vector<1x27x8xf32>
    %82 = vector.shape_cast %81 : vector<1x27x8xf32> to vector<27x8xf32>
    %cst_84 = arith.constant dense<0.000000e+00> : vector<36x8xf32>
    %83 = tpu.matmul %80, %82, %cst_84 {dimension_numbers = #tpu.dot_dimension_numbers<[1], [0], [0], [1], [0, 0, 1, 1], [], []>} : vector<36x27xf32>, vector<27x8xf32>, vector<36x8xf32> -> vector<36x8xf32>
    %84 = arith.addf %78, %83 : vector<36x8xf32>
    %c0_85 = arith.constant 0 : index
    %c0_86 = arith.constant 0 : index
    %85 = vector.load %arg3[%c0_85, %c0_86] : memref<1x8xf32, #tpu.memory_space<vmem>>, vector<1x8xf32>
    %86 = vector.broadcast %85 : vector<1x8xf32> to vector<36x8xf32>
    %87 = arith.addf %84, %86 : vector<36x8xf32>
    %c0_87 = arith.constant 0 : index
    %c2_88 = arith.constant 2 : index
    %c0_89 = arith.constant 0 : index
    %c0_90 = arith.constant 0 : index
    %88 = vector.load %arg6[%c0_87, %c2_88, %c0_89, %c0_90] : memref<1x3x36x8xf32, #tpu.memory_space<vmem>>, vector<1x1x36x8xf32>
    %89 = vector.shape_cast %88 : vector<1x1x36x8xf32> to vector<36x8xf32>
    %90 = vector.shape_cast %87 : vector<36x8xf32> to vector<1x1x36x8xf32>
    tpu.vector_store %arg6[%c0_87, %c2_88, %c0_89, %c0_90], %90 {strides = array<i32>} : memref<1x3x36x8xf32, #tpu.memory_space<vmem>>, vector<1x1x36x8xf32>,
    %cst_91 = arith.constant dense<0.000000e+00> : vector<8xf32>
    %91 = vector.multi_reduction <add>, %87, %cst_91 [0] : vector<36x8xf32> to vector<8xf32>
    %92 = vector.shape_cast %91 : vector<8xf32> to vector<1x8xf32>
    %93 = arith.addf %61, %92 : vector<1x8xf32>
    %94 = arith.mulf %87, %87 : vector<36x8xf32>
    %cst_92 = arith.constant dense<0.000000e+00> : vector<8xf32>
    %95 = vector.multi_reduction <add>, %94, %cst_92 [0] : vector<36x8xf32> to vector<8xf32>
    %96 = vector.shape_cast %95 : vector<8xf32> to vector<1x8xf32>
    %97 = arith.addf %65, %96 : vector<1x8xf32>
    %cst_93 = arith.constant 0.00925925932 : f32
    %98 = vector.broadcast %cst_93 : f32 to vector<1x8xf32>
    %99 = arith.mulf %93, %98 : vector<1x8xf32>
    %cst_94 = arith.constant 0.00925925932 : f32
    %100 = vector.broadcast %cst_94 : f32 to vector<1x8xf32>
    %101 = arith.mulf %97, %100 : vector<1x8xf32>
    %102 = arith.mulf %99, %99 : vector<1x8xf32>
    %103 = arith.subf %101, %102 : vector<1x8xf32>
    %cst_95 = arith.constant 9.99999974E-6 : f32
    %104 = vector.broadcast %cst_95 : f32 to vector<1x8xf32>
    %105 = arith.addf %103, %104 : vector<1x8xf32>
    %106 = math.rsqrt %105 : vector<1x8xf32>
    %c0_96 = arith.constant 0 : index
    %c0_97 = arith.constant 0 : index
    %107 = vector.load %arg4[%c0_96, %c0_97] : memref<1x8xf32, #tpu.memory_space<vmem>>, vector<1x8xf32>
    %108 = arith.mulf %106, %107 : vector<1x8xf32>
    %c0_98 = arith.constant 0 : index
    %c0_99 = arith.constant 0 : index
    %109 = vector.load %arg5[%c0_98, %c0_99] : memref<1x8xf32, #tpu.memory_space<vmem>>, vector<1x8xf32>
    %110 = arith.mulf %99, %108 : vector<1x8xf32>
    %111 = arith.subf %109, %110 : vector<1x8xf32>
    %c0_100 = arith.constant 0 : index
    %c0_101 = arith.constant 0 : index
    %c0_102 = arith.constant 0 : index
    %c0_103 = arith.constant 0 : index
    %112 = vector.load %arg6[%c0_100, %c0_101, %c0_102, %c0_103] : memref<1x3x36x8xf32, #tpu.memory_space<vmem>>, vector<1x1x36x8xf32>
    %113 = vector.shape_cast %112 : vector<1x1x36x8xf32> to vector<36x8xf32>
    %114 = vector.broadcast %108 : vector<1x8xf32> to vector<36x8xf32>
    %115 = arith.mulf %113, %114 : vector<36x8xf32>
    %116 = vector.broadcast %111 : vector<1x8xf32> to vector<36x8xf32>
    %117 = arith.addf %115, %116 : vector<36x8xf32>
    %cst_104 = arith.constant 0.000000e+00 : f32
    %118 = vector.broadcast %cst_104 : f32 to vector<36x8xf32>
    %119 = arith.maximumf %117, %118 : vector<36x8xf32>
    %c0_105 = arith.constant 0 : index
    %c0_106 = arith.constant 0 : index
    %c0_107 = arith.constant 0 : index
    %c0_108 = arith.constant 0 : index
    %120 = vector.load %arg6[%c0_105, %c0_106, %c0_107, %c0_108] : memref<1x3x36x8xf32, #tpu.memory_space<vmem>>, vector<1x1x36x8xf32>
    %121 = vector.shape_cast %120 : vector<1x1x36x8xf32> to vector<36x8xf32>
    %122 = vector.shape_cast %119 : vector<36x8xf32> to vector<1x1x36x8xf32>
    tpu.vector_store %arg6[%c0_105, %c0_106, %c0_107, %c0_108], %122 {strides = array<i32>} : memref<1x3x36x8xf32, #tpu.memory_space<vmem>>, vector<1x1x36x8xf32>,
    %c0_109 = arith.constant 0 : index
    %c1_110 = arith.constant 1 : index
    %c0_111 = arith.constant 0 : index
    %c0_112 = arith.constant 0 : index
    %123 = vector.load %arg6[%c0_109, %c1_110, %c0_111, %c0_112] : memref<1x3x36x8xf32, #tpu.memory_space<vmem>>, vector<1x1x36x8xf32>
    %124 = vector.shape_cast %123 : vector<1x1x36x8xf32> to vector<36x8xf32>
    %125 = vector.broadcast %108 : vector<1x8xf32> to vector<36x8xf32>
    %126 = arith.mulf %124, %125 : vector<36x8xf32>
    %127 = vector.broadcast %111 : vector<1x8xf32> to vector<36x8xf32>
    %128 = arith.addf %126, %127 : vector<36x8xf32>
    %cst_113 = arith.constant 0.000000e+00 : f32
    %129 = vector.broadcast %cst_113 : f32 to vector<36x8xf32>
    %130 = arith.maximumf %128, %129 : vector<36x8xf32>
    %c0_114 = arith.constant 0 : index
    %c1_115 = arith.constant 1 : index
    %c0_116 = arith.constant 0 : index
    %c0_117 = arith.constant 0 : index
    %131 = vector.load %arg6[%c0_114, %c1_115, %c0_116, %c0_117] : memref<1x3x36x8xf32, #tpu.memory_space<vmem>>, vector<1x1x36x8xf32>
    %132 = vector.shape_cast %131 : vector<1x1x36x8xf32> to vector<36x8xf32>
    %133 = vector.shape_cast %130 : vector<36x8xf32> to vector<1x1x36x8xf32>
    tpu.vector_store %arg6[%c0_114, %c1_115, %c0_116, %c0_117], %133 {strides = array<i32>} : memref<1x3x36x8xf32, #tpu.memory_space<vmem>>, vector<1x1x36x8xf32>,
    %c0_118 = arith.constant 0 : index
    %c2_119 = arith.constant 2 : index
    %c0_120 = arith.constant 0 : index
    %c0_121 = arith.constant 0 : index
    %134 = vector.load %arg6[%c0_118, %c2_119, %c0_120, %c0_121] : memref<1x3x36x8xf32, #tpu.memory_space<vmem>>, vector<1x1x36x8xf32>
    %135 = vector.shape_cast %134 : vector<1x1x36x8xf32> to vector<36x8xf32>
    %136 = vector.broadcast %108 : vector<1x8xf32> to vector<36x8xf32>
    %137 = arith.mulf %135, %136 : vector<36x8xf32>
    %138 = vector.broadcast %111 : vector<1x8xf32> to vector<36x8xf32>
    %139 = arith.addf %137, %138 : vector<36x8xf32>
    %cst_122 = arith.constant 0.000000e+00 : f32
    %140 = vector.broadcast %cst_122 : f32 to vector<36x8xf32>
    %141 = arith.maximumf %139, %140 : vector<36x8xf32>
    %c0_123 = arith.constant 0 : index
    %c2_124 = arith.constant 2 : index
    %c0_125 = arith.constant 0 : index
    %c0_126 = arith.constant 0 : index
    %142 = vector.load %arg6[%c0_123, %c2_124, %c0_125, %c0_126] : memref<1x3x36x8xf32, #tpu.memory_space<vmem>>, vector<1x1x36x8xf32>
    %143 = vector.shape_cast %142 : vector<1x1x36x8xf32> to vector<36x8xf32>
    %144 = vector.shape_cast %141 : vector<36x8xf32> to vector<1x1x36x8xf32>
    tpu.vector_store %arg6[%c0_123, %c2_124, %c0_125, %c0_126], %144 {strides = array<i32>} : memref<1x3x36x8xf32, #tpu.memory_space<vmem>>, vector<1x1x36x8xf32>,
    return
  }
  func.func @transform_0(%arg0: i32) -> (i32, i32, i32, i32) {
    %c0_i32 = arith.constant 0 : i32
    %c0_i32_0 = arith.constant 0 : i32
    %c0_i32_1 = arith.constant 0 : i32
    %c0_i32_2 = arith.constant 0 : i32
    return %arg0, %c0_i32, %c0_i32_0, %c0_i32_1 : i32, i32, i32, i32
  }
  func.func @transform_1(%arg0: i32) -> (i32, i32, i32) {
    %c0_i32 = arith.constant 0 : i32
    %c0_i32_0 = arith.constant 0 : i32
    %c0_i32_1 = arith.constant 0 : i32
    %c0_i32_2 = arith.constant 0 : i32
    return %c0_i32, %c0_i32_0, %c0_i32_1 : i32, i32, i32
  }
  func.func @transform_2(%arg0: i32) -> (i32, i32) {
    %c0_i32 = arith.constant 0 : i32
    %c0_i32_0 = arith.constant 0 : i32
    %c0_i32_1 = arith.constant 0 : i32
    return %c0_i32, %c0_i32_0 : i32, i32
  }
  func.func @transform_3(%arg0: i32) -> (i32, i32) {
    %c0_i32 = arith.constant 0 : i32
    %c0_i32_0 = arith.constant 0 : i32
    %c0_i32_1 = arith.constant 0 : i32
    return %c0_i32, %c0_i32_0 : i32, i32
  }
  func.func @transform_4(%arg0: i32) -> (i32, i32) {
    %c0_i32 = arith.constant 0 : i32
    %c0_i32_0 = arith.constant 0 : i32
    %c0_i32_1 = arith.constant 0 : i32
    return %c0_i32, %c0_i32_0 : i32, i32
  }
  func.func @transform_5(%arg0: i32) -> (i32, i32, i32, i32) {
    %c0_i32 = arith.constant 0 : i32
    %c0_i32_0 = arith.constant 0 : i32
    %c0_i32_1 = arith.constant 0 : i32
    %c0_i32_2 = arith.constant 0 : i32
    return %arg0, %c0_i32, %c0_i32_0, %c0_i32_1 : i32, i32, i32, i32
  }
}

module attributes {stable_mosaic.version = 11 : i64} {
  func.func @kernel(%arg0: i32, %arg1: memref<1x5x9x72xf32, #tpu.memory_space<vmem>>, %arg2: memref<3x72x16xf32, #tpu.memory_space<vmem>>, %arg3: memref<1x16xf32, #tpu.memory_space<vmem>>, %arg4: memref<1x16xf32, #tpu.memory_space<vmem>>, %arg5: memref<1x16xf32, #tpu.memory_space<vmem>>, %arg6: memref<1x2x9x16xf32, #tpu.memory_space<vmem>>) attributes {dimension_semantics = [#tpu.dimension_semantics<parallel>], iteration_bounds = array<i64: 2>, scalar_prefetch = 0 : i64, scratch_operands = 0 : i64, tpu.core_type = #tpu.core_type<tc>, window_params = [{transform_indices = @transform_0, window_bounds = array<i64: 1, 5, 9, 72>}, {pipeline_mode = #tpu.pipeline_mode<synchronous>, transform_indices = @transform_1, window_bounds = array<i64: 3, 72, 16>}, {pipeline_mode = #tpu.pipeline_mode<synchronous>, transform_indices = @transform_2, window_bounds = array<i64: 1, 16>}, {pipeline_mode = #tpu.pipeline_mode<synchronous>, transform_indices = @transform_3, window_bounds = array<i64: 1, 16>}, {pipeline_mode = #tpu.pipeline_mode<synchronous>, transform_indices = @transform_4, window_bounds = array<i64: 1, 16>}, {transform_indices = @transform_5, window_bounds = array<i64: 1, 2, 9, 16>}]} {
    %cst = arith.constant 0.000000e+00 : f32
    %0 = vector.broadcast %cst : f32 to vector<1x16xf32>
    %cst_0 = arith.constant 0.000000e+00 : f32
    %1 = vector.broadcast %cst_0 : f32 to vector<1x16xf32>
    %cst_1 = arith.constant 0.000000e+00 : f32
    %2 = vector.broadcast %cst_1 : f32 to vector<9x16xf32>
    %c0 = arith.constant 0 : index
    %c0_2 = arith.constant 0 : index
    %c0_3 = arith.constant 0 : index
    %c0_4 = arith.constant 0 : index
    %3 = vector.load %arg1[%c0, %c0_2, %c0_3, %c0_4] : memref<1x5x9x72xf32, #tpu.memory_space<vmem>>, vector<1x1x9x72xf32>
    %4 = vector.shape_cast %3 : vector<1x1x9x72xf32> to vector<9x72xf32>
    %c0_5 = arith.constant 0 : index
    %c0_6 = arith.constant 0 : index
    %c0_7 = arith.constant 0 : index
    %5 = vector.load %arg2[%c0_5, %c0_6, %c0_7] : memref<3x72x16xf32, #tpu.memory_space<vmem>>, vector<1x72x16xf32>
    %6 = vector.shape_cast %5 : vector<1x72x16xf32> to vector<72x16xf32>
    %cst_8 = arith.constant dense<0.000000e+00> : vector<9x16xf32>
    %7 = tpu.matmul %4, %6, %cst_8 {dimension_numbers = #tpu.dot_dimension_numbers<[1], [0], [0], [1], [0, 0, 1, 1], [], []>} : vector<9x72xf32>, vector<72x16xf32>, vector<9x16xf32> -> vector<9x16xf32>
    %8 = arith.addf %2, %7 : vector<9x16xf32>
    %c0_9 = arith.constant 0 : index
    %c1 = arith.constant 1 : index
    %c0_10 = arith.constant 0 : index
    %c0_11 = arith.constant 0 : index
    %9 = vector.load %arg1[%c0_9, %c1, %c0_10, %c0_11] : memref<1x5x9x72xf32, #tpu.memory_space<vmem>>, vector<1x1x9x72xf32>
    %10 = vector.shape_cast %9 : vector<1x1x9x72xf32> to vector<9x72xf32>
    %c1_12 = arith.constant 1 : index
    %c0_13 = arith.constant 0 : index
    %c0_14 = arith.constant 0 : index
    %11 = vector.load %arg2[%c1_12, %c0_13, %c0_14] : memref<3x72x16xf32, #tpu.memory_space<vmem>>, vector<1x72x16xf32>
    %12 = vector.shape_cast %11 : vector<1x72x16xf32> to vector<72x16xf32>
    %cst_15 = arith.constant dense<0.000000e+00> : vector<9x16xf32>
    %13 = tpu.matmul %10, %12, %cst_15 {dimension_numbers = #tpu.dot_dimension_numbers<[1], [0], [0], [1], [0, 0, 1, 1], [], []>} : vector<9x72xf32>, vector<72x16xf32>, vector<9x16xf32> -> vector<9x16xf32>
    %14 = arith.addf %8, %13 : vector<9x16xf32>
    %c0_16 = arith.constant 0 : index
    %c2 = arith.constant 2 : index
    %c0_17 = arith.constant 0 : index
    %c0_18 = arith.constant 0 : index
    %15 = vector.load %arg1[%c0_16, %c2, %c0_17, %c0_18] : memref<1x5x9x72xf32, #tpu.memory_space<vmem>>, vector<1x1x9x72xf32>
    %16 = vector.shape_cast %15 : vector<1x1x9x72xf32> to vector<9x72xf32>
    %c2_19 = arith.constant 2 : index
    %c0_20 = arith.constant 0 : index
    %c0_21 = arith.constant 0 : index
    %17 = vector.load %arg2[%c2_19, %c0_20, %c0_21] : memref<3x72x16xf32, #tpu.memory_space<vmem>>, vector<1x72x16xf32>
    %18 = vector.shape_cast %17 : vector<1x72x16xf32> to vector<72x16xf32>
    %cst_22 = arith.constant dense<0.000000e+00> : vector<9x16xf32>
    %19 = tpu.matmul %16, %18, %cst_22 {dimension_numbers = #tpu.dot_dimension_numbers<[1], [0], [0], [1], [0, 0, 1, 1], [], []>} : vector<9x72xf32>, vector<72x16xf32>, vector<9x16xf32> -> vector<9x16xf32>
    %20 = arith.addf %14, %19 : vector<9x16xf32>
    %c0_23 = arith.constant 0 : index
    %c0_24 = arith.constant 0 : index
    %21 = vector.load %arg3[%c0_23, %c0_24] : memref<1x16xf32, #tpu.memory_space<vmem>>, vector<1x16xf32>
    %22 = vector.broadcast %21 : vector<1x16xf32> to vector<9x16xf32>
    %23 = arith.addf %20, %22 : vector<9x16xf32>
    %c0_25 = arith.constant 0 : index
    %c0_26 = arith.constant 0 : index
    %c0_27 = arith.constant 0 : index
    %c0_28 = arith.constant 0 : index
    %24 = vector.load %arg6[%c0_25, %c0_26, %c0_27, %c0_28] : memref<1x2x9x16xf32, #tpu.memory_space<vmem>>, vector<1x1x9x16xf32>
    %25 = vector.shape_cast %24 : vector<1x1x9x16xf32> to vector<9x16xf32>
    %26 = vector.shape_cast %23 : vector<9x16xf32> to vector<1x1x9x16xf32>
    tpu.vector_store %arg6[%c0_25, %c0_26, %c0_27, %c0_28], %26 {strides = array<i32>} : memref<1x2x9x16xf32, #tpu.memory_space<vmem>>, vector<1x1x9x16xf32>,
    %cst_29 = arith.constant dense<0.000000e+00> : vector<16xf32>
    %27 = vector.multi_reduction <add>, %23, %cst_29 [0] : vector<9x16xf32> to vector<16xf32>
    %28 = vector.shape_cast %27 : vector<16xf32> to vector<1x16xf32>
    %29 = arith.addf %0, %28 : vector<1x16xf32>
    %30 = arith.mulf %23, %23 : vector<9x16xf32>
    %cst_30 = arith.constant dense<0.000000e+00> : vector<16xf32>
    %31 = vector.multi_reduction <add>, %30, %cst_30 [0] : vector<9x16xf32> to vector<16xf32>
    %32 = vector.shape_cast %31 : vector<16xf32> to vector<1x16xf32>
    %33 = arith.addf %1, %32 : vector<1x16xf32>
    %cst_31 = arith.constant 0.000000e+00 : f32
    %34 = vector.broadcast %cst_31 : f32 to vector<9x16xf32>
    %c0_32 = arith.constant 0 : index
    %c2_33 = arith.constant 2 : index
    %c0_34 = arith.constant 0 : index
    %c0_35 = arith.constant 0 : index
    %35 = vector.load %arg1[%c0_32, %c2_33, %c0_34, %c0_35] : memref<1x5x9x72xf32, #tpu.memory_space<vmem>>, vector<1x1x9x72xf32>
    %36 = vector.shape_cast %35 : vector<1x1x9x72xf32> to vector<9x72xf32>
    %c0_36 = arith.constant 0 : index
    %c0_37 = arith.constant 0 : index
    %c0_38 = arith.constant 0 : index
    %37 = vector.load %arg2[%c0_36, %c0_37, %c0_38] : memref<3x72x16xf32, #tpu.memory_space<vmem>>, vector<1x72x16xf32>
    %38 = vector.shape_cast %37 : vector<1x72x16xf32> to vector<72x16xf32>
    %cst_39 = arith.constant dense<0.000000e+00> : vector<9x16xf32>
    %39 = tpu.matmul %36, %38, %cst_39 {dimension_numbers = #tpu.dot_dimension_numbers<[1], [0], [0], [1], [0, 0, 1, 1], [], []>} : vector<9x72xf32>, vector<72x16xf32>, vector<9x16xf32> -> vector<9x16xf32>
    %40 = arith.addf %34, %39 : vector<9x16xf32>
    %c0_40 = arith.constant 0 : index
    %c3 = arith.constant 3 : index
    %c0_41 = arith.constant 0 : index
    %c0_42 = arith.constant 0 : index
    %41 = vector.load %arg1[%c0_40, %c3, %c0_41, %c0_42] : memref<1x5x9x72xf32, #tpu.memory_space<vmem>>, vector<1x1x9x72xf32>
    %42 = vector.shape_cast %41 : vector<1x1x9x72xf32> to vector<9x72xf32>
    %c1_43 = arith.constant 1 : index
    %c0_44 = arith.constant 0 : index
    %c0_45 = arith.constant 0 : index
    %43 = vector.load %arg2[%c1_43, %c0_44, %c0_45] : memref<3x72x16xf32, #tpu.memory_space<vmem>>, vector<1x72x16xf32>
    %44 = vector.shape_cast %43 : vector<1x72x16xf32> to vector<72x16xf32>
    %cst_46 = arith.constant dense<0.000000e+00> : vector<9x16xf32>
    %45 = tpu.matmul %42, %44, %cst_46 {dimension_numbers = #tpu.dot_dimension_numbers<[1], [0], [0], [1], [0, 0, 1, 1], [], []>} : vector<9x72xf32>, vector<72x16xf32>, vector<9x16xf32> -> vector<9x16xf32>
    %46 = arith.addf %40, %45 : vector<9x16xf32>
    %c0_47 = arith.constant 0 : index
    %c4 = arith.constant 4 : index
    %c0_48 = arith.constant 0 : index
    %c0_49 = arith.constant 0 : index
    %47 = vector.load %arg1[%c0_47, %c4, %c0_48, %c0_49] : memref<1x5x9x72xf32, #tpu.memory_space<vmem>>, vector<1x1x9x72xf32>
    %48 = vector.shape_cast %47 : vector<1x1x9x72xf32> to vector<9x72xf32>
    %c2_50 = arith.constant 2 : index
    %c0_51 = arith.constant 0 : index
    %c0_52 = arith.constant 0 : index
    %49 = vector.load %arg2[%c2_50, %c0_51, %c0_52] : memref<3x72x16xf32, #tpu.memory_space<vmem>>, vector<1x72x16xf32>
    %50 = vector.shape_cast %49 : vector<1x72x16xf32> to vector<72x16xf32>
    %cst_53 = arith.constant dense<0.000000e+00> : vector<9x16xf32>
    %51 = tpu.matmul %48, %50, %cst_53 {dimension_numbers = #tpu.dot_dimension_numbers<[1], [0], [0], [1], [0, 0, 1, 1], [], []>} : vector<9x72xf32>, vector<72x16xf32>, vector<9x16xf32> -> vector<9x16xf32>
    %52 = arith.addf %46, %51 : vector<9x16xf32>
    %c0_54 = arith.constant 0 : index
    %c0_55 = arith.constant 0 : index
    %53 = vector.load %arg3[%c0_54, %c0_55] : memref<1x16xf32, #tpu.memory_space<vmem>>, vector<1x16xf32>
    %54 = vector.broadcast %53 : vector<1x16xf32> to vector<9x16xf32>
    %55 = arith.addf %52, %54 : vector<9x16xf32>
    %c0_56 = arith.constant 0 : index
    %c1_57 = arith.constant 1 : index
    %c0_58 = arith.constant 0 : index
    %c0_59 = arith.constant 0 : index
    %56 = vector.load %arg6[%c0_56, %c1_57, %c0_58, %c0_59] : memref<1x2x9x16xf32, #tpu.memory_space<vmem>>, vector<1x1x9x16xf32>
    %57 = vector.shape_cast %56 : vector<1x1x9x16xf32> to vector<9x16xf32>
    %58 = vector.shape_cast %55 : vector<9x16xf32> to vector<1x1x9x16xf32>
    tpu.vector_store %arg6[%c0_56, %c1_57, %c0_58, %c0_59], %58 {strides = array<i32>} : memref<1x2x9x16xf32, #tpu.memory_space<vmem>>, vector<1x1x9x16xf32>,
    %cst_60 = arith.constant dense<0.000000e+00> : vector<16xf32>
    %59 = vector.multi_reduction <add>, %55, %cst_60 [0] : vector<9x16xf32> to vector<16xf32>
    %60 = vector.shape_cast %59 : vector<16xf32> to vector<1x16xf32>
    %61 = arith.addf %29, %60 : vector<1x16xf32>
    %62 = arith.mulf %55, %55 : vector<9x16xf32>
    %cst_61 = arith.constant dense<0.000000e+00> : vector<16xf32>
    %63 = vector.multi_reduction <add>, %62, %cst_61 [0] : vector<9x16xf32> to vector<16xf32>
    %64 = vector.shape_cast %63 : vector<16xf32> to vector<1x16xf32>
    %65 = arith.addf %33, %64 : vector<1x16xf32>
    %cst_62 = arith.constant 0.055555556 : f32
    %66 = vector.broadcast %cst_62 : f32 to vector<1x16xf32>
    %67 = arith.mulf %61, %66 : vector<1x16xf32>
    %cst_63 = arith.constant 0.055555556 : f32
    %68 = vector.broadcast %cst_63 : f32 to vector<1x16xf32>
    %69 = arith.mulf %65, %68 : vector<1x16xf32>
    %70 = arith.mulf %67, %67 : vector<1x16xf32>
    %71 = arith.subf %69, %70 : vector<1x16xf32>
    %cst_64 = arith.constant 9.99999974E-6 : f32
    %72 = vector.broadcast %cst_64 : f32 to vector<1x16xf32>
    %73 = arith.addf %71, %72 : vector<1x16xf32>
    %74 = math.rsqrt %73 : vector<1x16xf32>
    %c0_65 = arith.constant 0 : index
    %c0_66 = arith.constant 0 : index
    %75 = vector.load %arg4[%c0_65, %c0_66] : memref<1x16xf32, #tpu.memory_space<vmem>>, vector<1x16xf32>
    %76 = arith.mulf %74, %75 : vector<1x16xf32>
    %c0_67 = arith.constant 0 : index
    %c0_68 = arith.constant 0 : index
    %77 = vector.load %arg5[%c0_67, %c0_68] : memref<1x16xf32, #tpu.memory_space<vmem>>, vector<1x16xf32>
    %78 = arith.mulf %67, %76 : vector<1x16xf32>
    %79 = arith.subf %77, %78 : vector<1x16xf32>
    %c0_69 = arith.constant 0 : index
    %c0_70 = arith.constant 0 : index
    %c0_71 = arith.constant 0 : index
    %c0_72 = arith.constant 0 : index
    %80 = vector.load %arg6[%c0_69, %c0_70, %c0_71, %c0_72] : memref<1x2x9x16xf32, #tpu.memory_space<vmem>>, vector<1x1x9x16xf32>
    %81 = vector.shape_cast %80 : vector<1x1x9x16xf32> to vector<9x16xf32>
    %82 = vector.broadcast %76 : vector<1x16xf32> to vector<9x16xf32>
    %83 = arith.mulf %81, %82 : vector<9x16xf32>
    %84 = vector.broadcast %79 : vector<1x16xf32> to vector<9x16xf32>
    %85 = arith.addf %83, %84 : vector<9x16xf32>
    %cst_73 = arith.constant 0.000000e+00 : f32
    %86 = vector.broadcast %cst_73 : f32 to vector<9x16xf32>
    %87 = arith.maximumf %85, %86 : vector<9x16xf32>
    %c0_74 = arith.constant 0 : index
    %c0_75 = arith.constant 0 : index
    %c0_76 = arith.constant 0 : index
    %c0_77 = arith.constant 0 : index
    %88 = vector.load %arg6[%c0_74, %c0_75, %c0_76, %c0_77] : memref<1x2x9x16xf32, #tpu.memory_space<vmem>>, vector<1x1x9x16xf32>
    %89 = vector.shape_cast %88 : vector<1x1x9x16xf32> to vector<9x16xf32>
    %90 = vector.shape_cast %87 : vector<9x16xf32> to vector<1x1x9x16xf32>
    tpu.vector_store %arg6[%c0_74, %c0_75, %c0_76, %c0_77], %90 {strides = array<i32>} : memref<1x2x9x16xf32, #tpu.memory_space<vmem>>, vector<1x1x9x16xf32>,
    %c0_78 = arith.constant 0 : index
    %c1_79 = arith.constant 1 : index
    %c0_80 = arith.constant 0 : index
    %c0_81 = arith.constant 0 : index
    %91 = vector.load %arg6[%c0_78, %c1_79, %c0_80, %c0_81] : memref<1x2x9x16xf32, #tpu.memory_space<vmem>>, vector<1x1x9x16xf32>
    %92 = vector.shape_cast %91 : vector<1x1x9x16xf32> to vector<9x16xf32>
    %93 = vector.broadcast %76 : vector<1x16xf32> to vector<9x16xf32>
    %94 = arith.mulf %92, %93 : vector<9x16xf32>
    %95 = vector.broadcast %79 : vector<1x16xf32> to vector<9x16xf32>
    %96 = arith.addf %94, %95 : vector<9x16xf32>
    %cst_82 = arith.constant 0.000000e+00 : f32
    %97 = vector.broadcast %cst_82 : f32 to vector<9x16xf32>
    %98 = arith.maximumf %96, %97 : vector<9x16xf32>
    %c0_83 = arith.constant 0 : index
    %c1_84 = arith.constant 1 : index
    %c0_85 = arith.constant 0 : index
    %c0_86 = arith.constant 0 : index
    %99 = vector.load %arg6[%c0_83, %c1_84, %c0_85, %c0_86] : memref<1x2x9x16xf32, #tpu.memory_space<vmem>>, vector<1x1x9x16xf32>
    %100 = vector.shape_cast %99 : vector<1x1x9x16xf32> to vector<9x16xf32>
    %101 = vector.shape_cast %98 : vector<9x16xf32> to vector<1x1x9x16xf32>
    tpu.vector_store %arg6[%c0_83, %c1_84, %c0_85, %c0_86], %101 {strides = array<i32>} : memref<1x2x9x16xf32, #tpu.memory_space<vmem>>, vector<1x1x9x16xf32>,
    return
  }
  func.func @transform_0(%arg0: i32) -> (i32, i32, i32, i32) {
    %c0_i32 = arith.constant 0 : i32
    %c0_i32_0 = arith.constant 0 : i32
    %c0_i32_1 = arith.constant 0 : i32
    %c0_i32_2 = arith.constant 0 : i32
    return %arg0, %c0_i32, %c0_i32_0, %c0_i32_1 : i32, i32, i32, i32
  }
  func.func @transform_1(%arg0: i32) -> (i32, i32, i32) {
    %c0_i32 = arith.constant 0 : i32
    %c0_i32_0 = arith.constant 0 : i32
    %c0_i32_1 = arith.constant 0 : i32
    %c0_i32_2 = arith.constant 0 : i32
    return %c0_i32, %c0_i32_0, %c0_i32_1 : i32, i32, i32
  }
  func.func @transform_2(%arg0: i32) -> (i32, i32) {
    %c0_i32 = arith.constant 0 : i32
    %c0_i32_0 = arith.constant 0 : i32
    %c0_i32_1 = arith.constant 0 : i32
    return %c0_i32, %c0_i32_0 : i32, i32
  }
  func.func @transform_3(%arg0: i32) -> (i32, i32) {
    %c0_i32 = arith.constant 0 : i32
    %c0_i32_0 = arith.constant 0 : i32
    %c0_i32_1 = arith.constant 0 : i32
    return %c0_i32, %c0_i32_0 : i32, i32
  }
  func.func @transform_4(%arg0: i32) -> (i32, i32) {
    %c0_i32 = arith.constant 0 : i32
    %c0_i32_0 = arith.constant 0 : i32
    %c0_i32_1 = arith.constant 0 : i32
    return %c0_i32, %c0_i32_0 : i32, i32
  }
  func.func @transform_5(%arg0: i32) -> (i32, i32, i32, i32) {
    %c0_i32 = arith.constant 0 : i32
    %c0_i32_0 = arith.constant 0 : i32
    %c0_i32_1 = arith.constant 0 : i32
    %c0_i32_2 = arith.constant 0 : i32
    return %arg0, %c0_i32, %c0_i32_0, %c0_i32_1 : i32, i32, i32, i32
  }
}

module attributes {stable_mosaic.version = 11 : i64} {
  func.func @kernel(%arg0: i32, %arg1: memref<1x4x9x144xf32, #tpu.memory_space<vmem>>, %arg2: memref<3x144x32xf32, #tpu.memory_space<vmem>>, %arg3: memref<1x32xf32, #tpu.memory_space<vmem>>, %arg4: memref<1x32xf32, #tpu.memory_space<vmem>>, %arg5: memref<1x32xf32, #tpu.memory_space<vmem>>, %arg6: memref<32x32xf32, #tpu.memory_space<vmem>>, %arg7: memref<1x32xf32, #tpu.memory_space<vmem>>, %arg8: memref<1x2x9x32xf32, #tpu.memory_space<vmem>>) attributes {dimension_semantics = [#tpu.dimension_semantics<parallel>], iteration_bounds = array<i64: 2>, scalar_prefetch = 0 : i64, scratch_operands = 0 : i64, tpu.core_type = #tpu.core_type<tc>, window_params = [{transform_indices = @transform_0, window_bounds = array<i64: 1, 4, 9, 144>}, {pipeline_mode = #tpu.pipeline_mode<synchronous>, transform_indices = @transform_1, window_bounds = array<i64: 3, 144, 32>}, {pipeline_mode = #tpu.pipeline_mode<synchronous>, transform_indices = @transform_2, window_bounds = array<i64: 1, 32>}, {pipeline_mode = #tpu.pipeline_mode<synchronous>, transform_indices = @transform_3, window_bounds = array<i64: 1, 32>}, {pipeline_mode = #tpu.pipeline_mode<synchronous>, transform_indices = @transform_4, window_bounds = array<i64: 1, 32>}, {pipeline_mode = #tpu.pipeline_mode<synchronous>, transform_indices = @transform_5, window_bounds = array<i64: 32, 32>}, {pipeline_mode = #tpu.pipeline_mode<synchronous>, transform_indices = @transform_6, window_bounds = array<i64: 1, 32>}, {transform_indices = @transform_7, window_bounds = array<i64: 1, 2, 9, 32>}]} {
    %cst = arith.constant 0.000000e+00 : f32
    %0 = vector.broadcast %cst : f32 to vector<1x32xf32>
    %cst_0 = arith.constant 0.000000e+00 : f32
    %1 = vector.broadcast %cst_0 : f32 to vector<1x32xf32>
    %cst_1 = arith.constant 0.000000e+00 : f32
    %2 = vector.broadcast %cst_1 : f32 to vector<9x32xf32>
    %c0 = arith.constant 0 : index
    %c0_2 = arith.constant 0 : index
    %c0_3 = arith.constant 0 : index
    %c0_4 = arith.constant 0 : index
    %3 = vector.load %arg1[%c0, %c0_2, %c0_3, %c0_4] : memref<1x4x9x144xf32, #tpu.memory_space<vmem>>, vector<1x1x9x144xf32>
    %4 = vector.shape_cast %3 : vector<1x1x9x144xf32> to vector<9x144xf32>
    %c0_5 = arith.constant 0 : index
    %c0_6 = arith.constant 0 : index
    %c0_7 = arith.constant 0 : index
    %5 = vector.load %arg2[%c0_5, %c0_6, %c0_7] : memref<3x144x32xf32, #tpu.memory_space<vmem>>, vector<1x144x32xf32>
    %6 = vector.shape_cast %5 : vector<1x144x32xf32> to vector<144x32xf32>
    %cst_8 = arith.constant dense<0.000000e+00> : vector<9x32xf32>
    %7 = tpu.matmul %4, %6, %cst_8 {dimension_numbers = #tpu.dot_dimension_numbers<[1], [0], [0], [1], [0, 0, 1, 1], [], []>} : vector<9x144xf32>, vector<144x32xf32>, vector<9x32xf32> -> vector<9x32xf32>
    %8 = arith.addf %2, %7 : vector<9x32xf32>
    %c0_9 = arith.constant 0 : index
    %c1 = arith.constant 1 : index
    %c0_10 = arith.constant 0 : index
    %c0_11 = arith.constant 0 : index
    %9 = vector.load %arg1[%c0_9, %c1, %c0_10, %c0_11] : memref<1x4x9x144xf32, #tpu.memory_space<vmem>>, vector<1x1x9x144xf32>
    %10 = vector.shape_cast %9 : vector<1x1x9x144xf32> to vector<9x144xf32>
    %c1_12 = arith.constant 1 : index
    %c0_13 = arith.constant 0 : index
    %c0_14 = arith.constant 0 : index
    %11 = vector.load %arg2[%c1_12, %c0_13, %c0_14] : memref<3x144x32xf32, #tpu.memory_space<vmem>>, vector<1x144x32xf32>
    %12 = vector.shape_cast %11 : vector<1x144x32xf32> to vector<144x32xf32>
    %cst_15 = arith.constant dense<0.000000e+00> : vector<9x32xf32>
    %13 = tpu.matmul %10, %12, %cst_15 {dimension_numbers = #tpu.dot_dimension_numbers<[1], [0], [0], [1], [0, 0, 1, 1], [], []>} : vector<9x144xf32>, vector<144x32xf32>, vector<9x32xf32> -> vector<9x32xf32>
    %14 = arith.addf %8, %13 : vector<9x32xf32>
    %c0_16 = arith.constant 0 : index
    %c2 = arith.constant 2 : index
    %c0_17 = arith.constant 0 : index
    %c0_18 = arith.constant 0 : index
    %15 = vector.load %arg1[%c0_16, %c2, %c0_17, %c0_18] : memref<1x4x9x144xf32, #tpu.memory_space<vmem>>, vector<1x1x9x144xf32>
    %16 = vector.shape_cast %15 : vector<1x1x9x144xf32> to vector<9x144xf32>
    %c2_19 = arith.constant 2 : index
    %c0_20 = arith.constant 0 : index
    %c0_21 = arith.constant 0 : index
    %17 = vector.load %arg2[%c2_19, %c0_20, %c0_21] : memref<3x144x32xf32, #tpu.memory_space<vmem>>, vector<1x144x32xf32>
    %18 = vector.shape_cast %17 : vector<1x144x32xf32> to vector<144x32xf32>
    %cst_22 = arith.constant dense<0.000000e+00> : vector<9x32xf32>
    %19 = tpu.matmul %16, %18, %cst_22 {dimension_numbers = #tpu.dot_dimension_numbers<[1], [0], [0], [1], [0, 0, 1, 1], [], []>} : vector<9x144xf32>, vector<144x32xf32>, vector<9x32xf32> -> vector<9x32xf32>
    %20 = arith.addf %14, %19 : vector<9x32xf32>
    %c0_23 = arith.constant 0 : index
    %c0_24 = arith.constant 0 : index
    %21 = vector.load %arg3[%c0_23, %c0_24] : memref<1x32xf32, #tpu.memory_space<vmem>>, vector<1x32xf32>
    %22 = vector.broadcast %21 : vector<1x32xf32> to vector<9x32xf32>
    %23 = arith.addf %20, %22 : vector<9x32xf32>
    %c0_25 = arith.constant 0 : index
    %c0_26 = arith.constant 0 : index
    %c0_27 = arith.constant 0 : index
    %c0_28 = arith.constant 0 : index
    %24 = vector.load %arg8[%c0_25, %c0_26, %c0_27, %c0_28] : memref<1x2x9x32xf32, #tpu.memory_space<vmem>>, vector<1x1x9x32xf32>
    %25 = vector.shape_cast %24 : vector<1x1x9x32xf32> to vector<9x32xf32>
    %26 = vector.shape_cast %23 : vector<9x32xf32> to vector<1x1x9x32xf32>
    tpu.vector_store %arg8[%c0_25, %c0_26, %c0_27, %c0_28], %26 {strides = array<i32>} : memref<1x2x9x32xf32, #tpu.memory_space<vmem>>, vector<1x1x9x32xf32>,
    %cst_29 = arith.constant dense<0.000000e+00> : vector<32xf32>
    %27 = vector.multi_reduction <add>, %23, %cst_29 [0] : vector<9x32xf32> to vector<32xf32>
    %28 = vector.shape_cast %27 : vector<32xf32> to vector<1x32xf32>
    %29 = arith.addf %0, %28 : vector<1x32xf32>
    %30 = arith.mulf %23, %23 : vector<9x32xf32>
    %cst_30 = arith.constant dense<0.000000e+00> : vector<32xf32>
    %31 = vector.multi_reduction <add>, %30, %cst_30 [0] : vector<9x32xf32> to vector<32xf32>
    %32 = vector.shape_cast %31 : vector<32xf32> to vector<1x32xf32>
    %33 = arith.addf %1, %32 : vector<1x32xf32>
    %cst_31 = arith.constant 0.000000e+00 : f32
    %34 = vector.broadcast %cst_31 : f32 to vector<9x32xf32>
    %c0_32 = arith.constant 0 : index
    %c1_33 = arith.constant 1 : index
    %c0_34 = arith.constant 0 : index
    %c0_35 = arith.constant 0 : index
    %35 = vector.load %arg1[%c0_32, %c1_33, %c0_34, %c0_35] : memref<1x4x9x144xf32, #tpu.memory_space<vmem>>, vector<1x1x9x144xf32>
    %36 = vector.shape_cast %35 : vector<1x1x9x144xf32> to vector<9x144xf32>
    %c0_36 = arith.constant 0 : index
    %c0_37 = arith.constant 0 : index
    %c0_38 = arith.constant 0 : index
    %37 = vector.load %arg2[%c0_36, %c0_37, %c0_38] : memref<3x144x32xf32, #tpu.memory_space<vmem>>, vector<1x144x32xf32>
    %38 = vector.shape_cast %37 : vector<1x144x32xf32> to vector<144x32xf32>
    %cst_39 = arith.constant dense<0.000000e+00> : vector<9x32xf32>
    %39 = tpu.matmul %36, %38, %cst_39 {dimension_numbers = #tpu.dot_dimension_numbers<[1], [0], [0], [1], [0, 0, 1, 1], [], []>} : vector<9x144xf32>, vector<144x32xf32>, vector<9x32xf32> -> vector<9x32xf32>
    %40 = arith.addf %34, %39 : vector<9x32xf32>
    %c0_40 = arith.constant 0 : index
    %c2_41 = arith.constant 2 : index
    %c0_42 = arith.constant 0 : index
    %c0_43 = arith.constant 0 : index
    %41 = vector.load %arg1[%c0_40, %c2_41, %c0_42, %c0_43] : memref<1x4x9x144xf32, #tpu.memory_space<vmem>>, vector<1x1x9x144xf32>
    %42 = vector.shape_cast %41 : vector<1x1x9x144xf32> to vector<9x144xf32>
    %c1_44 = arith.constant 1 : index
    %c0_45 = arith.constant 0 : index
    %c0_46 = arith.constant 0 : index
    %43 = vector.load %arg2[%c1_44, %c0_45, %c0_46] : memref<3x144x32xf32, #tpu.memory_space<vmem>>, vector<1x144x32xf32>
    %44 = vector.shape_cast %43 : vector<1x144x32xf32> to vector<144x32xf32>
    %cst_47 = arith.constant dense<0.000000e+00> : vector<9x32xf32>
    %45 = tpu.matmul %42, %44, %cst_47 {dimension_numbers = #tpu.dot_dimension_numbers<[1], [0], [0], [1], [0, 0, 1, 1], [], []>} : vector<9x144xf32>, vector<144x32xf32>, vector<9x32xf32> -> vector<9x32xf32>
    %46 = arith.addf %40, %45 : vector<9x32xf32>
    %c0_48 = arith.constant 0 : index
    %c3 = arith.constant 3 : index
    %c0_49 = arith.constant 0 : index
    %c0_50 = arith.constant 0 : index
    %47 = vector.load %arg1[%c0_48, %c3, %c0_49, %c0_50] : memref<1x4x9x144xf32, #tpu.memory_space<vmem>>, vector<1x1x9x144xf32>
    %48 = vector.shape_cast %47 : vector<1x1x9x144xf32> to vector<9x144xf32>
    %c2_51 = arith.constant 2 : index
    %c0_52 = arith.constant 0 : index
    %c0_53 = arith.constant 0 : index
    %49 = vector.load %arg2[%c2_51, %c0_52, %c0_53] : memref<3x144x32xf32, #tpu.memory_space<vmem>>, vector<1x144x32xf32>
    %50 = vector.shape_cast %49 : vector<1x144x32xf32> to vector<144x32xf32>
    %cst_54 = arith.constant dense<0.000000e+00> : vector<9x32xf32>
    %51 = tpu.matmul %48, %50, %cst_54 {dimension_numbers = #tpu.dot_dimension_numbers<[1], [0], [0], [1], [0, 0, 1, 1], [], []>} : vector<9x144xf32>, vector<144x32xf32>, vector<9x32xf32> -> vector<9x32xf32>
    %52 = arith.addf %46, %51 : vector<9x32xf32>
    %c0_55 = arith.constant 0 : index
    %c0_56 = arith.constant 0 : index
    %53 = vector.load %arg3[%c0_55, %c0_56] : memref<1x32xf32, #tpu.memory_space<vmem>>, vector<1x32xf32>
    %54 = vector.broadcast %53 : vector<1x32xf32> to vector<9x32xf32>
    %55 = arith.addf %52, %54 : vector<9x32xf32>
    %c0_57 = arith.constant 0 : index
    %c1_58 = arith.constant 1 : index
    %c0_59 = arith.constant 0 : index
    %c0_60 = arith.constant 0 : index
    %56 = vector.load %arg8[%c0_57, %c1_58, %c0_59, %c0_60] : memref<1x2x9x32xf32, #tpu.memory_space<vmem>>, vector<1x1x9x32xf32>
    %57 = vector.shape_cast %56 : vector<1x1x9x32xf32> to vector<9x32xf32>
    %58 = vector.shape_cast %55 : vector<9x32xf32> to vector<1x1x9x32xf32>
    tpu.vector_store %arg8[%c0_57, %c1_58, %c0_59, %c0_60], %58 {strides = array<i32>} : memref<1x2x9x32xf32, #tpu.memory_space<vmem>>, vector<1x1x9x32xf32>,
    %cst_61 = arith.constant dense<0.000000e+00> : vector<32xf32>
    %59 = vector.multi_reduction <add>, %55, %cst_61 [0] : vector<9x32xf32> to vector<32xf32>
    %60 = vector.shape_cast %59 : vector<32xf32> to vector<1x32xf32>
    %61 = arith.addf %29, %60 : vector<1x32xf32>
    %62 = arith.mulf %55, %55 : vector<9x32xf32>
    %cst_62 = arith.constant dense<0.000000e+00> : vector<32xf32>
    %63 = vector.multi_reduction <add>, %62, %cst_62 [0] : vector<9x32xf32> to vector<32xf32>
    %64 = vector.shape_cast %63 : vector<32xf32> to vector<1x32xf32>
    %65 = arith.addf %33, %64 : vector<1x32xf32>
    %cst_63 = arith.constant 0.055555556 : f32
    %66 = vector.broadcast %cst_63 : f32 to vector<1x32xf32>
    %67 = arith.mulf %61, %66 : vector<1x32xf32>
    %cst_64 = arith.constant 0.055555556 : f32
    %68 = vector.broadcast %cst_64 : f32 to vector<1x32xf32>
    %69 = arith.mulf %65, %68 : vector<1x32xf32>
    %70 = arith.mulf %67, %67 : vector<1x32xf32>
    %71 = arith.subf %69, %70 : vector<1x32xf32>
    %cst_65 = arith.constant 9.99999974E-6 : f32
    %72 = vector.broadcast %cst_65 : f32 to vector<1x32xf32>
    %73 = arith.addf %71, %72 : vector<1x32xf32>
    %74 = math.rsqrt %73 : vector<1x32xf32>
    %c0_66 = arith.constant 0 : index
    %c0_67 = arith.constant 0 : index
    %75 = vector.load %arg4[%c0_66, %c0_67] : memref<1x32xf32, #tpu.memory_space<vmem>>, vector<1x32xf32>
    %76 = arith.mulf %74, %75 : vector<1x32xf32>
    %c0_68 = arith.constant 0 : index
    %c0_69 = arith.constant 0 : index
    %77 = vector.load %arg5[%c0_68, %c0_69] : memref<1x32xf32, #tpu.memory_space<vmem>>, vector<1x32xf32>
    %78 = arith.mulf %67, %76 : vector<1x32xf32>
    %79 = arith.subf %77, %78 : vector<1x32xf32>
    %c0_70 = arith.constant 0 : index
    %c0_71 = arith.constant 0 : index
    %c0_72 = arith.constant 0 : index
    %c0_73 = arith.constant 0 : index
    %80 = vector.load %arg8[%c0_70, %c0_71, %c0_72, %c0_73] : memref<1x2x9x32xf32, #tpu.memory_space<vmem>>, vector<1x1x9x32xf32>
    %81 = vector.shape_cast %80 : vector<1x1x9x32xf32> to vector<9x32xf32>
    %82 = vector.broadcast %76 : vector<1x32xf32> to vector<9x32xf32>
    %83 = arith.mulf %81, %82 : vector<9x32xf32>
    %84 = vector.broadcast %79 : vector<1x32xf32> to vector<9x32xf32>
    %85 = arith.addf %83, %84 : vector<9x32xf32>
    %cst_74 = arith.constant 0.000000e+00 : f32
    %86 = vector.broadcast %cst_74 : f32 to vector<9x32xf32>
    %87 = arith.maximumf %85, %86 : vector<9x32xf32>
    %c0_75 = arith.constant 0 : index
    %c0_76 = arith.constant 0 : index
    %88 = vector.load %arg6[%c0_75, %c0_76] : memref<32x32xf32, #tpu.memory_space<vmem>>, vector<32x32xf32>
    %cst_77 = arith.constant dense<0.000000e+00> : vector<9x32xf32>
    %89 = tpu.matmul %87, %88, %cst_77 {dimension_numbers = #tpu.dot_dimension_numbers<[1], [0], [0], [1], [0, 0, 1, 1], [], []>} : vector<9x32xf32>, vector<32x32xf32>, vector<9x32xf32> -> vector<9x32xf32>
    %c0_78 = arith.constant 0 : index
    %c0_79 = arith.constant 0 : index
    %90 = vector.load %arg7[%c0_78, %c0_79] : memref<1x32xf32, #tpu.memory_space<vmem>>, vector<1x32xf32>
    %91 = vector.broadcast %90 : vector<1x32xf32> to vector<9x32xf32>
    %92 = arith.addf %89, %91 : vector<9x32xf32>
    %c0_80 = arith.constant 0 : index
    %c0_81 = arith.constant 0 : index
    %c0_82 = arith.constant 0 : index
    %c0_83 = arith.constant 0 : index
    %93 = vector.load %arg8[%c0_80, %c0_81, %c0_82, %c0_83] : memref<1x2x9x32xf32, #tpu.memory_space<vmem>>, vector<1x1x9x32xf32>
    %94 = vector.shape_cast %93 : vector<1x1x9x32xf32> to vector<9x32xf32>
    %95 = vector.shape_cast %92 : vector<9x32xf32> to vector<1x1x9x32xf32>
    tpu.vector_store %arg8[%c0_80, %c0_81, %c0_82, %c0_83], %95 {strides = array<i32>} : memref<1x2x9x32xf32, #tpu.memory_space<vmem>>, vector<1x1x9x32xf32>,
    %c0_84 = arith.constant 0 : index
    %c1_85 = arith.constant 1 : index
    %c0_86 = arith.constant 0 : index
    %c0_87 = arith.constant 0 : index
    %96 = vector.load %arg8[%c0_84, %c1_85, %c0_86, %c0_87] : memref<1x2x9x32xf32, #tpu.memory_space<vmem>>, vector<1x1x9x32xf32>
    %97 = vector.shape_cast %96 : vector<1x1x9x32xf32> to vector<9x32xf32>
    %98 = vector.broadcast %76 : vector<1x32xf32> to vector<9x32xf32>
    %99 = arith.mulf %97, %98 : vector<9x32xf32>
    %100 = vector.broadcast %79 : vector<1x32xf32> to vector<9x32xf32>
    %101 = arith.addf %99, %100 : vector<9x32xf32>
    %cst_88 = arith.constant 0.000000e+00 : f32
    %102 = vector.broadcast %cst_88 : f32 to vector<9x32xf32>
    %103 = arith.maximumf %101, %102 : vector<9x32xf32>
    %c0_89 = arith.constant 0 : index
    %c0_90 = arith.constant 0 : index
    %104 = vector.load %arg6[%c0_89, %c0_90] : memref<32x32xf32, #tpu.memory_space<vmem>>, vector<32x32xf32>
    %cst_91 = arith.constant dense<0.000000e+00> : vector<9x32xf32>
    %105 = tpu.matmul %103, %104, %cst_91 {dimension_numbers = #tpu.dot_dimension_numbers<[1], [0], [0], [1], [0, 0, 1, 1], [], []>} : vector<9x32xf32>, vector<32x32xf32>, vector<9x32xf32> -> vector<9x32xf32>
    %c0_92 = arith.constant 0 : index
    %c0_93 = arith.constant 0 : index
    %106 = vector.load %arg7[%c0_92, %c0_93] : memref<1x32xf32, #tpu.memory_space<vmem>>, vector<1x32xf32>
    %107 = vector.broadcast %106 : vector<1x32xf32> to vector<9x32xf32>
    %108 = arith.addf %105, %107 : vector<9x32xf32>
    %c0_94 = arith.constant 0 : index
    %c1_95 = arith.constant 1 : index
    %c0_96 = arith.constant 0 : index
    %c0_97 = arith.constant 0 : index
    %109 = vector.load %arg8[%c0_94, %c1_95, %c0_96, %c0_97] : memref<1x2x9x32xf32, #tpu.memory_space<vmem>>, vector<1x1x9x32xf32>
    %110 = vector.shape_cast %109 : vector<1x1x9x32xf32> to vector<9x32xf32>
    %111 = vector.shape_cast %108 : vector<9x32xf32> to vector<1x1x9x32xf32>
    tpu.vector_store %arg8[%c0_94, %c1_95, %c0_96, %c0_97], %111 {strides = array<i32>} : memref<1x2x9x32xf32, #tpu.memory_space<vmem>>, vector<1x1x9x32xf32>,
    return
  }
  func.func @transform_0(%arg0: i32) -> (i32, i32, i32, i32) {
    %c0_i32 = arith.constant 0 : i32
    %c0_i32_0 = arith.constant 0 : i32
    %c0_i32_1 = arith.constant 0 : i32
    %c0_i32_2 = arith.constant 0 : i32
    return %arg0, %c0_i32, %c0_i32_0, %c0_i32_1 : i32, i32, i32, i32
  }
  func.func @transform_1(%arg0: i32) -> (i32, i32, i32) {
    %c0_i32 = arith.constant 0 : i32
    %c0_i32_0 = arith.constant 0 : i32
    %c0_i32_1 = arith.constant 0 : i32
    %c0_i32_2 = arith.constant 0 : i32
    return %c0_i32, %c0_i32_0, %c0_i32_1 : i32, i32, i32
  }
  func.func @transform_2(%arg0: i32) -> (i32, i32) {
    %c0_i32 = arith.constant 0 : i32
    %c0_i32_0 = arith.constant 0 : i32
    %c0_i32_1 = arith.constant 0 : i32
    return %c0_i32, %c0_i32_0 : i32, i32
  }
  func.func @transform_3(%arg0: i32) -> (i32, i32) {
    %c0_i32 = arith.constant 0 : i32
    %c0_i32_0 = arith.constant 0 : i32
    %c0_i32_1 = arith.constant 0 : i32
    return %c0_i32, %c0_i32_0 : i32, i32
  }
  func.func @transform_4(%arg0: i32) -> (i32, i32) {
    %c0_i32 = arith.constant 0 : i32
    %c0_i32_0 = arith.constant 0 : i32
    %c0_i32_1 = arith.constant 0 : i32
    return %c0_i32, %c0_i32_0 : i32, i32
  }
  func.func @transform_5(%arg0: i32) -> (i32, i32) {
    %c0_i32 = arith.constant 0 : i32
    %c0_i32_0 = arith.constant 0 : i32
    %c0_i32_1 = arith.constant 0 : i32
    return %c0_i32, %c0_i32_0 : i32, i32
  }
  func.func @transform_6(%arg0: i32) -> (i32, i32) {
    %c0_i32 = arith.constant 0 : i32
    %c0_i32_0 = arith.constant 0 : i32
    %c0_i32_1 = arith.constant 0 : i32
    return %c0_i32, %c0_i32_0 : i32, i32
  }
  func.func @transform_7(%arg0: i32) -> (i32, i32, i32, i32) {
    %c0_i32 = arith.constant 0 : i32
    %c0_i32_0 = arith.constant 0 : i32
    %c0_i32_1 = arith.constant 0 : i32
    %c0_i32_2 = arith.constant 0 : i32
    return %arg0, %c0_i32, %c0_i32_0, %c0_i32_1 : i32, i32, i32, i32
  }
}

</mosaic_0001>

<llo_original>
// kernel: patch_conv3d_forward.3
$region0: #{patch_conv3d_forward.3}
  #allocation0 [shape = 'u32[]', space=smem, size = 0x4, offset = 0x4, fixed_abs, tag = 'smem constant byte address 0x4 - core index']
  #allocation1 [shape = 'u32[144,128]{1,0:T(1,128)}', space=vmem, size = 0x12000, scoped, tag = 'internal scratch']
  %s0 = inlined_call_operand.vmem [shape: f32[2,8,36,27], index: 0, kind: input, shape index: {}]
  %s1 = inlined_call_operand.vmem [shape: f32[3,27,8], index: 1, kind: input, shape index: {}]
  %s2 = inlined_call_operand.vmem [shape: f32[1,8], index: 2, kind: input, shape index: {}]
  %s3 = inlined_call_operand.vmem [shape: f32[1,8], index: 3, kind: input, shape index: {}]
  %s4 = inlined_call_operand.vmem [shape: f32[1,8], index: 4, kind: input, shape index: {}]
  %s5 = inlined_call_operand.vmem [shape: f32[2,3,36,8], index: 5, kind: output, shape index: {}]
  %s6 = sld [smem:[#allocation0]]
  $region53: #{patch_conv3d_forward.3} parent=0
    _
  %s8 = ssub.s32 1, %s6
  %s9 = scalar_select 0, %s8, %s6
  loop: start=0, step=1, limit=4
  $region2: #{patch_conv3d_forward.3} parent=0 // loop_pre_header
    _
  $region3: #{patch_conv3d_forward.3} parent=0 // loop_header
    %s11 = sphi 0, %s15
    %p12 = scmp.ge.s32.totalorder %s11, 4
    %s21 = sphi 0, %s23
    %s24 = sphi 0, %s21
    %s25 = sphi 0, %s24
    %s41 = sphi 0, %s25
    %s45 = sphi 0, %s45
    %s47 = sphi 0, %s45
    %s48 = sphi 0, %s47
    %s62 = sphi 0, %s48
    %s66 = sphi 0, %s66
    %s68 = sphi 0, %s66
    %s69 = sphi 0, %s68
    %s83 = sphi 0, %s69
    %s87 = sphi 0, %s87
    %s89 = sphi 0, %s87
    %s90 = sphi 0, %s89
    %s104 = sphi 0, %s90
    %s108 = sphi 0, %s108
    %s110 = sphi 0, %s108
    %s111 = sphi 0, %s110
    %s125 = sphi 0, %s111
    %s131 = sphi 0, %s133
    %s134 = sphi 0, %s131
    %s135 = sphi 0, %s134
    %s151 = sphi 0, %s135
  $region4: #{patch_conv3d_forward.3} parent=0 // loop_header_branch
    %14 = sbr.rel (%p12) target = $region8
  $region5: #{patch_conv3d_forward.3} parent=0 // loop_body
    %s16 = ssub.s32 %s11, 1
    %s17 = ssub.s32 %s11, 2
    %s18 = sadd.s32 %s11, 1
    %s19 = ssub.s32 %s11, %s18
    %p20 = scmp.eq.s32.totalorder %s19, 0
    %s22 = sadd.s32 %s21, 1
    %s23 = scalar_select %p20, %s21, %s22
    %p26 = pneg %p20
    %p27 = scmp.eq.s32.totalorder %s11, 1
    %p28 = por %p26, %p27
    %p29 = scmp.ne.s32.totalorder %s21, %s24
    %p30 = scmp.eq.s32.totalorder %s11, 0
    %p31 = por %p29, %p30
    %p32 = scmp.ne.s32.totalorder %s21, %s24
    %p33 = scmp.eq.s32.totalorder %s16, 1
    %p34 = por %p32, %p33
    %p35 = scmp.ne.s32.totalorder %s24, %s25
    %p36 = scmp.eq.s32.totalorder %s16, 0
    %p37 = por %p35, %p36
    %p38 = scmp.ne.s32.totalorder %s24, %s25
    %p39 = scmp.eq.s32.totalorder %s17, 1
    %p40 = por %p38, %p39
    %p42 = scmp.ne.s32.totalorder %s25, %s41
    %p43 = scmp.eq.s32.totalorder %s17, 0
    %p44 = por %p42, %p43
    %s46 = sadd.s32 %s45, 1
    %p49 = scmp.eq.s32.totalorder %s11, 1
    %p50 = scmp.ne.s32.totalorder %s45, %s47
    %p51 = scmp.eq.s32.totalorder %s11, 0
    %p52 = por %p50, %p51
    %p53 = scmp.ne.s32.totalorder %s45, %s47
    %p54 = scmp.eq.s32.totalorder %s16, 1
    %p55 = por %p53, %p54
    %p56 = scmp.ne.s32.totalorder %s47, %s48
    %p57 = scmp.eq.s32.totalorder %s16, 0
    %p58 = por %p56, %p57
    %p59 = scmp.ne.s32.totalorder %s47, %s48
    %p60 = scmp.eq.s32.totalorder %s17, 1
    %p61 = por %p59, %p60
    %p63 = scmp.ne.s32.totalorder %s48, %s62
    %p64 = scmp.eq.s32.totalorder %s17, 0
    %p65 = por %p63, %p64
    %s67 = sadd.s32 %s66, 1
    %p70 = scmp.eq.s32.totalorder %s11, 1
    %p71 = scmp.ne.s32.totalorder %s66, %s68
    %p72 = scmp.eq.s32.totalorder %s11, 0
    %p73 = por %p71, %p72
    %p74 = scmp.ne.s32.totalorder %s66, %s68
    %p75 = scmp.eq.s32.totalorder %s16, 1
    %p76 = por %p74, %p75
    %p77 = scmp.ne.s32.totalorder %s68, %s69
    %p78 = scmp.eq.s32.totalorder %s16, 0
    %p79 = por %p77, %p78
    %p80 = scmp.ne.s32.totalorder %s68, %s69
    %p81 = scmp.eq.s32.totalorder %s17, 1
    %p82 = por %p80, %p81
    %p84 = scmp.ne.s32.totalorder %s69, %s83
    %p85 = scmp.eq.s32.totalorder %s17, 0
    %p86 = por %p84, %p85
    %s88 = sadd.s32 %s87, 1
    %p91 = scmp.eq.s32.totalorder %s11, 1
    %p92 = scmp.ne.s32.totalorder %s87, %s89
    %p93 = scmp.eq.s32.totalorder %s11, 0
    %p94 = por %p92, %p93
    %p95 = scmp.ne.s32.totalorder %s87, %s89
    %p96 = scmp.eq.s32.totalorder %s16, 1
    %p97 = por %p95, %p96
    %p98 = scmp.ne.s32.totalorder %s89, %s90
    %p99 = scmp.eq.s32.totalorder %s16, 0
    %p100 = por %p98, %p99
    %p101 = scmp.ne.s32.totalorder %s89, %s90
    %p102 = scmp.eq.s32.totalorder %s17, 1
    %p103 = por %p101, %p102
    %p105 = scmp.ne.s32.totalorder %s90, %s104
    %p106 = scmp.eq.s32.totalorder %s17, 0
    %p107 = por %p105, %p106
    %s109 = sadd.s32 %s108, 1
    %p112 = scmp.eq.s32.totalorder %s11, 1
    %p113 = scmp.ne.s32.totalorder %s108, %s110
    %p114 = scmp.eq.s32.totalorder %s11, 0
    %p115 = por %p113, %p114
    %p116 = scmp.ne.s32.totalorder %s108, %s110
    %p117 = scmp.eq.s32.totalorder %s16, 1
    %p118 = por %p116, %p117
    %p119 = scmp.ne.s32.totalorder %s110, %s111
    %p120 = scmp.eq.s32.totalorder %s16, 0
    %p121 = por %p119, %p120
    %p122 = scmp.ne.s32.totalorder %s110, %s111
    %p123 = scmp.eq.s32.totalorder %s17, 1
    %p124 = por %p122, %p123
    %p126 = scmp.ne.s32.totalorder %s111, %s125
    %p127 = scmp.eq.s32.totalorder %s17, 0
    %p128 = por %p126, %p127
    %s129 = ssub.s32 %s11, %s18
    %p130 = scmp.eq.s32.totalorder %s129, 0
    %s132 = sadd.s32 %s131, 1
    %s133 = scalar_select %p130, %s131, %s132
    %p136 = pneg %p130
    %p137 = scmp.eq.s32.totalorder %s11, 1
    %p138 = por %p136, %p137
    %p139 = scmp.ne.s32.totalorder %s131, %s134
    %p140 = scmp.eq.s32.totalorder %s11, 0
    %p141 = por %p139, %p140
    %p142 = scmp.ne.s32.totalorder %s131, %s134
    %p143 = scmp.eq.s32.totalorder %s16, 1
    %p144 = por %p142, %p143
    %p145 = scmp.ne.s32.totalorder %s134, %s135
    %p146 = scmp.eq.s32.totalorder %s16, 0
    %p147 = por %p145, %p146
    %p148 = scmp.ne.s32.totalorder %s134, %s135
    %p149 = scmp.eq.s32.totalorder %s17, 1
    %p150 = por %p148, %p149
    %p152 = scmp.ne.s32.totalorder %s135, %s151
    %p153 = scmp.eq.s32.totalorder %s17, 0
    %p154 = por %p152, %p153
    %p155 = scmp.le.s32.totalorder 1, %s11
    %p156 = scmp.lt.s32.totalorder %s11, 3
    %p157 = pnand %p155, %p156
    %p158 = pneg %p157
    // Predicated region
    $region9: #{patch_conv3d_forward.3} parent=5 // pred_check
      _
    $region10: #{patch_conv3d_forward.3} parent=5 // pred_check_branch
      %160 = sbr.rel (%p157) target = $region12
    $region11: #{patch_conv3d_forward.3} parent=5 // pred_region
      %s161 = ssub.s32 %s11, 1
      // Predicated region
      $region13: #{patch_conv3d_forward.3} parent=11 // pred_check
        %p162 = pneg %p58
      $region14: #{patch_conv3d_forward.3} parent=11 // pred_check_branch
        %164 = sbr.rel (%p162) target = $region16
      $region15: #{patch_conv3d_forward.3} parent=11 // pred_region
        _
      $region16: #{patch_conv3d_forward.3} parent=11 // pred_fallthru
        _
      // Predicated region
      $region17: #{patch_conv3d_forward.3} parent=11 // pred_check
        %p165 = pneg %p79
      $region18: #{patch_conv3d_forward.3} parent=11 // pred_check_branch
        %167 = sbr.rel (%p165) target = $region20
      $region19: #{patch_conv3d_forward.3} parent=11 // pred_region
        _
      $region20: #{patch_conv3d_forward.3} parent=11 // pred_fallthru
        _
      // Predicated region
      $region21: #{patch_conv3d_forward.3} parent=11 // pred_check
        %p168 = pneg %p100
      $region22: #{patch_conv3d_forward.3} parent=11 // pred_check_branch
        %170 = sbr.rel (%p168) target = $region24
      $region23: #{patch_conv3d_forward.3} parent=11 // pred_region
        _
      $region24: #{patch_conv3d_forward.3} parent=11 // pred_fallthru
        _
      // Predicated region
      $region25: #{patch_conv3d_forward.3} parent=11 // pred_check
        %p171 = pneg %p121
      $region26: #{patch_conv3d_forward.3} parent=11 // pred_check_branch
        %173 = sbr.rel (%p171) target = $region28
      $region27: #{patch_conv3d_forward.3} parent=11 // pred_region
        _
      $region28: #{patch_conv3d_forward.3} parent=11 // pred_fallthru
        _
    $region12: #{patch_conv3d_forward.3} parent=5 // pred_fallthru
      _
    %p174 = scmp.lt.s32.totalorder %s11, 2
    // Predicated region
    $region29: #{patch_conv3d_forward.3} parent=5 // pred_check
      %p175 = pneg %p174
    $region30: #{patch_conv3d_forward.3} parent=5 // pred_check_branch
      %177 = sbr.rel (%p175) target = $region32
    $region31: #{patch_conv3d_forward.3} parent=5 // pred_region
      // Predicated region
      $region33: #{patch_conv3d_forward.3} parent=31 // pred_check
        %p178 = pneg %p31
      $region34: #{patch_conv3d_forward.3} parent=31 // pred_check_branch
        %180 = sbr.rel (%p178) target = $region36
      $region35: #{patch_conv3d_forward.3} parent=31 // pred_region
        %p181 = scmp.lt.s32.totalorder %s11, 1
        %s182 = scalar_select %p181, %s11, 1
        %s183 = smul.addr %s182, 40
        %s184 = smul.addr %s183, 8
        %s185 = scalar_lea.vmem %s0, %s184
      $region36: #{patch_conv3d_forward.3} parent=31 // pred_fallthru
        _
    $region32: #{patch_conv3d_forward.3} parent=5 // pred_fallthru
      _
    %p186 = scmp.le.s32.totalorder 1, %s11
    %p187 = scmp.lt.s32.totalorder %s11, 3
    %p188 = pnand %p186, %p187
    %p189 = pneg %p188
    // Predicated region
    $region37: #{patch_conv3d_forward.3} parent=5 // pred_check
      _
    $region38: #{patch_conv3d_forward.3} parent=5 // pred_check_branch
      %191 = sbr.rel (%p188) target = $region40
    $region39: #{patch_conv3d_forward.3} parent=5 // pred_region
      %s192 = ssub.s32 %s11, 1
      %p193 = scmp.lt.s32.totalorder %s16, 1
      %s194 = scalar_select %p193, %s16, 1
      %s195 = smul.addr %s194, 40
      %s196 = smul.addr %s195, 8
      %s197 = scalar_lea.vmem %s0, %s196
      %p198 = pneg %p37
      %p199 = pneg %p34
      %p200 = pneg %p58
      %p201 = pneg %p55
      %p202 = pneg %p79
      %p203 = pneg %p76
      %p204 = pneg %p100
      %p205 = pneg %p97
      %p206 = pneg %p121
      %p207 = pneg %p118
      %p208 = pneg %p147
      %p209 = pneg %p144
      %p210 = scmp.lt.s32.totalorder %s16, 1
      %s211 = scalar_select %p210, %s16, 1
      %s212 = smul.addr %s211, 15
      %s213 = smul.addr %s212, 8
      %s214 = scalar_lea.vmem %s5, %s213
      %p215 = scmp.lt.s32.totalorder %s16, 1
      %s216 = scalar_select %p215, %s16, 1
      %s217 = smul.addr %s216, 40
      %s218 = smul.addr %s217, 8
      %s219 = scalar_lea.vmem %s0, %s218
      %p220 = scmp.lt.s32.totalorder %s16, 1
      %s221 = scalar_select %p220, %s16, 1
      %s222 = smul.addr %s221, 15
      %s223 = smul.addr %s222, 8
      %s224 = scalar_lea.vmem %s5, %s223
      %v225 = vld [vmem:[%s219] sm:$0xff]
      %v226 = vld [vmem:[%s219 + $0x8] sm:$0xff]
      %v227 = vld [vmem:[%s219 + $0x10] sm:$0xff]
      %v228 = vld [vmem:[%s219 + $0x18] sm:$0xff]
      %v229 = vld [vmem:[%s219 + $0x20] sm:$0xf]
      %v230 = vld [vmem:[%s1] sm:$0xff]
      %v231 = vld [vmem:[%s1 + $0x8] sm:$0xff]
      %v232 = vld [vmem:[%s1 + $0x10] sm:$0xff]
      %v233 = vld [vmem:[%s1 + $0x18] sm:$0x7]
      %s234 = scalar_lea.vmem %s219, 40
      %v235 = vld [vmem:[%s234] sm:$0xff]
      %v236 = vld [vmem:[%s234 + $0x8] sm:$0xff]
      %v237 = vld [vmem:[%s234 + $0x10] sm:$0xff]
      %v238 = vld [vmem:[%s234 + $0x18] sm:$0xff]
      %v239 = vld [vmem:[%s234 + $0x20] sm:$0xf]
      %s240 = scalar_lea.vmem %s1, 32
      %v241 = vld [vmem:[%s240] sm:$0xff]
      %v242 = vld [vmem:[%s240 + $0x8] sm:$0xff]
      %v243 = vld [vmem:[%s240 + $0x10] sm:$0xff]
      %v244 = vld [vmem:[%s240 + $0x18] sm:$0x7]
      %vm245 = vcmask 220160
      %v247 = vsel %vm245, %v235, 0
      %v250 = vsel %vm245, %v236, 0
      %v253 = vsel %vm245, %v237, 0
      %v256 = vsel %vm245, %v238, 0
      %v259 = vsel %vm245, %v239, 0
      %vm261 = vcmask 1042432
      %v263 = vsel %vm261, %v244, 0
      %265 = vmatprep.subr.mxu0 0.0
      %266 = vmatpush1.msra.mxu0 0.0
      %267 = vmatprep.subr.mxu0 0.0
      %268 = vmatpush1.msra.mxu0 0.0
      %269 = vmatprep.subr.mxu0 0.0
      %270 = vmatpush1.msra.mxu0 0.0
      %271 = vmatprep.subr.mxu0 0.0
      %272 = vmatpush1.msra.mxu0 0.0
      %273 = vmatprep.subr.mxu0 0.0
      %274 = vmatpush1.msra.mxu0 0.0
      %275 = vmatprep.subr.mxu0 0.0
      %276 = vmatpush1.msra.mxu0 0.0
      %277 = vmatprep.subr.mxu0 0.0
      %278 = vmatpush1.msra.mxu0 0.0
      %279 = vmatprep.subr.mxu0 0.0
      %280 = vmatpush1.msra.mxu0 0.0
      %281 = vmatprep.subr.mxu0 0.0
      %282 = vmatpush1.msra.mxu0 0.0
      %283 = vmatprep.subr.mxu0 0.0
      %284 = vmatpush1.msra.mxu0 0.0
      %285 = vmatprep.subr.mxu0 0.0
      %286 = vmatpush1.msra.mxu0 0.0
      %287 = vmatprep.subr.mxu0 0.0
      %288 = vmatpush1.msra.mxu0 0.0
      %289 = vmatprep.subr.mxu0 0.0
      %290 = vmatpush1.msra.mxu0 %v263
      %291 = vmatprep.subr.mxu0 0.0
      %292 = vmatpush1.msra.mxu0 %v243
      %293 = vmatprep.subr.mxu0 0.0
      %294 = vmatpush1.msra.mxu0 %v242
      %295 = vmatprep.subr.mxu0 0.0
      %296 = vmatpush1.msra.mxu0 %v241
      %297 = vmatprep.subr.mxu0 0.0
      %298 = vmatpush2.msra.mxu0 0.0
      %299 = vmatprep.subr.mxu0 0.0
      %300 = vmatpush2.msra.mxu0 0.0
      %301 = vmatprep.subr.mxu0 0.0
      %302 = vmatpush2.msra.mxu0 0.0
      %303 = vmatprep.subr.mxu0 0.0
      %304 = vmatpush2.msra.mxu0 0.0
      %305 = vmatprep.subr.mxu0 0.0
      %306 = vmatpush2.msra.mxu0 0.0
      %307 = vmatprep.subr.mxu0 0.0
      %308 = vmatpush2.msra.mxu0 0.0
      %309 = vmatprep.subr.mxu0 0.0
      %310 = vmatpush2.msra.mxu0 0.0
      %311 = vmatprep.subr.mxu0 0.0
      %312 = vmatpush2.msra.mxu0 0.0
      %313 = vmatprep.subr.mxu0 0.0
      %314 = vmatpush2.msra.mxu0 0.0
      %315 = vmatprep.subr.mxu0 0.0
      %316 = vmatpush2.msra.mxu0 0.0
      %317 = vmatprep.subr.mxu0 0.0
      %318 = vmatpush2.msra.mxu0 0.0
      %319 = vmatprep.subr.mxu0 0.0
      %320 = vmatpush2.msra.mxu0 0.0
      %321 = vmatprep.subr.mxu0 0.0
      %322 = vmatpush2.msra.mxu0 0.0
      %323 = vmatprep.subr.mxu0 0.0
      %324 = vmatpush2.msra.mxu0 0.0
      %325 = vmatprep.subr.mxu0 0.0
      %326 = vmatpush2.msra.mxu0 0.0
      %327 = vmatprep.subr.mxu0 0.0
      %328 = vmatpush2.msra.mxu0 0.0
      %329 = vmatprep.mubr.f32.mxu0 0.0
      %330 = vmatmul.mubr.f32.gmra.mxu0 %v247
      %v331 = vpop.f32.mrf.mxu0
      %v332 = vadd.f32 0.0, %v331
      %v333 = vpop.f32.mrf.mxu0
      %334 = vmatprep.mubr.f32.mxu0 0.0
      %335 = vmatmul.mubr.f32.gmra.mxu0 %v250
      %v336 = vpop.f32.mrf.mxu0
      %v337 = vadd.f32 0.0, %v336
      %v338 = vpop.f32.mrf.mxu0
      %339 = vmatprep.mubr.f32.mxu0 0.0
      %340 = vmatmul.mubr.f32.gmra.mxu0 %v253
      %v341 = vpop.f32.mrf.mxu0
      %v342 = vadd.f32 0.0, %v341
      %v343 = vpop.f32.mrf.mxu0
      %344 = vmatprep.mubr.f32.mxu0 0.0
      %345 = vmatmul.mubr.f32.gmra.mxu0 %v256
      %v346 = vpop.f32.mrf.mxu0
      %v347 = vadd.f32 0.0, %v346
      %v348 = vpop.f32.mrf.mxu0
      %349 = vmatprep.mubr.f32.mxu0 0.0
      %350 = vmatmul.mubr.f32.gmra.mxu0 %v259
      %v351 = vpop.f32.mrf.mxu0
      %v352 = vadd.f32 0.0, %v351
      %v353 = vpop.f32.mrf.mxu0
      %354 = vdwg.mxu0
      %v356 = vsel %vm245, %v225, 0
      %v359 = vsel %vm245, %v226, 0
      %v362 = vsel %vm245, %v227, 0
      %v365 = vsel %vm245, %v228, 0
      %v368 = vsel %vm245, %v229, 0
      %v371 = vsel %vm261, %v233, 0
      %373 = vmatprep.subr.mxu0 0.0
      %374 = vmatpush1.msra.mxu0 0.0
      %375 = vmatprep.subr.mxu0 0.0
      %376 = vmatpush1.msra.mxu0 0.0
      %377 = vmatprep.subr.mxu0 0.0
      %378 = vmatpush1.msra.mxu0 0.0
      %379 = vmatprep.subr.mxu0 0.0
      %380 = vmatpush1.msra.mxu0 0.0
      %381 = vmatprep.subr.mxu0 0.0
      %382 = vmatpush1.msra.mxu0 0.0
      %383 = vmatprep.subr.mxu0 0.0
      %384 = vmatpush1.msra.mxu0 0.0
      %385 = vmatprep.subr.mxu0 0.0
      %386 = vmatpush1.msra.mxu0 0.0
      %387 = vmatprep.subr.mxu0 0.0
      %388 = vmatpush1.msra.mxu0 0.0
      %389 = vmatprep.subr.mxu0 0.0
      %390 = vmatpush1.msra.mxu0 0.0
      %391 = vmatprep.subr.mxu0 0.0
      %392 = vmatpush1.msra.mxu0 0.0
      %393 = vmatprep.subr.mxu0 0.0
      %394 = vmatpush1.msra.mxu0 0.0
      %395 = vmatprep.subr.mxu0 0.0
      %396 = vmatpush1.msra.mxu0 0.0
      %397 = vmatprep.subr.mxu0 0.0
      %398 = vmatpush1.msra.mxu0 %v371
      %399 = vmatprep.subr.mxu0 0.0
      %400 = vmatpush1.msra.mxu0 %v232
      %401 = vmatprep.subr.mxu0 0.0
      %402 = vmatpush1.msra.mxu0 %v231
      %403 = vmatprep.subr.mxu0 0.0
      %404 = vmatpush1.msra.mxu0 %v230
      %405 = vmatprep.subr.mxu0 0.0
      %406 = vmatpush2.msra.mxu0 0.0
      %407 = vmatprep.subr.mxu0 0.0
      %408 = vmatpush2.msra.mxu0 0.0
      %409 = vmatprep.subr.mxu0 0.0
      %410 = vmatpush2.msra.mxu0 0.0
      %411 = vmatprep.subr.mxu0 0.0
      %412 = vmatpush2.msra.mxu0 0.0
      %413 = vmatprep.subr.mxu0 0.0
      %414 = vmatpush2.msra.mxu0 0.0
      %415 = vmatprep.subr.mxu0 0.0
      %416 = vmatpush2.msra.mxu0 0.0
      %417 = vmatprep.subr.mxu0 0.0
      %418 = vmatpush2.msra.mxu0 0.0
      %419 = vmatprep.subr.mxu0 0.0
      %420 = vmatpush2.msra.mxu0 0.0
      %421 = vmatprep.subr.mxu0 0.0
      %422 = vmatpush2.msra.mxu0 0.0
      %423 = vmatprep.subr.mxu0 0.0
      %424 = vmatpush2.msra.mxu0 0.0
      %425 = vmatprep.subr.mxu0 0.0
      %426 = vmatpush2.msra.mxu0 0.0
      %427 = vmatprep.subr.mxu0 0.0
      %428 = vmatpush2.msra.mxu0 0.0
      %429 = vmatprep.subr.mxu0 0.0
      %430 = vmatpush2.msra.mxu0 0.0
      %431 = vmatprep.subr.mxu0 0.0
      %432 = vmatpush2.msra.mxu0 0.0
      %433 = vmatprep.subr.mxu0 0.0
      %434 = vmatpush2.msra.mxu0 0.0
      %435 = vmatprep.subr.mxu0 0.0
      %436 = vmatpush2.msra.mxu0 0.0
      %437 = vmatprep.mubr.f32.mxu0 0.0
      %438 = vmatmul.mubr.f32.gmra.mxu0 %v356
      %v439 = vpop.f32.mrf.mxu0
      %v440 = vadd.f32 %v332, %v439
      %v441 = vpop.f32.mrf.mxu0
      %442 = vmatprep.mubr.f32.mxu0 0.0
      %443 = vmatmul.mubr.f32.gmra.mxu0 %v359
      %v444 = vpop.f32.mrf.mxu0
      %v445 = vadd.f32 %v337, %v444
      %v446 = vpop.f32.mrf.mxu0
      %447 = vmatprep.mubr.f32.mxu0 0.0
      %448 = vmatmul.mubr.f32.gmra.mxu0 %v362
      %v449 = vpop.f32.mrf.mxu0
      %v450 = vadd.f32 %v342, %v449
      %v451 = vpop.f32.mrf.mxu0
      %452 = vmatprep.mubr.f32.mxu0 0.0
      %453 = vmatmul.mubr.f32.gmra.mxu0 %v365
      %v454 = vpop.f32.mrf.mxu0
      %v455 = vadd.f32 %v347, %v454
      %v456 = vpop.f32.mrf.mxu0
      %457 = vmatprep.mubr.f32.mxu0 0.0
      %458 = vmatmul.mubr.f32.gmra.mxu0 %v368
      %v459 = vpop.f32.mrf.mxu0
      %v460 = vadd.f32 %v352, %v459
      %v461 = vpop.f32.mrf.mxu0
      %462 = vdwg.mxu0
      %s463 = scalar_lea.vmem %s219, 80
      %v464 = vld [vmem:[%s463] sm:$0xff]
      %v465 = vld [vmem:[%s463 + $0x8] sm:$0xff]
      %v466 = vld [vmem:[%s463 + $0x10] sm:$0xff]
      %v467 = vld [vmem:[%s463 + $0x18] sm:$0xff]
      %v468 = vld [vmem:[%s463 + $0x20] sm:$0xf]
      %s469 = scalar_lea.vmem %s1, 64
      %v470 = vld [vmem:[%s469] sm:$0xff]
      %v471 = vld [vmem:[%s469 + $0x8] sm:$0xff]
      %v472 = vld [vmem:[%s469 + $0x10] sm:$0xff]
      %v473 = vld [vmem:[%s469 + $0x18] sm:$0x7]
      %v475 = vsel %vm245, %v464, 0
      %v478 = vsel %vm245, %v465, 0
      %v481 = vsel %vm245, %v466, 0
      %v484 = vsel %vm245, %v467, 0
      %v487 = vsel %vm245, %v468, 0
      %v490 = vsel %vm261, %v473, 0
      %492 = vmatprep.subr.mxu0 0.0
      %493 = vmatpush1.msra.mxu0 0.0
      %494 = vmatprep.subr.mxu0 0.0
      %495 = vmatpush1.msra.mxu0 0.0
      %496 = vmatprep.subr.mxu0 0.0
      %497 = vmatpush1.msra.mxu0 0.0
      %498 = vmatprep.subr.mxu0 0.0
      %499 = vmatpush1.msra.mxu0 0.0
      %500 = vmatprep.subr.mxu0 0.0
      %501 = vmatpush1.msra.mxu0 0.0
      %502 = vmatprep.subr.mxu0 0.0
      %503 = vmatpush1.msra.mxu0 0.0
      %504 = vmatprep.subr.mxu0 0.0
      %505 = vmatpush1.msra.mxu0 0.0
      %506 = vmatprep.subr.mxu0 0.0
      %507 = vmatpush1.msra.mxu0 0.0
      %508 = vmatprep.subr.mxu0 0.0
      %509 = vmatpush1.msra.mxu0 0.0
      %510 = vmatprep.subr.mxu0 0.0
      %511 = vmatpush1.msra.mxu0 0.0
      %512 = vmatprep.subr.mxu0 0.0
      %513 = vmatpush1.msra.mxu0 0.0
      %514 = vmatprep.subr.mxu0 0.0
      %515 = vmatpush1.msra.mxu0 0.0
      %516 = vmatprep.subr.mxu0 0.0
      %517 = vmatpush1.msra.mxu0 %v490
      %518 = vmatprep.subr.mxu0 0.0
      %519 = vmatpush1.msra.mxu0 %v472
      %520 = vmatprep.subr.mxu0 0.0
      %521 = vmatpush1.msra.mxu0 %v471
      %522 = vmatprep.subr.mxu0 0.0
      %523 = vmatpush1.msra.mxu0 %v470
      %524 = vmatprep.subr.mxu0 0.0
      %525 = vmatpush2.msra.mxu0 0.0
      %526 = vmatprep.subr.mxu0 0.0
      %527 = vmatpush2.msra.mxu0 0.0
      %528 = vmatprep.subr.mxu0 0.0
      %529 = vmatpush2.msra.mxu0 0.0
      %530 = vmatprep.subr.mxu0 0.0
      %531 = vmatpush2.msra.mxu0 0.0
      %532 = vmatprep.subr.mxu0 0.0
      %533 = vmatpush2.msra.mxu0 0.0
      %534 = vmatprep.subr.mxu0 0.0
      %535 = vmatpush2.msra.mxu0 0.0
      %536 = vmatprep.subr.mxu0 0.0
      %537 = vmatpush2.msra.mxu0 0.0
      %538 = vmatprep.subr.mxu0 0.0
      %539 = vmatpush2.msra.mxu0 0.0
      %540 = vmatprep.subr.mxu0 0.0
      %541 = vmatpush2.msra.mxu0 0.0
      %542 = vmatprep.subr.mxu0 0.0
      %543 = vmatpush2.msra.mxu0 0.0
      %544 = vmatprep.subr.mxu0 0.0
      %545 = vmatpush2.msra.mxu0 0.0
      %546 = vmatprep.subr.mxu0 0.0
      %547 = vmatpush2.msra.mxu0 0.0
      %548 = vmatprep.subr.mxu0 0.0
      %549 = vmatpush2.msra.mxu0 0.0
      %550 = vmatprep.subr.mxu0 0.0
      %551 = vmatpush2.msra.mxu0 0.0
      %552 = vmatprep.subr.mxu0 0.0
      %553 = vmatpush2.msra.mxu0 0.0
      %554 = vmatprep.subr.mxu0 0.0
      %555 = vmatpush2.msra.mxu0 0.0
      %556 = vmatprep.mubr.f32.mxu0 0.0
      %557 = vmatmul.mubr.f32.gmra.mxu0 %v475
      %v558 = vpop.f32.mrf.mxu0
      %v559 = vadd.f32 0.0, %v558
      %v560 = vpop.f32.mrf.mxu0
      %561 = vmatprep.mubr.f32.mxu0 0.0
      %562 = vmatmul.mubr.f32.gmra.mxu0 %v478
      %v563 = vpop.f32.mrf.mxu0
      %v564 = vadd.f32 0.0, %v563
      %v565 = vpop.f32.mrf.mxu0
      %566 = vmatprep.mubr.f32.mxu0 0.0
      %567 = vmatmul.mubr.f32.gmra.mxu0 %v481
      %v568 = vpop.f32.mrf.mxu0
      %v569 = vadd.f32 0.0, %v568
      %v570 = vpop.f32.mrf.mxu0
      %571 = vmatprep.mubr.f32.mxu0 0.0
      %572 = vmatmul.mubr.f32.gmra.mxu0 %v484
      %v573 = vpop.f32.mrf.mxu0
      %v574 = vadd.f32 0.0, %v573
      %v575 = vpop.f32.mrf.mxu0
      %576 = vmatprep.mubr.f32.mxu0 0.0
      %577 = vmatmul.mubr.f32.gmra.mxu0 %v487
      %v578 = vpop.f32.mrf.mxu0
      %v579 = vadd.f32 0.0, %v578
      %v580 = vpop.f32.mrf.mxu0
      %581 = vdwg.mxu0
      %v582 = vadd.f32 %v440, %v559
      %v583 = vadd.f32 %v445, %v564
      %v584 = vadd.f32 %v450, %v569
      %v585 = vadd.f32 %v455, %v574
      %v586 = vadd.f32 %v460, %v579
      %v587 = vld [vmem:[%s2] sm:$0x1]
      %v589 = vlaneseq
      %v590 = vshrl.u32 %v589, 7
      %v591 = vsub.s32 0, %v590
      %v592 = vrot.slane %v587, %v591
      %v594 = vadd.f32 %v582, %v592
      %v595 = vadd.f32 %v583, %v592
      %v596 = vadd.f32 %v584, %v592
      %v597 = vadd.f32 %v585, %v592
      %v598 = vadd.f32 %v586, %v592
      %vm599 = vcmask 64512
      %600 = vst.msk [vmem:[%s224] sm:$0xff] %vm599, %v594
      %601 = vst.msk [vmem:[%s224 + $0x8] sm:$0xff] %vm599, %v595
      %602 = vst.msk [vmem:[%s224 + $0x10] sm:$0xff] %vm599, %v596
      %603 = vst.msk [vmem:[%s224 + $0x18] sm:$0xff] %vm599, %v597
      %vm604 = vcmask 60416
      %605 = vst.msk [vmem:[%s224 + $0x20] sm:$0xf] %vm604, %v598
      %v606 = vsel %vm599, %v594, 0.0
      %v607 = vsel %vm599, %v595, 0.0
      %v608 = vadd.f32 %v606, %v607
      %v609 = vsel %vm599, %v596, 0.0
      %v610 = vadd.f32 %v608, %v609
      %v611 = vsel %vm599, %v597, 0.0
      %v612 = vadd.f32 %v610, %v611
      %v613 = vsel %vm604, %v598, 0.0
      %v614 = vadd.f32 %v612, %v613
      %v615 = vrot.slane %v614, 4
      %v616 = vadd.f32 %v614, %v615
      %v617 = vrot.slane %v616, 2
      %v618 = vadd.f32 %v616, %v617
      %v619 = vrot.slane %v618, 1
      %v620 = vadd.f32 %v618, %v619
      %v621 = vadd.f32 %v620, 0.0
      %v622 = vmul.f32 %v594, %v594
      %v623 = vmul.f32 %v595, %v595
      %v624 = vmul.f32 %v596, %v596
      %v625 = vmul.f32 %v597, %v597
      %v626 = vmul.f32 %v598, %v598
      %v627 = vsel %vm599, %v622, 0.0
      %v628 = vsel %vm599, %v623, 0.0
      %v629 = vadd.f32 %v627, %v628
      %v630 = vsel %vm599, %v624, 0.0
      %v631 = vadd.f32 %v629, %v630
      %v632 = vsel %vm599, %v625, 0.0
      %v633 = vadd.f32 %v631, %v632
      %v634 = vsel %vm604, %v626, 0.0
      %v635 = vadd.f32 %v633, %v634
      %v636 = vrot.slane %v635, 4
      %v637 = vadd.f32 %v635, %v636
      %v638 = vrot.slane %v637, 2
      %v639 = vadd.f32 %v637, %v638
      %v640 = vrot.slane %v639, 1
      %v641 = vadd.f32 %v639, %v640
      %v642 = vadd.f32 %v641, 0.0
      %v643 = vld [vmem:[%s463] sm:$0xff]
      %v644 = vld [vmem:[%s463 + $0x8] sm:$0xff]
      %v645 = vld [vmem:[%s463 + $0x10] sm:$0xff]
      %v646 = vld [vmem:[%s463 + $0x18] sm:$0xff]
      %v647 = vld [vmem:[%s463 + $0x20] sm:$0xf]
      %v648 = vld [vmem:[%s1] sm:$0xff]
      %v649 = vld [vmem:[%s1 + $0x8] sm:$0xff]
      %v650 = vld [vmem:[%s1 + $0x10] sm:$0xff]
      %v651 = vld [vmem:[%s1 + $0x18] sm:$0x7]
      %s652 = scalar_lea.vmem %s219, 120
      %v653 = vld [vmem:[%s652] sm:$0xff]
      %v654 = vld [vmem:[%s652 + $0x8] sm:$0xff]
      %v655 = vld [vmem:[%s652 + $0x10] sm:$0xff]
      %v656 = vld [vmem:[%s652 + $0x18] sm:$0xff]
      %v657 = vld [vmem:[%s652 + $0x20] sm:$0xf]
      %v658 = vld [vmem:[%s240] sm:$0xff]
      %v659 = vld [vmem:[%s240 + $0x8] sm:$0xff]
      %v660 = vld [vmem:[%s240 + $0x10] sm:$0xff]
      %v661 = vld [vmem:[%s240 + $0x18] sm:$0x7]
      %v663 = vsel %vm245, %v653, 0
      %v666 = vsel %vm245, %v654, 0
      %v669 = vsel %vm245, %v655, 0
      %v672 = vsel %vm245, %v656, 0
      %v675 = vsel %vm245, %v657, 0
      %v678 = vsel %vm261, %v661, 0
      %680 = vmatprep.subr.mxu0 0.0
      %681 = vmatpush1.msra.mxu0 0.0
      %682 = vmatprep.subr.mxu0 0.0
      %683 = vmatpush1.msra.mxu0 0.0
      %684 = vmatprep.subr.mxu0 0.0
      %685 = vmatpush1.msra.mxu0 0.0
      %686 = vmatprep.subr.mxu0 0.0
      %687 = vmatpush1.msra.mxu0 0.0
      %688 = vmatprep.subr.mxu0 0.0
      %689 = vmatpush1.msra.mxu0 0.0
      %690 = vmatprep.subr.mxu0 0.0
      %691 = vmatpush1.msra.mxu0 0.0
      %692 = vmatprep.subr.mxu0 0.0
      %693 = vmatpush1.msra.mxu0 0.0
      %694 = vmatprep.subr.mxu0 0.0
      %695 = vmatpush1.msra.mxu0 0.0
      %696 = vmatprep.subr.mxu0 0.0
      %697 = vmatpush1.msra.mxu0 0.0
      %698 = vmatprep.subr.mxu0 0.0
      %699 = vmatpush1.msra.mxu0 0.0
      %700 = vmatprep.subr.mxu0 0.0
      %701 = vmatpush1.msra.mxu0 0.0
      %702 = vmatprep.subr.mxu0 0.0
      %703 = vmatpush1.msra.mxu0 0.0
      %704 = vmatprep.subr.mxu0 0.0
      %705 = vmatpush1.msra.mxu0 %v678
      %706 = vmatprep.subr.mxu0 0.0
      %707 = vmatpush1.msra.mxu0 %v660
      %708 = vmatprep.subr.mxu0 0.0
      %709 = vmatpush1.msra.mxu0 %v659
      %710 = vmatprep.subr.mxu0 0.0
      %711 = vmatpush1.msra.mxu0 %v658
      %712 = vmatprep.subr.mxu0 0.0
      %713 = vmatpush2.msra.mxu0 0.0
      %714 = vmatprep.subr.mxu0 0.0
      %715 = vmatpush2.msra.mxu0 0.0
      %716 = vmatprep.subr.mxu0 0.0
      %717 = vmatpush2.msra.mxu0 0.0
      %718 = vmatprep.subr.mxu0 0.0
      %719 = vmatpush2.msra.mxu0 0.0
      %720 = vmatprep.subr.mxu0 0.0
      %721 = vmatpush2.msra.mxu0 0.0
      %722 = vmatprep.subr.mxu0 0.0
      %723 = vmatpush2.msra.mxu0 0.0
      %724 = vmatprep.subr.mxu0 0.0
      %725 = vmatpush2.msra.mxu0 0.0
      %726 = vmatprep.subr.mxu0 0.0
      %727 = vmatpush2.msra.mxu0 0.0
      %728 = vmatprep.subr.mxu0 0.0
      %729 = vmatpush2.msra.mxu0 0.0
      %730 = vmatprep.subr.mxu0 0.0
      %731 = vmatpush2.msra.mxu0 0.0
      %732 = vmatprep.subr.mxu0 0.0
      %733 = vmatpush2.msra.mxu0 0.0
      %734 = vmatprep.subr.mxu0 0.0
      %735 = vmatpush2.msra.mxu0 0.0
      %736 = vmatprep.subr.mxu0 0.0
      %737 = vmatpush2.msra.mxu0 0.0
      %738 = vmatprep.subr.mxu0 0.0
      %739 = vmatpush2.msra.mxu0 0.0
      %740 = vmatprep.subr.mxu0 0.0
      %741 = vmatpush2.msra.mxu0 0.0
      %742 = vmatprep.subr.mxu0 0.0
      %743 = vmatpush2.msra.mxu0 0.0
      %744 = vmatprep.mubr.f32.mxu0 0.0
      %745 = vmatmul.mubr.f32.gmra.mxu0 %v663
      %v746 = vpop.f32.mrf.mxu0
      %v747 = vadd.f32 0.0, %v746
      %v748 = vpop.f32.mrf.mxu0
      %749 = vmatprep.mubr.f32.mxu0 0.0
      %750 = vmatmul.mubr.f32.gmra.mxu0 %v666
      %v751 = vpop.f32.mrf.mxu0
      %v752 = vadd.f32 0.0, %v751
      %v753 = vpop.f32.mrf.mxu0
      %754 = vmatprep.mubr.f32.mxu0 0.0
      %755 = vmatmul.mubr.f32.gmra.mxu0 %v669
      %v756 = vpop.f32.mrf.mxu0
      %v757 = vadd.f32 0.0, %v756
      %v758 = vpop.f32.mrf.mxu0
      %759 = vmatprep.mubr.f32.mxu0 0.0
      %760 = vmatmul.mubr.f32.gmra.mxu0 %v672
      %v761 = vpop.f32.mrf.mxu0
      %v762 = vadd.f32 0.0, %v761
      %v763 = vpop.f32.mrf.mxu0
      %764 = vmatprep.mubr.f32.mxu0 0.0
      %765 = vmatmul.mubr.f32.gmra.mxu0 %v675
      %v766 = vpop.f32.mrf.mxu0
      %v767 = vadd.f32 0.0, %v766
      %v768 = vpop.f32.mrf.mxu0
      %769 = vdwg.mxu0
      %v771 = vsel %vm245, %v643, 0
      %v774 = vsel %vm245, %v644, 0
      %v777 = vsel %vm245, %v645, 0
      %v780 = vsel %vm245, %v646, 0
      %v783 = vsel %vm245, %v647, 0
      %v786 = vsel %vm261, %v651, 0
      %788 = vmatprep.subr.mxu0 0.0
      %789 = vmatpush1.msra.mxu0 0.0
      %790 = vmatprep.subr.mxu0 0.0
      %791 = vmatpush1.msra.mxu0 0.0
      %792 = vmatprep.subr.mxu0 0.0
      %793 = vmatpush1.msra.mxu0 0.0
      %794 = vmatprep.subr.mxu0 0.0
      %795 = vmatpush1.msra.mxu0 0.0
      %796 = vmatprep.subr.mxu0 0.0
      %797 = vmatpush1.msra.mxu0 0.0
      %798 = vmatprep.subr.mxu0 0.0
      %799 = vmatpush1.msra.mxu0 0.0
      %800 = vmatprep.subr.mxu0 0.0
      %801 = vmatpush1.msra.mxu0 0.0
      %802 = vmatprep.subr.mxu0 0.0
      %803 = vmatpush1.msra.mxu0 0.0
      %804 = vmatprep.subr.mxu0 0.0
      %805 = vmatpush1.msra.mxu0 0.0
      %806 = vmatprep.subr.mxu0 0.0
      %807 = vmatpush1.msra.mxu0 0.0
      %808 = vmatprep.subr.mxu0 0.0
      %809 = vmatpush1.msra.mxu0 0.0
      %810 = vmatprep.subr.mxu0 0.0
      %811 = vmatpush1.msra.mxu0 0.0
      %812 = vmatprep.subr.mxu0 0.0
      %813 = vmatpush1.msra.mxu0 %v786
      %814 = vmatprep.subr.mxu0 0.0
      %815 = vmatpush1.msra.mxu0 %v650
      %816 = vmatprep.subr.mxu0 0.0
      %817 = vmatpush1.msra.mxu0 %v649
      %818 = vmatprep.subr.mxu0 0.0
      %819 = vmatpush1.msra.mxu0 %v648
      %820 = vmatprep.subr.mxu0 0.0
      %821 = vmatpush2.msra.mxu0 0.0
      %822 = vmatprep.subr.mxu0 0.0
      %823 = vmatpush2.msra.mxu0 0.0
      %824 = vmatprep.subr.mxu0 0.0
      %825 = vmatpush2.msra.mxu0 0.0
      %826 = vmatprep.subr.mxu0 0.0
      %827 = vmatpush2.msra.mxu0 0.0
      %828 = vmatprep.subr.mxu0 0.0
      %829 = vmatpush2.msra.mxu0 0.0
      %830 = vmatprep.subr.mxu0 0.0
      %831 = vmatpush2.msra.mxu0 0.0
      %832 = vmatprep.subr.mxu0 0.0
      %833 = vmatpush2.msra.mxu0 0.0
      %834 = vmatprep.subr.mxu0 0.0
      %835 = vmatpush2.msra.mxu0 0.0
      %836 = vmatprep.subr.mxu0 0.0
      %837 = vmatpush2.msra.mxu0 0.0
      %838 = vmatprep.subr.mxu0 0.0
      %839 = vmatpush2.msra.mxu0 0.0
      %840 = vmatprep.subr.mxu0 0.0
      %841 = vmatpush2.msra.mxu0 0.0
      %842 = vmatprep.subr.mxu0 0.0
      %843 = vmatpush2.msra.mxu0 0.0
      %844 = vmatprep.subr.mxu0 0.0
      %845 = vmatpush2.msra.mxu0 0.0
      %846 = vmatprep.subr.mxu0 0.0
      %847 = vmatpush2.msra.mxu0 0.0
      %848 = vmatprep.subr.mxu0 0.0
      %849 = vmatpush2.msra.mxu0 0.0
      %850 = vmatprep.subr.mxu0 0.0
      %851 = vmatpush2.msra.mxu0 0.0
      %852 = vmatprep.mubr.f32.mxu0 0.0
      %853 = vmatmul.mubr.f32.gmra.mxu0 %v771
      %v854 = vpop.f32.mrf.mxu0
      %v855 = vadd.f32 %v747, %v854
      %v856 = vpop.f32.mrf.mxu0
      %857 = vmatprep.mubr.f32.mxu0 0.0
      %858 = vmatmul.mubr.f32.gmra.mxu0 %v774
      %v859 = vpop.f32.mrf.mxu0
      %v860 = vadd.f32 %v752, %v859
      %v861 = vpop.f32.mrf.mxu0
      %862 = vmatprep.mubr.f32.mxu0 0.0
      %863 = vmatmul.mubr.f32.gmra.mxu0 %v777
      %v864 = vpop.f32.mrf.mxu0
      %v865 = vadd.f32 %v757, %v864
      %v866 = vpop.f32.mrf.mxu0
      %867 = vmatprep.mubr.f32.mxu0 0.0
      %868 = vmatmul.mubr.f32.gmra.mxu0 %v780
      %v869 = vpop.f32.mrf.mxu0
      %v870 = vadd.f32 %v762, %v869
      %v871 = vpop.f32.mrf.mxu0
      %872 = vmatprep.mubr.f32.mxu0 0.0
      %873 = vmatmul.mubr.f32.gmra.mxu0 %v783
      %v874 = vpop.f32.mrf.mxu0
      %v875 = vadd.f32 %v767, %v874
      %v876 = vpop.f32.mrf.mxu0
      %877 = vdwg.mxu0
      %s878 = scalar_lea.vmem %s219, 160
      %v879 = vld [vmem:[%s878] sm:$0xff]
      %v880 = vld [vmem:[%s878 + $0x8] sm:$0xff]
      %v881 = vld [vmem:[%s878 + $0x10] sm:$0xff]
      %v882 = vld [vmem:[%s878 + $0x18] sm:$0xff]
      %v883 = vld [vmem:[%s878 + $0x20] sm:$0xf]
      %v884 = vld [vmem:[%s469] sm:$0xff]
      %v885 = vld [vmem:[%s469 + $0x8] sm:$0xff]
      %v886 = vld [vmem:[%s469 + $0x10] sm:$0xff]
      %v887 = vld [vmem:[%s469 + $0x18] sm:$0x7]
      %v889 = vsel %vm245, %v879, 0
      %v892 = vsel %vm245, %v880, 0
      %v895 = vsel %vm245, %v881, 0
      %v898 = vsel %vm245, %v882, 0
      %v901 = vsel %vm245, %v883, 0
      %v904 = vsel %vm261, %v887, 0
      %906 = vmatprep.subr.mxu0 0.0
      %907 = vmatpush1.msra.mxu0 0.0
      %908 = vmatprep.subr.mxu0 0.0
      %909 = vmatpush1.msra.mxu0 0.0
      %910 = vmatprep.subr.mxu0 0.0
      %911 = vmatpush1.msra.mxu0 0.0
      %912 = vmatprep.subr.mxu0 0.0
      %913 = vmatpush1.msra.mxu0 0.0
      %914 = vmatprep.subr.mxu0 0.0
      %915 = vmatpush1.msra.mxu0 0.0
      %916 = vmatprep.subr.mxu0 0.0
      %917 = vmatpush1.msra.mxu0 0.0
      %918 = vmatprep.subr.mxu0 0.0
      %919 = vmatpush1.msra.mxu0 0.0
      %920 = vmatprep.subr.mxu0 0.0
      %921 = vmatpush1.msra.mxu0 0.0
      %922 = vmatprep.subr.mxu0 0.0
      %923 = vmatpush1.msra.mxu0 0.0
      %924 = vmatprep.subr.mxu0 0.0
      %925 = vmatpush1.msra.mxu0 0.0
      %926 = vmatprep.subr.mxu0 0.0
      %927 = vmatpush1.msra.mxu0 0.0
      %928 = vmatprep.subr.mxu0 0.0
      %929 = vmatpush1.msra.mxu0 0.0
      %930 = vmatprep.subr.mxu0 0.0
      %931 = vmatpush1.msra.mxu0 %v904
      %932 = vmatprep.subr.mxu0 0.0
      %933 = vmatpush1.msra.mxu0 %v886
      %934 = vmatprep.subr.mxu0 0.0
      %935 = vmatpush1.msra.mxu0 %v885
      %936 = vmatprep.subr.mxu0 0.0
      %937 = vmatpush1.msra.mxu0 %v884
      %938 = vmatprep.subr.mxu0 0.0
      %939 = vmatpush2.msra.mxu0 0.0
      %940 = vmatprep.subr.mxu0 0.0
      %941 = vmatpush2.msra.mxu0 0.0
      %942 = vmatprep.subr.mxu0 0.0
      %943 = vmatpush2.msra.mxu0 0.0
      %944 = vmatprep.subr.mxu0 0.0
      %945 = vmatpush2.msra.mxu0 0.0
      %946 = vmatprep.subr.mxu0 0.0
      %947 = vmatpush2.msra.mxu0 0.0
      %948 = vmatprep.subr.mxu0 0.0
      %949 = vmatpush2.msra.mxu0 0.0
      %950 = vmatprep.subr.mxu0 0.0
      %951 = vmatpush2.msra.mxu0 0.0
      %952 = vmatprep.subr.mxu0 0.0
      %953 = vmatpush2.msra.mxu0 0.0
      %954 = vmatprep.subr.mxu0 0.0
      %955 = vmatpush2.msra.mxu0 0.0
      %956 = vmatprep.subr.mxu0 0.0
      %957 = vmatpush2.msra.mxu0 0.0
      %958 = vmatprep.subr.mxu0 0.0
      %959 = vmatpush2.msra.mxu0 0.0
      %960 = vmatprep.subr.mxu0 0.0
      %961 = vmatpush2.msra.mxu0 0.0
      %962 = vmatprep.subr.mxu0 0.0
      %963 = vmatpush2.msra.mxu0 0.0
      %964 = vmatprep.subr.mxu0 0.0
      %965 = vmatpush2.msra.mxu0 0.0
      %966 = vmatprep.subr.mxu0 0.0
      %967 = vmatpush2.msra.mxu0 0.0
      %968 = vmatprep.subr.mxu0 0.0
      %969 = vmatpush2.msra.mxu0 0.0
      %970 = vmatprep.mubr.f32.mxu0 0.0
      %971 = vmatmul.mubr.f32.gmra.mxu0 %v889
      %v972 = vpop.f32.mrf.mxu0
      %v973 = vadd.f32 0.0, %v972
      %v974 = vpop.f32.mrf.mxu0
      %975 = vmatprep.mubr.f32.mxu0 0.0
      %976 = vmatmul.mubr.f32.gmra.mxu0 %v892
      %v977 = vpop.f32.mrf.mxu0
      %v978 = vadd.f32 0.0, %v977
      %v979 = vpop.f32.mrf.mxu0
      %980 = vmatprep.mubr.f32.mxu0 0.0
      %981 = vmatmul.mubr.f32.gmra.mxu0 %v895
      %v982 = vpop.f32.mrf.mxu0
      %v983 = vadd.f32 0.0, %v982
      %v984 = vpop.f32.mrf.mxu0
      %985 = vmatprep.mubr.f32.mxu0 0.0
      %986 = vmatmul.mubr.f32.gmra.mxu0 %v898
      %v987 = vpop.f32.mrf.mxu0
      %v988 = vadd.f32 0.0, %v987
      %v989 = vpop.f32.mrf.mxu0
      %990 = vmatprep.mubr.f32.mxu0 0.0
      %991 = vmatmul.mubr.f32.gmra.mxu0 %v901
      %v992 = vpop.f32.mrf.mxu0
      %v993 = vadd.f32 0.0, %v992
      %v994 = vpop.f32.mrf.mxu0
      %995 = vdwg.mxu0
      %v996 = vadd.f32 %v855, %v973
      %v997 = vadd.f32 %v860, %v978
      %v998 = vadd.f32 %v865, %v983
      %v999 = vadd.f32 %v870, %v988
      %v1000 = vadd.f32 %v875, %v993
      %v1001 = vld [vmem:[%s2] sm:$0x1]
      %v1003 = vlaneseq
      %v1004 = vshrl.u32 %v1003, 7
      %v1005 = vsub.s32 0, %v1004
      %v1006 = vrot.slane %v1001, %v1005
      %v1008 = vadd.f32 %v996, %v1006
      %v1009 = vadd.f32 %v997, %v1006
      %v1010 = vadd.f32 %v998, %v1006
      %v1011 = vadd.f32 %v999, %v1006
      %v1012 = vadd.f32 %v1000, %v1006
      %s1013 = scalar_lea.vmem %s224, 40
      %1014 = vst.msk [vmem:[%s1013] sm:$0xff] %vm599, %v1008
      %1015 = vst.msk [vmem:[%s1013 + $0x8] sm:$0xff] %vm599, %v1009
      %1016 = vst.msk [vmem:[%s1013 + $0x10] sm:$0xff] %vm599, %v1010
      %1017 = vst.msk [vmem:[%s1013 + $0x18] sm:$0xff] %vm599, %v1011
      %1018 = vst.msk [vmem:[%s1013 + $0x20] sm:$0xf] %vm604, %v1012
      %v1019 = vsel %vm599, %v1008, 0.0
      %v1020 = vsel %vm599, %v1009, 0.0
      %v1021 = vadd.f32 %v1019, %v1020
      %v1022 = vsel %vm599, %v1010, 0.0
      %v1023 = vadd.f32 %v1021, %v1022
      %v1024 = vsel %vm599, %v1011, 0.0
      %v1025 = vadd.f32 %v1023, %v1024
      %v1026 = vsel %vm604, %v1012, 0.0
      %v1027 = vadd.f32 %v1025, %v1026
      %v1028 = vrot.slane %v1027, 4
      %v1029 = vadd.f32 %v1027, %v1028
      %v1030 = vrot.slane %v1029, 2
      %v1031 = vadd.f32 %v1029, %v1030
      %v1032 = vrot.slane %v1031, 1
      %v1033 = vadd.f32 %v1031, %v1032
      %v1034 = vadd.f32 %v621, %v1033
      %v1035 = vmul.f32 %v1008, %v1008
      %v1036 = vmul.f32 %v1009, %v1009
      %v1037 = vmul.f32 %v1010, %v1010
      %v1038 = vmul.f32 %v1011, %v1011
      %v1039 = vmul.f32 %v1012, %v1012
      %v1040 = vsel %vm599, %v1035, 0.0
      %v1041 = vsel %vm599, %v1036, 0.0
      %v1042 = vadd.f32 %v1040, %v1041
      %v1043 = vsel %vm599, %v1037, 0.0
      %v1044 = vadd.f32 %v1042, %v1043
      %v1045 = vsel %vm599, %v1038, 0.0
      %v1046 = vadd.f32 %v1044, %v1045
      %v1047 = vsel %vm604, %v1039, 0.0
      %v1048 = vadd.f32 %v1046, %v1047
      %v1049 = vrot.slane %v1048, 4
      %v1050 = vadd.f32 %v1048, %v1049
      %v1051 = vrot.slane %v1050, 2
      %v1052 = vadd.f32 %v1050, %v1051
      %v1053 = vrot.slane %v1052, 1
      %v1054 = vadd.f32 %v1052, %v1053
      %v1055 = vadd.f32 %v642, %v1054
      %v1056 = vld [vmem:[%s878] sm:$0xff]
      %v1057 = vld [vmem:[%s878 + $0x8] sm:$0xff]
      %v1058 = vld [vmem:[%s878 + $0x10] sm:$0xff]
      %v1059 = vld [vmem:[%s878 + $0x18] sm:$0xff]
      %v1060 = vld [vmem:[%s878 + $0x20] sm:$0xf]
      %v1061 = vld [vmem:[%s1] sm:$0xff]
      %v1062 = vld [vmem:[%s1 + $0x8] sm:$0xff]
      %v1063 = vld [vmem:[%s1 + $0x10] sm:$0xff]
      %v1064 = vld [vmem:[%s1 + $0x18] sm:$0x7]
      %s1065 = scalar_lea.vmem %s219, 200
      %v1066 = vld [vmem:[%s1065] sm:$0xff]
      %v1067 = vld [vmem:[%s1065 + $0x8] sm:$0xff]
      %v1068 = vld [vmem:[%s1065 + $0x10] sm:$0xff]
      %v1069 = vld [vmem:[%s1065 + $0x18] sm:$0xff]
      %v1070 = vld [vmem:[%s1065 + $0x20] sm:$0xf]
      %v1071 = vld [vmem:[%s240] sm:$0xff]
      %v1072 = vld [vmem:[%s240 + $0x8] sm:$0xff]
      %v1073 = vld [vmem:[%s240 + $0x10] sm:$0xff]
      %v1074 = vld [vmem:[%s240 + $0x18] sm:$0x7]
      %v1076 = vsel %vm245, %v1066, 0
      %v1079 = vsel %vm245, %v1067, 0
      %v1082 = vsel %vm245, %v1068, 0
      %v1085 = vsel %vm245, %v1069, 0
      %v1088 = vsel %vm245, %v1070, 0
      %v1091 = vsel %vm261, %v1074, 0
      %1093 = vmatprep.subr.mxu0 0.0
      %1094 = vmatpush1.msra.mxu0 0.0
      %1095 = vmatprep.subr.mxu0 0.0
      %1096 = vmatpush1.msra.mxu0 0.0
      %1097 = vmatprep.subr.mxu0 0.0
      %1098 = vmatpush1.msra.mxu0 0.0
      %1099 = vmatprep.subr.mxu0 0.0
      %1100 = vmatpush1.msra.mxu0 0.0
      %1101 = vmatprep.subr.mxu0 0.0
      %1102 = vmatpush1.msra.mxu0 0.0
      %1103 = vmatprep.subr.mxu0 0.0
      %1104 = vmatpush1.msra.mxu0 0.0
      %1105 = vmatprep.subr.mxu0 0.0
      %1106 = vmatpush1.msra.mxu0 0.0
      %1107 = vmatprep.subr.mxu0 0.0
      %1108 = vmatpush1.msra.mxu0 0.0
      %1109 = vmatprep.subr.mxu0 0.0
      %1110 = vmatpush1.msra.mxu0 0.0
      %1111 = vmatprep.subr.mxu0 0.0
      %1112 = vmatpush1.msra.mxu0 0.0
      %1113 = vmatprep.subr.mxu0 0.0
      %1114 = vmatpush1.msra.mxu0 0.0
      %1115 = vmatprep.subr.mxu0 0.0
      %1116 = vmatpush1.msra.mxu0 0.0
      %1117 = vmatprep.subr.mxu0 0.0
      %1118 = vmatpush1.msra.mxu0 %v1091
      %1119 = vmatprep.subr.mxu0 0.0
      %1120 = vmatpush1.msra.mxu0 %v1073
      %1121 = vmatprep.subr.mxu0 0.0
      %1122 = vmatpush1.msra.mxu0 %v1072
      %1123 = vmatprep.subr.mxu0 0.0
      %1124 = vmatpush1.msra.mxu0 %v1071
      %1125 = vmatprep.subr.mxu0 0.0
      %1126 = vmatpush2.msra.mxu0 0.0
      %1127 = vmatprep.subr.mxu0 0.0
      %1128 = vmatpush2.msra.mxu0 0.0
      %1129 = vmatprep.subr.mxu0 0.0
      %1130 = vmatpush2.msra.mxu0 0.0
      %1131 = vmatprep.subr.mxu0 0.0
      %1132 = vmatpush2.msra.mxu0 0.0
      %1133 = vmatprep.subr.mxu0 0.0
      %1134 = vmatpush2.msra.mxu0 0.0
      %1135 = vmatprep.subr.mxu0 0.0
      %1136 = vmatpush2.msra.mxu0 0.0
      %1137 = vmatprep.subr.mxu0 0.0
      %1138 = vmatpush2.msra.mxu0 0.0
      %1139 = vmatprep.subr.mxu0 0.0
      %1140 = vmatpush2.msra.mxu0 0.0
      %1141 = vmatprep.subr.mxu0 0.0
      %1142 = vmatpush2.msra.mxu0 0.0
      %1143 = vmatprep.subr.mxu0 0.0
      %1144 = vmatpush2.msra.mxu0 0.0
      %1145 = vmatprep.subr.mxu0 0.0
      %1146 = vmatpush2.msra.mxu0 0.0
      %1147 = vmatprep.subr.mxu0 0.0
      %1148 = vmatpush2.msra.mxu0 0.0
      %1149 = vmatprep.subr.mxu0 0.0
      %1150 = vmatpush2.msra.mxu0 0.0
      %1151 = vmatprep.subr.mxu0 0.0
      %1152 = vmatpush2.msra.mxu0 0.0
      %1153 = vmatprep.subr.mxu0 0.0
      %1154 = vmatpush2.msra.mxu0 0.0
      %1155 = vmatprep.subr.mxu0 0.0
      %1156 = vmatpush2.msra.mxu0 0.0
      %1157 = vmatprep.mubr.f32.mxu0 0.0
      %1158 = vmatmul.mubr.f32.gmra.mxu0 %v1076
      %v1159 = vpop.f32.mrf.mxu0
      %v1160 = vadd.f32 0.0, %v1159
      %v1161 = vpop.f32.mrf.mxu0
      %1162 = vmatprep.mubr.f32.mxu0 0.0
      %1163 = vmatmul.mubr.f32.gmra.mxu0 %v1079
      %v1164 = vpop.f32.mrf.mxu0
      %v1165 = vadd.f32 0.0, %v1164
      %v1166 = vpop.f32.mrf.mxu0
      %1167 = vmatprep.mubr.f32.mxu0 0.0
      %1168 = vmatmul.mubr.f32.gmra.mxu0 %v1082
      %v1169 = vpop.f32.mrf.mxu0
      %v1170 = vadd.f32 0.0, %v1169
      %v1171 = vpop.f32.mrf.mxu0
      %1172 = vmatprep.mubr.f32.mxu0 0.0
      %1173 = vmatmul.mubr.f32.gmra.mxu0 %v1085
      %v1174 = vpop.f32.mrf.mxu0
      %v1175 = vadd.f32 0.0, %v1174
      %v1176 = vpop.f32.mrf.mxu0
      %1177 = vmatprep.mubr.f32.mxu0 0.0
      %1178 = vmatmul.mubr.f32.gmra.mxu0 %v1088
      %v1179 = vpop.f32.mrf.mxu0
      %v1180 = vadd.f32 0.0, %v1179
      %v1181 = vpop.f32.mrf.mxu0
      %1182 = vdwg.mxu0
      %v1184 = vsel %vm245, %v1056, 0
      %v1187 = vsel %vm245, %v1057, 0
      %v1190 = vsel %vm245, %v1058, 0
      %v1193 = vsel %vm245, %v1059, 0
      %v1196 = vsel %vm245, %v1060, 0
      %v1199 = vsel %vm261, %v1064, 0
      %1201 = vmatprep.subr.mxu0 0.0
      %1202 = vmatpush1.msra.mxu0 0.0
      %1203 = vmatprep.subr.mxu0 0.0
      %1204 = vmatpush1.msra.mxu0 0.0
      %1205 = vmatprep.subr.mxu0 0.0
      %1206 = vmatpush1.msra.mxu0 0.0
      %1207 = vmatprep.subr.mxu0 0.0
      %1208 = vmatpush1.msra.mxu0 0.0
      %1209 = vmatprep.subr.mxu0 0.0
      %1210 = vmatpush1.msra.mxu0 0.0
      %1211 = vmatprep.subr.mxu0 0.0
      %1212 = vmatpush1.msra.mxu0 0.0
      %1213 = vmatprep.subr.mxu0 0.0
      %1214 = vmatpush1.msra.mxu0 0.0
      %1215 = vmatprep.subr.mxu0 0.0
      %1216 = vmatpush1.msra.mxu0 0.0
      %1217 = vmatprep.subr.mxu0 0.0
      %1218 = vmatpush1.msra.mxu0 0.0
      %1219 = vmatprep.subr.mxu0 0.0
      %1220 = vmatpush1.msra.mxu0 0.0
      %1221 = vmatprep.subr.mxu0 0.0
      %1222 = vmatpush1.msra.mxu0 0.0
      %1223 = vmatprep.subr.mxu0 0.0
      %1224 = vmatpush1.msra.mxu0 0.0
      %1225 = vmatprep.subr.mxu0 0.0
      %1226 = vmatpush1.msra.mxu0 %v1199
      %1227 = vmatprep.subr.mxu0 0.0
      %1228 = vmatpush1.msra.mxu0 %v1063
      %1229 = vmatprep.subr.mxu0 0.0
      %1230 = vmatpush1.msra.mxu0 %v1062
      %1231 = vmatprep.subr.mxu0 0.0
      %1232 = vmatpush1.msra.mxu0 %v1061
      %1233 = vmatprep.subr.mxu0 0.0
      %1234 = vmatpush2.msra.mxu0 0.0
      %1235 = vmatprep.subr.mxu0 0.0
      %1236 = vmatpush2.msra.mxu0 0.0
      %1237 = vmatprep.subr.mxu0 0.0
      %1238 = vmatpush2.msra.mxu0 0.0
      %1239 = vmatprep.subr.mxu0 0.0
      %1240 = vmatpush2.msra.mxu0 0.0
      %1241 = vmatprep.subr.mxu0 0.0
      %1242 = vmatpush2.msra.mxu0 0.0
      %1243 = vmatprep.subr.mxu0 0.0
      %1244 = vmatpush2.msra.mxu0 0.0
      %1245 = vmatprep.subr.mxu0 0.0
      %1246 = vmatpush2.msra.mxu0 0.0
      %1247 = vmatprep.subr.mxu0 0.0
      %1248 = vmatpush2.msra.mxu0 0.0
      %1249 = vmatprep.subr.mxu0 0.0
      %1250 = vmatpush2.msra.mxu0 0.0
      %1251 = vmatprep.subr.mxu0 0.0
      %1252 = vmatpush2.msra.mxu0 0.0
      %1253 = vmatprep.subr.mxu0 0.0
      %1254 = vmatpush2.msra.mxu0 0.0
      %1255 = vmatprep.subr.mxu0 0.0
      %1256 = vmatpush2.msra.mxu0 0.0
      %1257 = vmatprep.subr.mxu0 0.0
      %1258 = vmatpush2.msra.mxu0 0.0
      %1259 = vmatprep.subr.mxu0 0.0
      %1260 = vmatpush2.msra.mxu0 0.0
      %1261 = vmatprep.subr.mxu0 0.0
      %1262 = vmatpush2.msra.mxu0 0.0
      %1263 = vmatprep.subr.mxu0 0.0
      %1264 = vmatpush2.msra.mxu0 0.0
      %1265 = vmatprep.mubr.f32.mxu0 0.0
      %1266 = vmatmul.mubr.f32.gmra.mxu0 %v1184
      %v1267 = vpop.f32.mrf.mxu0
      %v1268 = vadd.f32 %v1160, %v1267
      %v1269 = vpop.f32.mrf.mxu0
      %1270 = vmatprep.mubr.f32.mxu0 0.0
      %1271 = vmatmul.mubr.f32.gmra.mxu0 %v1187
      %v1272 = vpop.f32.mrf.mxu0
      %v1273 = vadd.f32 %v1165, %v1272
      %v1274 = vpop.f32.mrf.mxu0
      %1275 = vmatprep.mubr.f32.mxu0 0.0
      %1276 = vmatmul.mubr.f32.gmra.mxu0 %v1190
      %v1277 = vpop.f32.mrf.mxu0
      %v1278 = vadd.f32 %v1170, %v1277
      %v1279 = vpop.f32.mrf.mxu0
      %1280 = vmatprep.mubr.f32.mxu0 0.0
      %1281 = vmatmul.mubr.f32.gmra.mxu0 %v1193
      %v1282 = vpop.f32.mrf.mxu0
      %v1283 = vadd.f32 %v1175, %v1282
      %v1284 = vpop.f32.mrf.mxu0
      %1285 = vmatprep.mubr.f32.mxu0 0.0
      %1286 = vmatmul.mubr.f32.gmra.mxu0 %v1196
      %v1287 = vpop.f32.mrf.mxu0
      %v1288 = vadd.f32 %v1180, %v1287
      %v1289 = vpop.f32.mrf.mxu0
      %1290 = vdwg.mxu0
      %s1291 = scalar_lea.vmem %s219, 240
      %v1292 = vld [vmem:[%s1291] sm:$0xff]
      %v1293 = vld [vmem:[%s1291 + $0x8] sm:$0xff]
      %v1294 = vld [vmem:[%s1291 + $0x10] sm:$0xff]
      %v1295 = vld [vmem:[%s1291 + $0x18] sm:$0xff]
      %v1296 = vld [vmem:[%s1291 + $0x20] sm:$0xf]
      %v1297 = vld [vmem:[%s469] sm:$0xff]
      %v1298 = vld [vmem:[%s469 + $0x8] sm:$0xff]
      %v1299 = vld [vmem:[%s469 + $0x10] sm:$0xff]
      %v1300 = vld [vmem:[%s469 + $0x18] sm:$0x7]
      %v1302 = vsel %vm245, %v1292, 0
      %v1305 = vsel %vm245, %v1293, 0
      %v1308 = vsel %vm245, %v1294, 0
      %v1311 = vsel %vm245, %v1295, 0
      %v1314 = vsel %vm245, %v1296, 0
      %v1317 = vsel %vm261, %v1300, 0
      %1319 = vmatprep.subr.mxu0 0.0
      %1320 = vmatpush1.msra.mxu0 0.0
      %1321 = vmatprep.subr.mxu0 0.0
      %1322 = vmatpush1.msra.mxu0 0.0
      %1323 = vmatprep.subr.mxu0 0.0
      %1324 = vmatpush1.msra.mxu0 0.0
      %1325 = vmatprep.subr.mxu0 0.0
      %1326 = vmatpush1.msra.mxu0 0.0
      %1327 = vmatprep.subr.mxu0 0.0
      %1328 = vmatpush1.msra.mxu0 0.0
      %1329 = vmatprep.subr.mxu0 0.0
      %1330 = vmatpush1.msra.mxu0 0.0
      %1331 = vmatprep.subr.mxu0 0.0
      %1332 = vmatpush1.msra.mxu0 0.0
      %1333 = vmatprep.subr.mxu0 0.0
      %1334 = vmatpush1.msra.mxu0 0.0
      %1335 = vmatprep.subr.mxu0 0.0
      %1336 = vmatpush1.msra.mxu0 0.0
      %1337 = vmatprep.subr.mxu0 0.0
      %1338 = vmatpush1.msra.mxu0 0.0
      %1339 = vmatprep.subr.mxu0 0.0
      %1340 = vmatpush1.msra.mxu0 0.0
      %1341 = vmatprep.subr.mxu0 0.0
      %1342 = vmatpush1.msra.mxu0 0.0
      %1343 = vmatprep.subr.mxu0 0.0
      %1344 = vmatpush1.msra.mxu0 %v1317
      %1345 = vmatprep.subr.mxu0 0.0
      %1346 = vmatpush1.msra.mxu0 %v1299
      %1347 = vmatprep.subr.mxu0 0.0
      %1348 = vmatpush1.msra.mxu0 %v1298
      %1349 = vmatprep.subr.mxu0 0.0
      %1350 = vmatpush1.msra.mxu0 %v1297
      %1351 = vmatprep.subr.mxu0 0.0
      %1352 = vmatpush2.msra.mxu0 0.0
      %1353 = vmatprep.subr.mxu0 0.0
      %1354 = vmatpush2.msra.mxu0 0.0
      %1355 = vmatprep.subr.mxu0 0.0
      %1356 = vmatpush2.msra.mxu0 0.0
      %1357 = vmatprep.subr.mxu0 0.0
      %1358 = vmatpush2.msra.mxu0 0.0
      %1359 = vmatprep.subr.mxu0 0.0
      %1360 = vmatpush2.msra.mxu0 0.0
      %1361 = vmatprep.subr.mxu0 0.0
      %1362 = vmatpush2.msra.mxu0 0.0
      %1363 = vmatprep.subr.mxu0 0.0
      %1364 = vmatpush2.msra.mxu0 0.0
      %1365 = vmatprep.subr.mxu0 0.0
      %1366 = vmatpush2.msra.mxu0 0.0
      %1367 = vmatprep.subr.mxu0 0.0
      %1368 = vmatpush2.msra.mxu0 0.0
      %1369 = vmatprep.subr.mxu0 0.0
      %1370 = vmatpush2.msra.mxu0 0.0
      %1371 = vmatprep.subr.mxu0 0.0
      %1372 = vmatpush2.msra.mxu0 0.0
      %1373 = vmatprep.subr.mxu0 0.0
      %1374 = vmatpush2.msra.mxu0 0.0
      %1375 = vmatprep.subr.mxu0 0.0
      %1376 = vmatpush2.msra.mxu0 0.0
      %1377 = vmatprep.subr.mxu0 0.0
      %1378 = vmatpush2.msra.mxu0 0.0
      %1379 = vmatprep.subr.mxu0 0.0
      %1380 = vmatpush2.msra.mxu0 0.0
      %1381 = vmatprep.subr.mxu0 0.0
      %1382 = vmatpush2.msra.mxu0 0.0
      %1383 = vmatprep.mubr.f32.mxu0 0.0
      %1384 = vmatmul.mubr.f32.gmra.mxu0 %v1302
      %v1385 = vpop.f32.mrf.mxu0
      %v1386 = vadd.f32 0.0, %v1385
      %v1387 = vpop.f32.mrf.mxu0
      %1388 = vmatprep.mubr.f32.mxu0 0.0
      %1389 = vmatmul.mubr.f32.gmra.mxu0 %v1305
      %v1390 = vpop.f32.mrf.mxu0
      %v1391 = vadd.f32 0.0, %v1390
      %v1392 = vpop.f32.mrf.mxu0
      %1393 = vmatprep.mubr.f32.mxu0 0.0
      %1394 = vmatmul.mubr.f32.gmra.mxu0 %v1308
      %v1395 = vpop.f32.mrf.mxu0
      %v1396 = vadd.f32 0.0, %v1395
      %v1397 = vpop.f32.mrf.mxu0
      %1398 = vmatprep.mubr.f32.mxu0 0.0
      %1399 = vmatmul.mubr.f32.gmra.mxu0 %v1311
      %v1400 = vpop.f32.mrf.mxu0
      %v1401 = vadd.f32 0.0, %v1400
      %v1402 = vpop.f32.mrf.mxu0
      %1403 = vmatprep.mubr.f32.mxu0 0.0
      %1404 = vmatmul.mubr.f32.gmra.mxu0 %v1314
      %v1405 = vpop.f32.mrf.mxu0
      %v1406 = vadd.f32 0.0, %v1405
      %v1407 = vpop.f32.mrf.mxu0
      %1408 = vdwg.mxu0
      %v1409 = vadd.f32 %v1268, %v1386
      %v1410 = vadd.f32 %v1273, %v1391
      %v1411 = vadd.f32 %v1278, %v1396
      %v1412 = vadd.f32 %v1283, %v1401
      %v1413 = vadd.f32 %v1288, %v1406
      %v1414 = vld [vmem:[%s2] sm:$0x1]
      %v1416 = vlaneseq
      %v1417 = vshrl.u32 %v1416, 7
      %v1418 = vsub.s32 0, %v1417
      %v1419 = vrot.slane %v1414, %v1418
      %v1421 = vadd.f32 %v1409, %v1419
      %v1422 = vadd.f32 %v1410, %v1419
      %v1423 = vadd.f32 %v1411, %v1419
      %v1424 = vadd.f32 %v1412, %v1419
      %v1425 = vadd.f32 %v1413, %v1419
      %s1426 = scalar_lea.vmem %s224, 80
      %1427 = vst.msk [vmem:[%s1426] sm:$0xff] %vm599, %v1421
      %1428 = vst.msk [vmem:[%s1426 + $0x8] sm:$0xff] %vm599, %v1422
      %1429 = vst.msk [vmem:[%s1426 + $0x10] sm:$0xff] %vm599, %v1423
      %1430 = vst.msk [vmem:[%s1426 + $0x18] sm:$0xff] %vm599, %v1424
      %1431 = vst.msk [vmem:[%s1426 + $0x20] sm:$0xf] %vm604, %v1425
      %v1432 = vsel %vm599, %v1421, 0.0
      %v1433 = vsel %vm599, %v1422, 0.0
      %v1434 = vadd.f32 %v1432, %v1433
      %v1435 = vsel %vm599, %v1423, 0.0
      %v1436 = vadd.f32 %v1434, %v1435
      %v1437 = vsel %vm599, %v1424, 0.0
      %v1438 = vadd.f32 %v1436, %v1437
      %v1439 = vsel %vm604, %v1425, 0.0
      %v1440 = vadd.f32 %v1438, %v1439
      %v1441 = vrot.slane %v1440, 4
      %v1442 = vadd.f32 %v1440, %v1441
      %v1443 = vrot.slane %v1442, 2
      %v1444 = vadd.f32 %v1442, %v1443
      %v1445 = vrot.slane %v1444, 1
      %v1446 = vadd.f32 %v1444, %v1445
      %v1447 = vadd.f32 %v1034, %v1446
      %v1448 = vmul.f32 %v1421, %v1421
      %v1449 = vmul.f32 %v1422, %v1422
      %v1450 = vmul.f32 %v1423, %v1423
      %v1451 = vmul.f32 %v1424, %v1424
      %v1452 = vmul.f32 %v1425, %v1425
      %v1453 = vsel %vm599, %v1448, 0.0
      %v1454 = vsel %vm599, %v1449, 0.0
      %v1455 = vadd.f32 %v1453, %v1454
      %v1456 = vsel %vm599, %v1450, 0.0
      %v1457 = vadd.f32 %v1455, %v1456
      %v1458 = vsel %vm599, %v1451, 0.0
      %v1459 = vadd.f32 %v1457, %v1458
      %v1460 = vsel %vm604, %v1452, 0.0
      %v1461 = vadd.f32 %v1459, %v1460
      %v1462 = vrot.slane %v1461, 4
      %v1463 = vadd.f32 %v1461, %v1462
      %v1464 = vrot.slane %v1463, 2
      %v1465 = vadd.f32 %v1463, %v1464
      %v1466 = vrot.slane %v1465, 1
      %v1467 = vadd.f32 %v1465, %v1466
      %v1468 = vadd.f32 %v1055, %v1467
      %v1469 = vmul.f32 %v1447, 0.009259259
      %v1470 = vmul.f32 %v1468, 0.009259259
      %v1471 = vmul.f32 %v1469, %v1469
      %v1472 = vsub.f32 %v1470, %v1471
      %v1473 = vadd.f32 %v1472, 1e-05
      %v1474 = vrsqrt.pop %v1473
      %v1475 = vld [vmem:[%s3] sm:$0x1]
      %v1476 = vmul.f32 %v1474, %v1475
      %v1477 = vld [vmem:[%s4] sm:$0x1]
      %v1478 = vmul.f32 %v1469, %v1476
      %v1479 = vsub.f32 %v1477, %v1478
      %v1480 = vld [vmem:[%s224] sm:$0xff]
      %v1481 = vld [vmem:[%s224 + $0x8] sm:$0xff]
      %v1482 = vld [vmem:[%s224 + $0x10] sm:$0xff]
      %v1483 = vld [vmem:[%s224 + $0x18] sm:$0xff]
      %v1484 = vld [vmem:[%s224 + $0x20] sm:$0xf]
      %v1485 = vlaneseq
      %v1486 = vshrl.u32 %v1485, 7
      %v1487 = vsub.s32 0, %v1486
      %v1488 = vrot.slane %v1476, %v1487
      %v1489 = vmul.f32 %v1480, %v1488
      %v1490 = vmul.f32 %v1481, %v1488
      %v1491 = vmul.f32 %v1482, %v1488
      %v1492 = vmul.f32 %v1483, %v1488
      %v1493 = vmul.f32 %v1484, %v1488
      %v1495 = vlaneseq
      %v1496 = vshrl.u32 %v1495, 7
      %v1497 = vsub.s32 0, %v1496
      %v1498 = vrot.slane %v1479, %v1497
      %v1500 = vadd.f32 %v1489, %v1498
      %v1501 = vadd.f32 %v1490, %v1498
      %v1502 = vadd.f32 %v1491, %v1498
      %v1503 = vadd.f32 %v1492, %v1498
      %v1504 = vadd.f32 %v1493, %v1498
      %v1505 = vmax.f32 %v1500, 0.0
      %v1506 = vmax.f32 %v1501, 0.0
      %v1507 = vmax.f32 %v1502, 0.0
      %v1508 = vmax.f32 %v1503, 0.0
      %v1509 = vmax.f32 %v1504, 0.0
      %1510 = vst.msk [vmem:[%s224] sm:$0xff] %vm599, %v1505
      %1511 = vst.msk [vmem:[%s224 + $0x8] sm:$0xff] %vm599, %v1506
      %1512 = vst.msk [vmem:[%s224 + $0x10] sm:$0xff] %vm599, %v1507
      %1513 = vst.msk [vmem:[%s224 + $0x18] sm:$0xff] %vm599, %v1508
      %1514 = vst.msk [vmem:[%s224 + $0x20] sm:$0xf] %vm604, %v1509
      %v1515 = vld [vmem:[%s1013] sm:$0xff]
      %v1516 = vld [vmem:[%s1013 + $0x8] sm:$0xff]
      %v1517 = vld [vmem:[%s1013 + $0x10] sm:$0xff]
      %v1518 = vld [vmem:[%s1013 + $0x18] sm:$0xff]
      %v1519 = vld [vmem:[%s1013 + $0x20] sm:$0xf]
      %v1520 = vmul.f32 %v1515, %v1488
      %v1521 = vmul.f32 %v1516, %v1488
      %v1522 = vmul.f32 %v1517, %v1488
      %v1523 = vmul.f32 %v1518, %v1488
      %v1524 = vmul.f32 %v1519, %v1488
      %v1525 = vadd.f32 %v1520, %v1498
      %v1526 = vadd.f32 %v1521, %v1498
      %v1527 = vadd.f32 %v1522, %v1498
      %v1528 = vadd.f32 %v1523, %v1498
      %v1529 = vadd.f32 %v1524, %v1498
      %v1530 = vmax.f32 %v1525, 0.0
      %v1531 = vmax.f32 %v1526, 0.0
      %v1532 = vmax.f32 %v1527, 0.0
      %v1533 = vmax.f32 %v1528, 0.0
      %v1534 = vmax.f32 %v1529, 0.0
      %1535 = vst.msk [vmem:[%s1013] sm:$0xff] %vm599, %v1530
      %1536 = vst.msk [vmem:[%s1013 + $0x8] sm:$0xff] %vm599, %v1531
      %1537 = vst.msk [vmem:[%s1013 + $0x10] sm:$0xff] %vm599, %v1532
      %1538 = vst.msk [vmem:[%s1013 + $0x18] sm:$0xff] %vm599, %v1533
      %1539 = vst.msk [vmem:[%s1013 + $0x20] sm:$0xf] %vm604, %v1534
      %v1540 = vld [vmem:[%s1426] sm:$0xff]
      %v1541 = vld [vmem:[%s1426 + $0x8] sm:$0xff]
      %v1542 = vld [vmem:[%s1426 + $0x10] sm:$0xff]
      %v1543 = vld [vmem:[%s1426 + $0x18] sm:$0xff]
      %v1544 = vld [vmem:[%s1426 + $0x20] sm:$0xf]
      %v1545 = vmul.f32 %v1540, %v1488
      %v1546 = vmul.f32 %v1541, %v1488
      %v1547 = vmul.f32 %v1542, %v1488
      %v1548 = vmul.f32 %v1543, %v1488
      %v1549 = vmul.f32 %v1544, %v1488
      %v1550 = vadd.f32 %v1545, %v1498
      %v1551 = vadd.f32 %v1546, %v1498
      %v1552 = vadd.f32 %v1547, %v1498
      %v1553 = vadd.f32 %v1548, %v1498
      %v1554 = vadd.f32 %v1549, %v1498
      %v1555 = vmax.f32 %v1550, 0.0
      %v1556 = vmax.f32 %v1551, 0.0
      %v1557 = vmax.f32 %v1552, 0.0
      %v1558 = vmax.f32 %v1553, 0.0
      %v1559 = vmax.f32 %v1554, 0.0
      %1560 = vst.msk [vmem:[%s1426] sm:$0xff] %vm599, %v1555
      %1561 = vst.msk [vmem:[%s1426 + $0x8] sm:$0xff] %vm599, %v1556
      %1562 = vst.msk [vmem:[%s1426 + $0x10] sm:$0xff] %vm599, %v1557
      %1563 = vst.msk [vmem:[%s1426 + $0x18] sm:$0xff] %vm599, %v1558
      %1564 = vst.msk [vmem:[%s1426 + $0x20] sm:$0xf] %vm604, %v1559
      %p1565 = scmp.lt.s32.totalorder %s16, 1
      %s1566 = scalar_select %p1565, %s16, 1
      %s1567 = smul.addr %s1566, 15
      %s1568 = smul.addr %s1567, 8
      %s1569 = scalar_lea.vmem %s5, %s1568
      // Predicated region
      $region41: #{patch_conv3d_forward.3} parent=39 // pred_check
        %p1570 = pneg %p144
      $region42: #{patch_conv3d_forward.3} parent=39 // pred_check_branch
        %1572 = sbr.rel (%p1570) target = $region44
      $region43: #{patch_conv3d_forward.3} parent=39 // pred_region
        _
      $region44: #{patch_conv3d_forward.3} parent=39 // pred_fallthru
        _
    $region40: #{patch_conv3d_forward.3} parent=5 // pred_fallthru
      _
    %p1573 = scmp.le.s32.totalorder 2, %s11
    // Predicated region
    $region45: #{patch_conv3d_forward.3} parent=5 // pred_check
      %p1574 = pneg %p1573
    $region46: #{patch_conv3d_forward.3} parent=5 // pred_check_branch
      %1576 = sbr.rel (%p1574) target = $region48
    $region47: #{patch_conv3d_forward.3} parent=5 // pred_region
      %s1577 = ssub.s32 %s11, 2
      // Predicated region
      $region49: #{patch_conv3d_forward.3} parent=47 // pred_check
        %p1578 = pneg %p150
      $region50: #{patch_conv3d_forward.3} parent=47 // pred_check_branch
        %1580 = sbr.rel (%p1578) target = $region52
      $region51: #{patch_conv3d_forward.3} parent=47 // pred_region
        %p1581 = scmp.lt.s32.totalorder %s17, 1
        %s1582 = scalar_select %p1581, %s17, 1
        %s1583 = smul.addr %s1582, 15
        %s1584 = smul.addr %s1583, 8
        %s1585 = scalar_lea.vmem %s5, %s1584
      $region52: #{patch_conv3d_forward.3} parent=47 // pred_fallthru
        _
    $region48: #{patch_conv3d_forward.3} parent=5 // pred_fallthru
      _
  $region6: #{patch_conv3d_forward.3} parent=0 // loop_footer
    %s15 = sadd.s32 1, %s11
  $region7: #{patch_conv3d_forward.3} parent=0 // loop_footer_branch
    %10 = sbr.rel target = $region3
  $region8: #{patch_conv3d_forward.3} parent=0 // loop_exit
    _

// kernel: patch_conv3d_forward.4
$region0: #{patch_conv3d_forward.4}
  #allocation0 [shape = 'u32[]', space=smem, size = 0x4, offset = 0x4, fixed_abs, tag = 'smem constant byte address 0x4 - core index']
  #allocation1 [shape = 'u32[144,128]{1,0:T(1,128)}', space=vmem, size = 0x12000, scoped, tag = 'internal scratch']
  %s0 = inlined_call_operand.vmem [shape: f32[2,5,9,72], index: 0, kind: input, shape index: {}]
  %s1 = inlined_call_operand.vmem [shape: f32[3,72,16], index: 1, kind: input, shape index: {}]
  %s2 = inlined_call_operand.vmem [shape: f32[1,16], index: 2, kind: input, shape index: {}]
  %s3 = inlined_call_operand.vmem [shape: f32[1,16], index: 3, kind: input, shape index: {}]
  %s4 = inlined_call_operand.vmem [shape: f32[1,16], index: 4, kind: input, shape index: {}]
  %s5 = inlined_call_operand.vmem [shape: f32[2,2,9,16], index: 5, kind: output, shape index: {}]
  %s6 = sld [smem:[#allocation0]]
  $region53: #{patch_conv3d_forward.4} parent=0
    _
  %s8 = ssub.s32 1, %s6
  %s9 = scalar_select 0, %s8, %s6
  loop: start=0, step=1, limit=4
  $region2: #{patch_conv3d_forward.4} parent=0 // loop_pre_header
    _
  $region3: #{patch_conv3d_forward.4} parent=0 // loop_header
    %s11 = sphi 0, %s15
    %p12 = scmp.ge.s32.totalorder %s11, 4
    %s21 = sphi 0, %s23
    %s24 = sphi 0, %s21
    %s25 = sphi 0, %s24
    %s41 = sphi 0, %s25
    %s45 = sphi 0, %s45
    %s47 = sphi 0, %s45
    %s48 = sphi 0, %s47
    %s62 = sphi 0, %s48
    %s66 = sphi 0, %s66
    %s68 = sphi 0, %s66
    %s69 = sphi 0, %s68
    %s83 = sphi 0, %s69
    %s87 = sphi 0, %s87
    %s89 = sphi 0, %s87
    %s90 = sphi 0, %s89
    %s104 = sphi 0, %s90
    %s108 = sphi 0, %s108
    %s110 = sphi 0, %s108
    %s111 = sphi 0, %s110
    %s125 = sphi 0, %s111
    %s131 = sphi 0, %s133
    %s134 = sphi 0, %s131
    %s135 = sphi 0, %s134
    %s151 = sphi 0, %s135
  $region4: #{patch_conv3d_forward.4} parent=0 // loop_header_branch
    %14 = sbr.rel (%p12) target = $region8
  $region5: #{patch_conv3d_forward.4} parent=0 // loop_body
    %s16 = ssub.s32 %s11, 1
    %s17 = ssub.s32 %s11, 2
    %s18 = sadd.s32 %s11, 1
    %s19 = ssub.s32 %s11, %s18
    %p20 = scmp.eq.s32.totalorder %s19, 0
    %s22 = sadd.s32 %s21, 1
    %s23 = scalar_select %p20, %s21, %s22
    %p26 = pneg %p20
    %p27 = scmp.eq.s32.totalorder %s11, 1
    %p28 = por %p26, %p27
    %p29 = scmp.ne.s32.totalorder %s21, %s24
    %p30 = scmp.eq.s32.totalorder %s11, 0
    %p31 = por %p29, %p30
    %p32 = scmp.ne.s32.totalorder %s21, %s24
    %p33 = scmp.eq.s32.totalorder %s16, 1
    %p34 = por %p32, %p33
    %p35 = scmp.ne.s32.totalorder %s24, %s25
    %p36 = scmp.eq.s32.totalorder %s16, 0
    %p37 = por %p35, %p36
    %p38 = scmp.ne.s32.totalorder %s24, %s25
    %p39 = scmp.eq.s32.totalorder %s17, 1
    %p40 = por %p38, %p39
    %p42 = scmp.ne.s32.totalorder %s25, %s41
    %p43 = scmp.eq.s32.totalorder %s17, 0
    %p44 = por %p42, %p43
    %s46 = sadd.s32 %s45, 1
    %p49 = scmp.eq.s32.totalorder %s11, 1
    %p50 = scmp.ne.s32.totalorder %s45, %s47
    %p51 = scmp.eq.s32.totalorder %s11, 0
    %p52 = por %p50, %p51
    %p53 = scmp.ne.s32.totalorder %s45, %s47
    %p54 = scmp.eq.s32.totalorder %s16, 1
    %p55 = por %p53, %p54
    %p56 = scmp.ne.s32.totalorder %s47, %s48
    %p57 = scmp.eq.s32.totalorder %s16, 0
    %p58 = por %p56, %p57
    %p59 = scmp.ne.s32.totalorder %s47, %s48
    %p60 = scmp.eq.s32.totalorder %s17, 1
    %p61 = por %p59, %p60
    %p63 = scmp.ne.s32.totalorder %s48, %s62
    %p64 = scmp.eq.s32.totalorder %s17, 0
    %p65 = por %p63, %p64
    %s67 = sadd.s32 %s66, 1
    %p70 = scmp.eq.s32.totalorder %s11, 1
    %p71 = scmp.ne.s32.totalorder %s66, %s68
    %p72 = scmp.eq.s32.totalorder %s11, 0
    %p73 = por %p71, %p72
    %p74 = scmp.ne.s32.totalorder %s66, %s68
    %p75 = scmp.eq.s32.totalorder %s16, 1
    %p76 = por %p74, %p75
    %p77 = scmp.ne.s32.totalorder %s68, %s69
    %p78 = scmp.eq.s32.totalorder %s16, 0
    %p79 = por %p77, %p78
    %p80 = scmp.ne.s32.totalorder %s68, %s69
    %p81 = scmp.eq.s32.totalorder %s17, 1
    %p82 = por %p80, %p81
    %p84 = scmp.ne.s32.totalorder %s69, %s83
    %p85 = scmp.eq.s32.totalorder %s17, 0
    %p86 = por %p84, %p85
    %s88 = sadd.s32 %s87, 1
    %p91 = scmp.eq.s32.totalorder %s11, 1
    %p92 = scmp.ne.s32.totalorder %s87, %s89
    %p93 = scmp.eq.s32.totalorder %s11, 0
    %p94 = por %p92, %p93
    %p95 = scmp.ne.s32.totalorder %s87, %s89
    %p96 = scmp.eq.s32.totalorder %s16, 1
    %p97 = por %p95, %p96
    %p98 = scmp.ne.s32.totalorder %s89, %s90
    %p99 = scmp.eq.s32.totalorder %s16, 0
    %p100 = por %p98, %p99
    %p101 = scmp.ne.s32.totalorder %s89, %s90
    %p102 = scmp.eq.s32.totalorder %s17, 1
    %p103 = por %p101, %p102
    %p105 = scmp.ne.s32.totalorder %s90, %s104
    %p106 = scmp.eq.s32.totalorder %s17, 0
    %p107 = por %p105, %p106
    %s109 = sadd.s32 %s108, 1
    %p112 = scmp.eq.s32.totalorder %s11, 1
    %p113 = scmp.ne.s32.totalorder %s108, %s110
    %p114 = scmp.eq.s32.totalorder %s11, 0
    %p115 = por %p113, %p114
    %p116 = scmp.ne.s32.totalorder %s108, %s110
    %p117 = scmp.eq.s32.totalorder %s16, 1
    %p118 = por %p116, %p117
    %p119 = scmp.ne.s32.totalorder %s110, %s111
    %p120 = scmp.eq.s32.totalorder %s16, 0
    %p121 = por %p119, %p120
    %p122 = scmp.ne.s32.totalorder %s110, %s111
    %p123 = scmp.eq.s32.totalorder %s17, 1
    %p124 = por %p122, %p123
    %p126 = scmp.ne.s32.totalorder %s111, %s125
    %p127 = scmp.eq.s32.totalorder %s17, 0
    %p128 = por %p126, %p127
    %s129 = ssub.s32 %s11, %s18
    %p130 = scmp.eq.s32.totalorder %s129, 0
    %s132 = sadd.s32 %s131, 1
    %s133 = scalar_select %p130, %s131, %s132
    %p136 = pneg %p130
    %p137 = scmp.eq.s32.totalorder %s11, 1
    %p138 = por %p136, %p137
    %p139 = scmp.ne.s32.totalorder %s131, %s134
    %p140 = scmp.eq.s32.totalorder %s11, 0
    %p141 = por %p139, %p140
    %p142 = scmp.ne.s32.totalorder %s131, %s134
    %p143 = scmp.eq.s32.totalorder %s16, 1
    %p144 = por %p142, %p143
    %p145 = scmp.ne.s32.totalorder %s134, %s135
    %p146 = scmp.eq.s32.totalorder %s16, 0
    %p147 = por %p145, %p146
    %p148 = scmp.ne.s32.totalorder %s134, %s135
    %p149 = scmp.eq.s32.totalorder %s17, 1
    %p150 = por %p148, %p149
    %p152 = scmp.ne.s32.totalorder %s135, %s151
    %p153 = scmp.eq.s32.totalorder %s17, 0
    %p154 = por %p152, %p153
    %p155 = scmp.le.s32.totalorder 1, %s11
    %p156 = scmp.lt.s32.totalorder %s11, 3
    %p157 = pnand %p155, %p156
    %p158 = pneg %p157
    // Predicated region
    $region9: #{patch_conv3d_forward.4} parent=5 // pred_check
      _
    $region10: #{patch_conv3d_forward.4} parent=5 // pred_check_branch
      %160 = sbr.rel (%p157) target = $region12
    $region11: #{patch_conv3d_forward.4} parent=5 // pred_region
      %s161 = ssub.s32 %s11, 1
      // Predicated region
      $region13: #{patch_conv3d_forward.4} parent=11 // pred_check
        %p162 = pneg %p58
      $region14: #{patch_conv3d_forward.4} parent=11 // pred_check_branch
        %164 = sbr.rel (%p162) target = $region16
      $region15: #{patch_conv3d_forward.4} parent=11 // pred_region
        _
      $region16: #{patch_conv3d_forward.4} parent=11 // pred_fallthru
        _
      // Predicated region
      $region17: #{patch_conv3d_forward.4} parent=11 // pred_check
        %p165 = pneg %p79
      $region18: #{patch_conv3d_forward.4} parent=11 // pred_check_branch
        %167 = sbr.rel (%p165) target = $region20
      $region19: #{patch_conv3d_forward.4} parent=11 // pred_region
        _
      $region20: #{patch_conv3d_forward.4} parent=11 // pred_fallthru
        _
      // Predicated region
      $region21: #{patch_conv3d_forward.4} parent=11 // pred_check
        %p168 = pneg %p100
      $region22: #{patch_conv3d_forward.4} parent=11 // pred_check_branch
        %170 = sbr.rel (%p168) target = $region24
      $region23: #{patch_conv3d_forward.4} parent=11 // pred_region
        _
      $region24: #{patch_conv3d_forward.4} parent=11 // pred_fallthru
        _
      // Predicated region
      $region25: #{patch_conv3d_forward.4} parent=11 // pred_check
        %p171 = pneg %p121
      $region26: #{patch_conv3d_forward.4} parent=11 // pred_check_branch
        %173 = sbr.rel (%p171) target = $region28
      $region27: #{patch_conv3d_forward.4} parent=11 // pred_region
        _
      $region28: #{patch_conv3d_forward.4} parent=11 // pred_fallthru
        _
    $region12: #{patch_conv3d_forward.4} parent=5 // pred_fallthru
      _
    %p174 = scmp.lt.s32.totalorder %s11, 2
    // Predicated region
    $region29: #{patch_conv3d_forward.4} parent=5 // pred_check
      %p175 = pneg %p174
    $region30: #{patch_conv3d_forward.4} parent=5 // pred_check_branch
      %177 = sbr.rel (%p175) target = $region32
    $region31: #{patch_conv3d_forward.4} parent=5 // pred_region
      // Predicated region
      $region33: #{patch_conv3d_forward.4} parent=31 // pred_check
        %p178 = pneg %p31
      $region34: #{patch_conv3d_forward.4} parent=31 // pred_check_branch
        %180 = sbr.rel (%p178) target = $region36
      $region35: #{patch_conv3d_forward.4} parent=31 // pred_region
        %p181 = scmp.lt.s32.totalorder %s11, 1
        %s182 = scalar_select %p181, %s11, 1
        %s183 = smul.addr %s182, 10
        %s184 = smul.addr %s183, 8
        %s185 = scalar_lea.vmem %s0, %s184
      $region36: #{patch_conv3d_forward.4} parent=31 // pred_fallthru
        _
    $region32: #{patch_conv3d_forward.4} parent=5 // pred_fallthru
      _
    %p186 = scmp.le.s32.totalorder 1, %s11
    %p187 = scmp.lt.s32.totalorder %s11, 3
    %p188 = pnand %p186, %p187
    %p189 = pneg %p188
    // Predicated region
    $region37: #{patch_conv3d_forward.4} parent=5 // pred_check
      _
    $region38: #{patch_conv3d_forward.4} parent=5 // pred_check_branch
      %191 = sbr.rel (%p188) target = $region40
    $region39: #{patch_conv3d_forward.4} parent=5 // pred_region
      %s192 = ssub.s32 %s11, 1
      %p193 = scmp.lt.s32.totalorder %s16, 1
      %s194 = scalar_select %p193, %s16, 1
      %s195 = smul.addr %s194, 10
      %s196 = smul.addr %s195, 8
      %s197 = scalar_lea.vmem %s0, %s196
      %p198 = pneg %p37
      %p199 = pneg %p34
      %p200 = pneg %p58
      %p201 = pneg %p55
      %p202 = pneg %p79
      %p203 = pneg %p76
      %p204 = pneg %p100
      %p205 = pneg %p97
      %p206 = pneg %p121
      %p207 = pneg %p118
      %p208 = pneg %p147
      %p209 = pneg %p144
      %p210 = scmp.lt.s32.totalorder %s16, 1
      %s211 = scalar_select %p210, %s16, 1
      %s212 = smul.addr %s211, 4
      %s213 = smul.addr %s212, 8
      %s214 = scalar_lea.vmem %s5, %s213
      %p215 = scmp.lt.s32.totalorder %s16, 1
      %s216 = scalar_select %p215, %s16, 1
      %s217 = smul.addr %s216, 10
      %s218 = smul.addr %s217, 8
      %s219 = scalar_lea.vmem %s0, %s218
      %p220 = scmp.lt.s32.totalorder %s16, 1
      %s221 = scalar_select %p220, %s16, 1
      %s222 = smul.addr %s221, 4
      %s223 = smul.addr %s222, 8
      %s224 = scalar_lea.vmem %s5, %s223
      %v225 = vld [vmem:[%s219] sm:$0xff]
      %v226 = vld [vmem:[%s219 + $0x8] sm:$0x1]
      %v227 = vld [vmem:[%s1] sm:$0xff]
      %v228 = vld [vmem:[%s1 + $0x8] sm:$0xff]
      %v229 = vld [vmem:[%s1 + $0x10] sm:$0xff]
      %v230 = vld [vmem:[%s1 + $0x18] sm:$0xff]
      %v231 = vld [vmem:[%s1 + $0x20] sm:$0xff]
      %v232 = vld [vmem:[%s1 + $0x28] sm:$0xff]
      %v233 = vld [vmem:[%s1 + $0x30] sm:$0xff]
      %v234 = vld [vmem:[%s1 + $0x38] sm:$0xff]
      %v235 = vld [vmem:[%s1 + $0x40] sm:$0xff]
      %s236 = scalar_lea.vmem %s219, 16
      %v237 = vld [vmem:[%s236] sm:$0xff]
      %v238 = vld [vmem:[%s236 + $0x8] sm:$0x1]
      %s239 = scalar_lea.vmem %s1, 72
      %v240 = vld [vmem:[%s239] sm:$0xff]
      %v241 = vld [vmem:[%s239 + $0x8] sm:$0xff]
      %v242 = vld [vmem:[%s239 + $0x10] sm:$0xff]
      %v243 = vld [vmem:[%s239 + $0x18] sm:$0xff]
      %v244 = vld [vmem:[%s239 + $0x20] sm:$0xff]
      %v245 = vld [vmem:[%s239 + $0x28] sm:$0xff]
      %v246 = vld [vmem:[%s239 + $0x30] sm:$0xff]
      %v247 = vld [vmem:[%s239 + $0x38] sm:$0xff]
      %v248 = vld [vmem:[%s239 + $0x40] sm:$0xff]
      %vm249 = vcmask 588800
      %v251 = vsel %vm249, %v237, 0
      %v254 = vsel %vm249, %v238, 0
      %256 = vmatprep.subr.mxu0 0.0
      %257 = vmatpush1.msra.mxu0 0.0
      %258 = vmatprep.subr.mxu0 0.0
      %259 = vmatpush1.msra.mxu0 0.0
      %260 = vmatprep.subr.mxu0 0.0
      %261 = vmatpush1.msra.mxu0 0.0
      %262 = vmatprep.subr.mxu0 0.0
      %263 = vmatpush1.msra.mxu0 0.0
      %264 = vmatprep.subr.mxu0 0.0
      %265 = vmatpush1.msra.mxu0 0.0
      %266 = vmatprep.subr.mxu0 0.0
      %267 = vmatpush1.msra.mxu0 0.0
      %268 = vmatprep.subr.mxu0 0.0
      %269 = vmatpush1.msra.mxu0 0.0
      %270 = vmatprep.subr.mxu0 0.0
      %271 = vmatpush1.msra.mxu0 %v248
      %272 = vmatprep.subr.mxu0 0.0
      %273 = vmatpush1.msra.mxu0 %v247
      %274 = vmatprep.subr.mxu0 0.0
      %275 = vmatpush1.msra.mxu0 %v246
      %276 = vmatprep.subr.mxu0 0.0
      %277 = vmatpush1.msra.mxu0 %v245
      %278 = vmatprep.subr.mxu0 0.0
      %279 = vmatpush1.msra.mxu0 %v244
      %280 = vmatprep.subr.mxu0 0.0
      %281 = vmatpush1.msra.mxu0 %v243
      %282 = vmatprep.subr.mxu0 0.0
      %283 = vmatpush1.msra.mxu0 %v242
      %284 = vmatprep.subr.mxu0 0.0
      %285 = vmatpush1.msra.mxu0 %v241
      %286 = vmatprep.subr.mxu0 0.0
      %287 = vmatpush1.msra.mxu0 %v240
      %288 = vmatprep.subr.mxu0 0.0
      %289 = vmatpush2.msra.mxu0 0.0
      %290 = vmatprep.subr.mxu0 0.0
      %291 = vmatpush2.msra.mxu0 0.0
      %292 = vmatprep.subr.mxu0 0.0
      %293 = vmatpush2.msra.mxu0 0.0
      %294 = vmatprep.subr.mxu0 0.0
      %295 = vmatpush2.msra.mxu0 0.0
      %296 = vmatprep.subr.mxu0 0.0
      %297 = vmatpush2.msra.mxu0 0.0
      %298 = vmatprep.subr.mxu0 0.0
      %299 = vmatpush2.msra.mxu0 0.0
      %300 = vmatprep.subr.mxu0 0.0
      %301 = vmatpush2.msra.mxu0 0.0
      %302 = vmatprep.subr.mxu0 0.0
      %303 = vmatpush2.msra.mxu0 0.0
      %304 = vmatprep.subr.mxu0 0.0
      %305 = vmatpush2.msra.mxu0 0.0
      %306 = vmatprep.subr.mxu0 0.0
      %307 = vmatpush2.msra.mxu0 0.0
      %308 = vmatprep.subr.mxu0 0.0
      %309 = vmatpush2.msra.mxu0 0.0
      %310 = vmatprep.subr.mxu0 0.0
      %311 = vmatpush2.msra.mxu0 0.0
      %312 = vmatprep.subr.mxu0 0.0
      %313 = vmatpush2.msra.mxu0 0.0
      %314 = vmatprep.subr.mxu0 0.0
      %315 = vmatpush2.msra.mxu0 0.0
      %316 = vmatprep.subr.mxu0 0.0
      %317 = vmatpush2.msra.mxu0 0.0
      %318 = vmatprep.subr.mxu0 0.0
      %319 = vmatpush2.msra.mxu0 0.0
      %320 = vmatprep.mubr.f32.mxu0 0.0
      %321 = vmatmul.mubr.f32.gmra.mxu0 %v251
      %v322 = vpop.f32.mrf.mxu0
      %v323 = vadd.f32 0.0, %v322
      %v324 = vpop.f32.mrf.mxu0
      %325 = vmatprep.mubr.f32.mxu0 0.0
      %326 = vmatmul.mubr.f32.gmra.mxu0 %v254
      %v327 = vpop.f32.mrf.mxu0
      %v328 = vadd.f32 0.0, %v327
      %v329 = vpop.f32.mrf.mxu0
      %330 = vdwg.mxu0
      %v332 = vsel %vm249, %v225, 0
      %v335 = vsel %vm249, %v226, 0
      %337 = vmatprep.subr.mxu0 0.0
      %338 = vmatpush1.msra.mxu0 0.0
      %339 = vmatprep.subr.mxu0 0.0
      %340 = vmatpush1.msra.mxu0 0.0
      %341 = vmatprep.subr.mxu0 0.0
      %342 = vmatpush1.msra.mxu0 0.0
      %343 = vmatprep.subr.mxu0 0.0
      %344 = vmatpush1.msra.mxu0 0.0
      %345 = vmatprep.subr.mxu0 0.0
      %346 = vmatpush1.msra.mxu0 0.0
      %347 = vmatprep.subr.mxu0 0.0
      %348 = vmatpush1.msra.mxu0 0.0
      %349 = vmatprep.subr.mxu0 0.0
      %350 = vmatpush1.msra.mxu0 0.0
      %351 = vmatprep.subr.mxu0 0.0
      %352 = vmatpush1.msra.mxu0 %v235
      %353 = vmatprep.subr.mxu0 0.0
      %354 = vmatpush1.msra.mxu0 %v234
      %355 = vmatprep.subr.mxu0 0.0
      %356 = vmatpush1.msra.mxu0 %v233
      %357 = vmatprep.subr.mxu0 0.0
      %358 = vmatpush1.msra.mxu0 %v232
      %359 = vmatprep.subr.mxu0 0.0
      %360 = vmatpush1.msra.mxu0 %v231
      %361 = vmatprep.subr.mxu0 0.0
      %362 = vmatpush1.msra.mxu0 %v230
      %363 = vmatprep.subr.mxu0 0.0
      %364 = vmatpush1.msra.mxu0 %v229
      %365 = vmatprep.subr.mxu0 0.0
      %366 = vmatpush1.msra.mxu0 %v228
      %367 = vmatprep.subr.mxu0 0.0
      %368 = vmatpush1.msra.mxu0 %v227
      %369 = vmatprep.subr.mxu0 0.0
      %370 = vmatpush2.msra.mxu0 0.0
      %371 = vmatprep.subr.mxu0 0.0
      %372 = vmatpush2.msra.mxu0 0.0
      %373 = vmatprep.subr.mxu0 0.0
      %374 = vmatpush2.msra.mxu0 0.0
      %375 = vmatprep.subr.mxu0 0.0
      %376 = vmatpush2.msra.mxu0 0.0
      %377 = vmatprep.subr.mxu0 0.0
      %378 = vmatpush2.msra.mxu0 0.0
      %379 = vmatprep.subr.mxu0 0.0
      %380 = vmatpush2.msra.mxu0 0.0
      %381 = vmatprep.subr.mxu0 0.0
      %382 = vmatpush2.msra.mxu0 0.0
      %383 = vmatprep.subr.mxu0 0.0
      %384 = vmatpush2.msra.mxu0 0.0
      %385 = vmatprep.subr.mxu0 0.0
      %386 = vmatpush2.msra.mxu0 0.0
      %387 = vmatprep.subr.mxu0 0.0
      %388 = vmatpush2.msra.mxu0 0.0
      %389 = vmatprep.subr.mxu0 0.0
      %390 = vmatpush2.msra.mxu0 0.0
      %391 = vmatprep.subr.mxu0 0.0
      %392 = vmatpush2.msra.mxu0 0.0
      %393 = vmatprep.subr.mxu0 0.0
      %394 = vmatpush2.msra.mxu0 0.0
      %395 = vmatprep.subr.mxu0 0.0
      %396 = vmatpush2.msra.mxu0 0.0
      %397 = vmatprep.subr.mxu0 0.0
      %398 = vmatpush2.msra.mxu0 0.0
      %399 = vmatprep.subr.mxu0 0.0
      %400 = vmatpush2.msra.mxu0 0.0
      %401 = vmatprep.mubr.f32.mxu0 0.0
      %402 = vmatmul.mubr.f32.gmra.mxu0 %v332
      %v403 = vpop.f32.mrf.mxu0
      %v404 = vadd.f32 %v323, %v403
      %v405 = vpop.f32.mrf.mxu0
      %406 = vmatprep.mubr.f32.mxu0 0.0
      %407 = vmatmul.mubr.f32.gmra.mxu0 %v335
      %v408 = vpop.f32.mrf.mxu0
      %v409 = vadd.f32 %v328, %v408
      %v410 = vpop.f32.mrf.mxu0
      %411 = vdwg.mxu0
      %s412 = scalar_lea.vmem %s219, 32
      %v413 = vld [vmem:[%s412] sm:$0xff]
      %v414 = vld [vmem:[%s412 + $0x8] sm:$0x1]
      %s415 = scalar_lea.vmem %s1, 144
      %v416 = vld [vmem:[%s415] sm:$0xff]
      %v417 = vld [vmem:[%s415 + $0x8] sm:$0xff]
      %v418 = vld [vmem:[%s415 + $0x10] sm:$0xff]
      %v419 = vld [vmem:[%s415 + $0x18] sm:$0xff]
      %v420 = vld [vmem:[%s415 + $0x20] sm:$0xff]
      %v421 = vld [vmem:[%s415 + $0x28] sm:$0xff]
      %v422 = vld [vmem:[%s415 + $0x30] sm:$0xff]
      %v423 = vld [vmem:[%s415 + $0x38] sm:$0xff]
      %v424 = vld [vmem:[%s415 + $0x40] sm:$0xff]
      %v426 = vsel %vm249, %v413, 0
      %v429 = vsel %vm249, %v414, 0
      %431 = vmatprep.subr.mxu0 0.0
      %432 = vmatpush1.msra.mxu0 0.0
      %433 = vmatprep.subr.mxu0 0.0
      %434 = vmatpush1.msra.mxu0 0.0
      %435 = vmatprep.subr.mxu0 0.0
      %436 = vmatpush1.msra.mxu0 0.0
      %437 = vmatprep.subr.mxu0 0.0
      %438 = vmatpush1.msra.mxu0 0.0
      %439 = vmatprep.subr.mxu0 0.0
      %440 = vmatpush1.msra.mxu0 0.0
      %441 = vmatprep.subr.mxu0 0.0
      %442 = vmatpush1.msra.mxu0 0.0
      %443 = vmatprep.subr.mxu0 0.0
      %444 = vmatpush1.msra.mxu0 0.0
      %445 = vmatprep.subr.mxu0 0.0
      %446 = vmatpush1.msra.mxu0 %v424
      %447 = vmatprep.subr.mxu0 0.0
      %448 = vmatpush1.msra.mxu0 %v423
      %449 = vmatprep.subr.mxu0 0.0
      %450 = vmatpush1.msra.mxu0 %v422
      %451 = vmatprep.subr.mxu0 0.0
      %452 = vmatpush1.msra.mxu0 %v421
      %453 = vmatprep.subr.mxu0 0.0
      %454 = vmatpush1.msra.mxu0 %v420
      %455 = vmatprep.subr.mxu0 0.0
      %456 = vmatpush1.msra.mxu0 %v419
      %457 = vmatprep.subr.mxu0 0.0
      %458 = vmatpush1.msra.mxu0 %v418
      %459 = vmatprep.subr.mxu0 0.0
      %460 = vmatpush1.msra.mxu0 %v417
      %461 = vmatprep.subr.mxu0 0.0
      %462 = vmatpush1.msra.mxu0 %v416
      %463 = vmatprep.subr.mxu0 0.0
      %464 = vmatpush2.msra.mxu0 0.0
      %465 = vmatprep.subr.mxu0 0.0
      %466 = vmatpush2.msra.mxu0 0.0
      %467 = vmatprep.subr.mxu0 0.0
      %468 = vmatpush2.msra.mxu0 0.0
      %469 = vmatprep.subr.mxu0 0.0
      %470 = vmatpush2.msra.mxu0 0.0
      %471 = vmatprep.subr.mxu0 0.0
      %472 = vmatpush2.msra.mxu0 0.0
      %473 = vmatprep.subr.mxu0 0.0
      %474 = vmatpush2.msra.mxu0 0.0
      %475 = vmatprep.subr.mxu0 0.0
      %476 = vmatpush2.msra.mxu0 0.0
      %477 = vmatprep.subr.mxu0 0.0
      %478 = vmatpush2.msra.mxu0 0.0
      %479 = vmatprep.subr.mxu0 0.0
      %480 = vmatpush2.msra.mxu0 0.0
      %481 = vmatprep.subr.mxu0 0.0
      %482 = vmatpush2.msra.mxu0 0.0
      %483 = vmatprep.subr.mxu0 0.0
      %484 = vmatpush2.msra.mxu0 0.0
      %485 = vmatprep.subr.mxu0 0.0
      %486 = vmatpush2.msra.mxu0 0.0
      %487 = vmatprep.subr.mxu0 0.0
      %488 = vmatpush2.msra.mxu0 0.0
      %489 = vmatprep.subr.mxu0 0.0
      %490 = vmatpush2.msra.mxu0 0.0
      %491 = vmatprep.subr.mxu0 0.0
      %492 = vmatpush2.msra.mxu0 0.0
      %493 = vmatprep.subr.mxu0 0.0
      %494 = vmatpush2.msra.mxu0 0.0
      %495 = vmatprep.mubr.f32.mxu0 0.0
      %496 = vmatmul.mubr.f32.gmra.mxu0 %v426
      %v497 = vpop.f32.mrf.mxu0
      %v498 = vadd.f32 0.0, %v497
      %v499 = vpop.f32.mrf.mxu0
      %500 = vmatprep.mubr.f32.mxu0 0.0
      %501 = vmatmul.mubr.f32.gmra.mxu0 %v429
      %v502 = vpop.f32.mrf.mxu0
      %v503 = vadd.f32 0.0, %v502
      %v504 = vpop.f32.mrf.mxu0
      %505 = vdwg.mxu0
      %v506 = vadd.f32 %v404, %v498
      %v507 = vadd.f32 %v409, %v503
      %v508 = vld [vmem:[%s2] sm:$0x1]
      %v510 = vlaneseq
      %v511 = vshrl.u32 %v510, 7
      %v512 = vsub.s32 0, %v511
      %v513 = vrot.slane %v508, %v512
      %v515 = vadd.f32 %v506, %v513
      %v516 = vadd.f32 %v507, %v513
      %vm517 = vcmask 130048
      %518 = vst.msk [vmem:[%s224] sm:$0xff] %vm517, %v515
      %vm519 = vcmask 122880
      %520 = vst.msk [vmem:[%s224 + $0x8] sm:$0x1] %vm519, %v516
      %v521 = vsel %vm517, %v515, 0.0
      %v522 = vsel %vm519, %v516, 0.0
      %v523 = vadd.f32 %v521, %v522
      %v524 = vrot.slane %v523, 4
      %v525 = vadd.f32 %v523, %v524
      %v526 = vrot.slane %v525, 2
      %v527 = vadd.f32 %v525, %v526
      %v528 = vrot.slane %v527, 1
      %v529 = vadd.f32 %v527, %v528
      %v530 = vadd.f32 %v529, 0.0
      %v531 = vmul.f32 %v515, %v515
      %v532 = vmul.f32 %v516, %v516
      %v533 = vsel %vm517, %v531, 0.0
      %v534 = vsel %vm519, %v532, 0.0
      %v535 = vadd.f32 %v533, %v534
      %v536 = vrot.slane %v535, 4
      %v537 = vadd.f32 %v535, %v536
      %v538 = vrot.slane %v537, 2
      %v539 = vadd.f32 %v537, %v538
      %v540 = vrot.slane %v539, 1
      %v541 = vadd.f32 %v539, %v540
      %v542 = vadd.f32 %v541, 0.0
      %v543 = vld [vmem:[%s412] sm:$0xff]
      %v544 = vld [vmem:[%s412 + $0x8] sm:$0x1]
      %v545 = vld [vmem:[%s1] sm:$0xff]
      %v546 = vld [vmem:[%s1 + $0x8] sm:$0xff]
      %v547 = vld [vmem:[%s1 + $0x10] sm:$0xff]
      %v548 = vld [vmem:[%s1 + $0x18] sm:$0xff]
      %v549 = vld [vmem:[%s1 + $0x20] sm:$0xff]
      %v550 = vld [vmem:[%s1 + $0x28] sm:$0xff]
      %v551 = vld [vmem:[%s1 + $0x30] sm:$0xff]
      %v552 = vld [vmem:[%s1 + $0x38] sm:$0xff]
      %v553 = vld [vmem:[%s1 + $0x40] sm:$0xff]
      %s554 = scalar_lea.vmem %s219, 48
      %v555 = vld [vmem:[%s554] sm:$0xff]
      %v556 = vld [vmem:[%s554 + $0x8] sm:$0x1]
      %v557 = vld [vmem:[%s239] sm:$0xff]
      %v558 = vld [vmem:[%s239 + $0x8] sm:$0xff]
      %v559 = vld [vmem:[%s239 + $0x10] sm:$0xff]
      %v560 = vld [vmem:[%s239 + $0x18] sm:$0xff]
      %v561 = vld [vmem:[%s239 + $0x20] sm:$0xff]
      %v562 = vld [vmem:[%s239 + $0x28] sm:$0xff]
      %v563 = vld [vmem:[%s239 + $0x30] sm:$0xff]
      %v564 = vld [vmem:[%s239 + $0x38] sm:$0xff]
      %v565 = vld [vmem:[%s239 + $0x40] sm:$0xff]
      %v567 = vsel %vm249, %v555, 0
      %v570 = vsel %vm249, %v556, 0
      %572 = vmatprep.subr.mxu0 0.0
      %573 = vmatpush1.msra.mxu0 0.0
      %574 = vmatprep.subr.mxu0 0.0
      %575 = vmatpush1.msra.mxu0 0.0
      %576 = vmatprep.subr.mxu0 0.0
      %577 = vmatpush1.msra.mxu0 0.0
      %578 = vmatprep.subr.mxu0 0.0
      %579 = vmatpush1.msra.mxu0 0.0
      %580 = vmatprep.subr.mxu0 0.0
      %581 = vmatpush1.msra.mxu0 0.0
      %582 = vmatprep.subr.mxu0 0.0
      %583 = vmatpush1.msra.mxu0 0.0
      %584 = vmatprep.subr.mxu0 0.0
      %585 = vmatpush1.msra.mxu0 0.0
      %586 = vmatprep.subr.mxu0 0.0
      %587 = vmatpush1.msra.mxu0 %v565
      %588 = vmatprep.subr.mxu0 0.0
      %589 = vmatpush1.msra.mxu0 %v564
      %590 = vmatprep.subr.mxu0 0.0
      %591 = vmatpush1.msra.mxu0 %v563
      %592 = vmatprep.subr.mxu0 0.0
      %593 = vmatpush1.msra.mxu0 %v562
      %594 = vmatprep.subr.mxu0 0.0
      %595 = vmatpush1.msra.mxu0 %v561
      %596 = vmatprep.subr.mxu0 0.0
      %597 = vmatpush1.msra.mxu0 %v560
      %598 = vmatprep.subr.mxu0 0.0
      %599 = vmatpush1.msra.mxu0 %v559
      %600 = vmatprep.subr.mxu0 0.0
      %601 = vmatpush1.msra.mxu0 %v558
      %602 = vmatprep.subr.mxu0 0.0
      %603 = vmatpush1.msra.mxu0 %v557
      %604 = vmatprep.subr.mxu0 0.0
      %605 = vmatpush2.msra.mxu0 0.0
      %606 = vmatprep.subr.mxu0 0.0
      %607 = vmatpush2.msra.mxu0 0.0
      %608 = vmatprep.subr.mxu0 0.0
      %609 = vmatpush2.msra.mxu0 0.0
      %610 = vmatprep.subr.mxu0 0.0
      %611 = vmatpush2.msra.mxu0 0.0
      %612 = vmatprep.subr.mxu0 0.0
      %613 = vmatpush2.msra.mxu0 0.0
      %614 = vmatprep.subr.mxu0 0.0
      %615 = vmatpush2.msra.mxu0 0.0
      %616 = vmatprep.subr.mxu0 0.0
      %617 = vmatpush2.msra.mxu0 0.0
      %618 = vmatprep.subr.mxu0 0.0
      %619 = vmatpush2.msra.mxu0 0.0
      %620 = vmatprep.subr.mxu0 0.0
      %621 = vmatpush2.msra.mxu0 0.0
      %622 = vmatprep.subr.mxu0 0.0
      %623 = vmatpush2.msra.mxu0 0.0
      %624 = vmatprep.subr.mxu0 0.0
      %625 = vmatpush2.msra.mxu0 0.0
      %626 = vmatprep.subr.mxu0 0.0
      %627 = vmatpush2.msra.mxu0 0.0
      %628 = vmatprep.subr.mxu0 0.0
      %629 = vmatpush2.msra.mxu0 0.0
      %630 = vmatprep.subr.mxu0 0.0
      %631 = vmatpush2.msra.mxu0 0.0
      %632 = vmatprep.subr.mxu0 0.0
      %633 = vmatpush2.msra.mxu0 0.0
      %634 = vmatprep.subr.mxu0 0.0
      %635 = vmatpush2.msra.mxu0 0.0
      %636 = vmatprep.mubr.f32.mxu0 0.0
      %637 = vmatmul.mubr.f32.gmra.mxu0 %v567
      %v638 = vpop.f32.mrf.mxu0
      %v639 = vadd.f32 0.0, %v638
      %v640 = vpop.f32.mrf.mxu0
      %641 = vmatprep.mubr.f32.mxu0 0.0
      %642 = vmatmul.mubr.f32.gmra.mxu0 %v570
      %v643 = vpop.f32.mrf.mxu0
      %v644 = vadd.f32 0.0, %v643
      %v645 = vpop.f32.mrf.mxu0
      %646 = vdwg.mxu0
      %v648 = vsel %vm249, %v543, 0
      %v651 = vsel %vm249, %v544, 0
      %653 = vmatprep.subr.mxu0 0.0
      %654 = vmatpush1.msra.mxu0 0.0
      %655 = vmatprep.subr.mxu0 0.0
      %656 = vmatpush1.msra.mxu0 0.0
      %657 = vmatprep.subr.mxu0 0.0
      %658 = vmatpush1.msra.mxu0 0.0
      %659 = vmatprep.subr.mxu0 0.0
      %660 = vmatpush1.msra.mxu0 0.0
      %661 = vmatprep.subr.mxu0 0.0
      %662 = vmatpush1.msra.mxu0 0.0
      %663 = vmatprep.subr.mxu0 0.0
      %664 = vmatpush1.msra.mxu0 0.0
      %665 = vmatprep.subr.mxu0 0.0
      %666 = vmatpush1.msra.mxu0 0.0
      %667 = vmatprep.subr.mxu0 0.0
      %668 = vmatpush1.msra.mxu0 %v553
      %669 = vmatprep.subr.mxu0 0.0
      %670 = vmatpush1.msra.mxu0 %v552
      %671 = vmatprep.subr.mxu0 0.0
      %672 = vmatpush1.msra.mxu0 %v551
      %673 = vmatprep.subr.mxu0 0.0
      %674 = vmatpush1.msra.mxu0 %v550
      %675 = vmatprep.subr.mxu0 0.0
      %676 = vmatpush1.msra.mxu0 %v549
      %677 = vmatprep.subr.mxu0 0.0
      %678 = vmatpush1.msra.mxu0 %v548
      %679 = vmatprep.subr.mxu0 0.0
      %680 = vmatpush1.msra.mxu0 %v547
      %681 = vmatprep.subr.mxu0 0.0
      %682 = vmatpush1.msra.mxu0 %v546
      %683 = vmatprep.subr.mxu0 0.0
      %684 = vmatpush1.msra.mxu0 %v545
      %685 = vmatprep.subr.mxu0 0.0
      %686 = vmatpush2.msra.mxu0 0.0
      %687 = vmatprep.subr.mxu0 0.0
      %688 = vmatpush2.msra.mxu0 0.0
      %689 = vmatprep.subr.mxu0 0.0
      %690 = vmatpush2.msra.mxu0 0.0
      %691 = vmatprep.subr.mxu0 0.0
      %692 = vmatpush2.msra.mxu0 0.0
      %693 = vmatprep.subr.mxu0 0.0
      %694 = vmatpush2.msra.mxu0 0.0
      %695 = vmatprep.subr.mxu0 0.0
      %696 = vmatpush2.msra.mxu0 0.0
      %697 = vmatprep.subr.mxu0 0.0
      %698 = vmatpush2.msra.mxu0 0.0
      %699 = vmatprep.subr.mxu0 0.0
      %700 = vmatpush2.msra.mxu0 0.0
      %701 = vmatprep.subr.mxu0 0.0
      %702 = vmatpush2.msra.mxu0 0.0
      %703 = vmatprep.subr.mxu0 0.0
      %704 = vmatpush2.msra.mxu0 0.0
      %705 = vmatprep.subr.mxu0 0.0
      %706 = vmatpush2.msra.mxu0 0.0
      %707 = vmatprep.subr.mxu0 0.0
      %708 = vmatpush2.msra.mxu0 0.0
      %709 = vmatprep.subr.mxu0 0.0
      %710 = vmatpush2.msra.mxu0 0.0
      %711 = vmatprep.subr.mxu0 0.0
      %712 = vmatpush2.msra.mxu0 0.0
      %713 = vmatprep.subr.mxu0 0.0
      %714 = vmatpush2.msra.mxu0 0.0
      %715 = vmatprep.subr.mxu0 0.0
      %716 = vmatpush2.msra.mxu0 0.0
      %717 = vmatprep.mubr.f32.mxu0 0.0
      %718 = vmatmul.mubr.f32.gmra.mxu0 %v648
      %v719 = vpop.f32.mrf.mxu0
      %v720 = vadd.f32 %v639, %v719
      %v721 = vpop.f32.mrf.mxu0
      %722 = vmatprep.mubr.f32.mxu0 0.0
      %723 = vmatmul.mubr.f32.gmra.mxu0 %v651
      %v724 = vpop.f32.mrf.mxu0
      %v725 = vadd.f32 %v644, %v724
      %v726 = vpop.f32.mrf.mxu0
      %727 = vdwg.mxu0
      %s728 = scalar_lea.vmem %s219, 64
      %v729 = vld [vmem:[%s728] sm:$0xff]
      %v730 = vld [vmem:[%s728 + $0x8] sm:$0x1]
      %v731 = vld [vmem:[%s415] sm:$0xff]
      %v732 = vld [vmem:[%s415 + $0x8] sm:$0xff]
      %v733 = vld [vmem:[%s415 + $0x10] sm:$0xff]
      %v734 = vld [vmem:[%s415 + $0x18] sm:$0xff]
      %v735 = vld [vmem:[%s415 + $0x20] sm:$0xff]
      %v736 = vld [vmem:[%s415 + $0x28] sm:$0xff]
      %v737 = vld [vmem:[%s415 + $0x30] sm:$0xff]
      %v738 = vld [vmem:[%s415 + $0x38] sm:$0xff]
      %v739 = vld [vmem:[%s415 + $0x40] sm:$0xff]
      %v741 = vsel %vm249, %v729, 0
      %v744 = vsel %vm249, %v730, 0
      %746 = vmatprep.subr.mxu0 0.0
      %747 = vmatpush1.msra.mxu0 0.0
      %748 = vmatprep.subr.mxu0 0.0
      %749 = vmatpush1.msra.mxu0 0.0
      %750 = vmatprep.subr.mxu0 0.0
      %751 = vmatpush1.msra.mxu0 0.0
      %752 = vmatprep.subr.mxu0 0.0
      %753 = vmatpush1.msra.mxu0 0.0
      %754 = vmatprep.subr.mxu0 0.0
      %755 = vmatpush1.msra.mxu0 0.0
      %756 = vmatprep.subr.mxu0 0.0
      %757 = vmatpush1.msra.mxu0 0.0
      %758 = vmatprep.subr.mxu0 0.0
      %759 = vmatpush1.msra.mxu0 0.0
      %760 = vmatprep.subr.mxu0 0.0
      %761 = vmatpush1.msra.mxu0 %v739
      %762 = vmatprep.subr.mxu0 0.0
      %763 = vmatpush1.msra.mxu0 %v738
      %764 = vmatprep.subr.mxu0 0.0
      %765 = vmatpush1.msra.mxu0 %v737
      %766 = vmatprep.subr.mxu0 0.0
      %767 = vmatpush1.msra.mxu0 %v736
      %768 = vmatprep.subr.mxu0 0.0
      %769 = vmatpush1.msra.mxu0 %v735
      %770 = vmatprep.subr.mxu0 0.0
      %771 = vmatpush1.msra.mxu0 %v734
      %772 = vmatprep.subr.mxu0 0.0
      %773 = vmatpush1.msra.mxu0 %v733
      %774 = vmatprep.subr.mxu0 0.0
      %775 = vmatpush1.msra.mxu0 %v732
      %776 = vmatprep.subr.mxu0 0.0
      %777 = vmatpush1.msra.mxu0 %v731
      %778 = vmatprep.subr.mxu0 0.0
      %779 = vmatpush2.msra.mxu0 0.0
      %780 = vmatprep.subr.mxu0 0.0
      %781 = vmatpush2.msra.mxu0 0.0
      %782 = vmatprep.subr.mxu0 0.0
      %783 = vmatpush2.msra.mxu0 0.0
      %784 = vmatprep.subr.mxu0 0.0
      %785 = vmatpush2.msra.mxu0 0.0
      %786 = vmatprep.subr.mxu0 0.0
      %787 = vmatpush2.msra.mxu0 0.0
      %788 = vmatprep.subr.mxu0 0.0
      %789 = vmatpush2.msra.mxu0 0.0
      %790 = vmatprep.subr.mxu0 0.0
      %791 = vmatpush2.msra.mxu0 0.0
      %792 = vmatprep.subr.mxu0 0.0
      %793 = vmatpush2.msra.mxu0 0.0
      %794 = vmatprep.subr.mxu0 0.0
      %795 = vmatpush2.msra.mxu0 0.0
      %796 = vmatprep.subr.mxu0 0.0
      %797 = vmatpush2.msra.mxu0 0.0
      %798 = vmatprep.subr.mxu0 0.0
      %799 = vmatpush2.msra.mxu0 0.0
      %800 = vmatprep.subr.mxu0 0.0
      %801 = vmatpush2.msra.mxu0 0.0
      %802 = vmatprep.subr.mxu0 0.0
      %803 = vmatpush2.msra.mxu0 0.0
      %804 = vmatprep.subr.mxu0 0.0
      %805 = vmatpush2.msra.mxu0 0.0
      %806 = vmatprep.subr.mxu0 0.0
      %807 = vmatpush2.msra.mxu0 0.0
      %808 = vmatprep.subr.mxu0 0.0
      %809 = vmatpush2.msra.mxu0 0.0
      %810 = vmatprep.mubr.f32.mxu0 0.0
      %811 = vmatmul.mubr.f32.gmra.mxu0 %v741
      %v812 = vpop.f32.mrf.mxu0
      %v813 = vadd.f32 0.0, %v812
      %v814 = vpop.f32.mrf.mxu0
      %815 = vmatprep.mubr.f32.mxu0 0.0
      %816 = vmatmul.mubr.f32.gmra.mxu0 %v744
      %v817 = vpop.f32.mrf.mxu0
      %v818 = vadd.f32 0.0, %v817
      %v819 = vpop.f32.mrf.mxu0
      %820 = vdwg.mxu0
      %v821 = vadd.f32 %v720, %v813
      %v822 = vadd.f32 %v725, %v818
      %v823 = vld [vmem:[%s2] sm:$0x1]
      %v825 = vlaneseq
      %v826 = vshrl.u32 %v825, 7
      %v827 = vsub.s32 0, %v826
      %v828 = vrot.slane %v823, %v827
      %v830 = vadd.f32 %v821, %v828
      %v831 = vadd.f32 %v822, %v828
      %s832 = scalar_lea.vmem %s224, 16
      %833 = vst.msk [vmem:[%s832] sm:$0xff] %vm517, %v830
      %834 = vst.msk [vmem:[%s832 + $0x8] sm:$0x1] %vm519, %v831
      %v835 = vsel %vm517, %v830, 0.0
      %v836 = vsel %vm519, %v831, 0.0
      %v837 = vadd.f32 %v835, %v836
      %v838 = vrot.slane %v837, 4
      %v839 = vadd.f32 %v837, %v838
      %v840 = vrot.slane %v839, 2
      %v841 = vadd.f32 %v839, %v840
      %v842 = vrot.slane %v841, 1
      %v843 = vadd.f32 %v841, %v842
      %v844 = vadd.f32 %v530, %v843
      %v845 = vmul.f32 %v830, %v830
      %v846 = vmul.f32 %v831, %v831
      %v847 = vsel %vm517, %v845, 0.0
      %v848 = vsel %vm519, %v846, 0.0
      %v849 = vadd.f32 %v847, %v848
      %v850 = vrot.slane %v849, 4
      %v851 = vadd.f32 %v849, %v850
      %v852 = vrot.slane %v851, 2
      %v853 = vadd.f32 %v851, %v852
      %v854 = vrot.slane %v853, 1
      %v855 = vadd.f32 %v853, %v854
      %v856 = vadd.f32 %v542, %v855
      %v857 = vmul.f32 %v844, 0.055555556
      %v858 = vmul.f32 %v856, 0.055555556
      %v859 = vmul.f32 %v857, %v857
      %v860 = vsub.f32 %v858, %v859
      %v861 = vadd.f32 %v860, 1e-05
      %v862 = vrsqrt.pop %v861
      %v863 = vld [vmem:[%s3] sm:$0x1]
      %v864 = vmul.f32 %v862, %v863
      %v865 = vld [vmem:[%s4] sm:$0x1]
      %v866 = vmul.f32 %v857, %v864
      %v867 = vsub.f32 %v865, %v866
      %v868 = vld [vmem:[%s224] sm:$0xff]
      %v869 = vld [vmem:[%s224 + $0x8] sm:$0x1]
      %v870 = vlaneseq
      %v871 = vshrl.u32 %v870, 7
      %v872 = vsub.s32 0, %v871
      %v873 = vrot.slane %v864, %v872
      %v874 = vmul.f32 %v868, %v873
      %v875 = vmul.f32 %v869, %v873
      %v877 = vlaneseq
      %v878 = vshrl.u32 %v877, 7
      %v879 = vsub.s32 0, %v878
      %v880 = vrot.slane %v867, %v879
      %v882 = vadd.f32 %v874, %v880
      %v883 = vadd.f32 %v875, %v880
      %v884 = vmax.f32 %v882, 0.0
      %v885 = vmax.f32 %v883, 0.0
      %886 = vst.msk [vmem:[%s224] sm:$0xff] %vm517, %v884
      %887 = vst.msk [vmem:[%s224 + $0x8] sm:$0x1] %vm519, %v885
      %v888 = vld [vmem:[%s832] sm:$0xff]
      %v889 = vld [vmem:[%s832 + $0x8] sm:$0x1]
      %v890 = vmul.f32 %v888, %v873
      %v891 = vmul.f32 %v889, %v873
      %v892 = vadd.f32 %v890, %v880
      %v893 = vadd.f32 %v891, %v880
      %v894 = vmax.f32 %v892, 0.0
      %v895 = vmax.f32 %v893, 0.0
      %896 = vst.msk [vmem:[%s832] sm:$0xff] %vm517, %v894
      %897 = vst.msk [vmem:[%s832 + $0x8] sm:$0x1] %vm519, %v895
      %p898 = scmp.lt.s32.totalorder %s16, 1
      %s899 = scalar_select %p898, %s16, 1
      %s900 = smul.addr %s899, 4
      %s901 = smul.addr %s900, 8
      %s902 = scalar_lea.vmem %s5, %s901
      // Predicated region
      $region41: #{patch_conv3d_forward.4} parent=39 // pred_check
        %p903 = pneg %p144
      $region42: #{patch_conv3d_forward.4} parent=39 // pred_check_branch
        %905 = sbr.rel (%p903) target = $region44
      $region43: #{patch_conv3d_forward.4} parent=39 // pred_region
        _
      $region44: #{patch_conv3d_forward.4} parent=39 // pred_fallthru
        _
    $region40: #{patch_conv3d_forward.4} parent=5 // pred_fallthru
      _
    %p906 = scmp.le.s32.totalorder 2, %s11
    // Predicated region
    $region45: #{patch_conv3d_forward.4} parent=5 // pred_check
      %p907 = pneg %p906
    $region46: #{patch_conv3d_forward.4} parent=5 // pred_check_branch
      %909 = sbr.rel (%p907) target = $region48
    $region47: #{patch_conv3d_forward.4} parent=5 // pred_region
      %s910 = ssub.s32 %s11, 2
      // Predicated region
      $region49: #{patch_conv3d_forward.4} parent=47 // pred_check
        %p911 = pneg %p150
      $region50: #{patch_conv3d_forward.4} parent=47 // pred_check_branch
        %913 = sbr.rel (%p911) target = $region52
      $region51: #{patch_conv3d_forward.4} parent=47 // pred_region
        %p914 = scmp.lt.s32.totalorder %s17, 1
        %s915 = scalar_select %p914, %s17, 1
        %s916 = smul.addr %s915, 4
        %s917 = smul.addr %s916, 8
        %s918 = scalar_lea.vmem %s5, %s917
      $region52: #{patch_conv3d_forward.4} parent=47 // pred_fallthru
        _
    $region48: #{patch_conv3d_forward.4} parent=5 // pred_fallthru
      _
  $region6: #{patch_conv3d_forward.4} parent=0 // loop_footer
    %s15 = sadd.s32 1, %s11
  $region7: #{patch_conv3d_forward.4} parent=0 // loop_footer_branch
    %10 = sbr.rel target = $region3
  $region8: #{patch_conv3d_forward.4} parent=0 // loop_exit
    _

// kernel: patch_conv3d_forward.5
$region0: #{patch_conv3d_forward.5}
  #allocation0 [shape = 'u32[]', space=smem, size = 0x4, offset = 0x4, fixed_abs, tag = 'smem constant byte address 0x4 - core index']
  #allocation1 [shape = 'u32[144,128]{1,0:T(1,128)}', space=vmem, size = 0x12000, scoped, tag = 'internal scratch']
  %s0 = inlined_call_operand.vmem [shape: f32[2,4,9,144], index: 0, kind: input, shape index: {}]
  %s1 = inlined_call_operand.vmem [shape: f32[3,144,32], index: 1, kind: input, shape index: {}]
  %s2 = inlined_call_operand.vmem [shape: f32[1,32], index: 2, kind: input, shape index: {}]
  %s3 = inlined_call_operand.vmem [shape: f32[1,32], index: 3, kind: input, shape index: {}]
  %s4 = inlined_call_operand.vmem [shape: f32[1,32], index: 4, kind: input, shape index: {}]
  %s5 = inlined_call_operand.vmem [shape: f32[32,32], index: 5, kind: input, shape index: {}]
  %s6 = inlined_call_operand.vmem [shape: f32[1,32], index: 6, kind: input, shape index: {}]
  %s7 = inlined_call_operand.vmem [shape: f32[2,2,9,32], index: 7, kind: output, shape index: {}]
  %s8 = sld [smem:[#allocation0]]
  $region61: #{patch_conv3d_forward.5} parent=0
    _
  %s10 = ssub.s32 1, %s8
  %s11 = scalar_select 0, %s10, %s8
  loop: start=0, step=1, limit=4
  $region2: #{patch_conv3d_forward.5} parent=0 // loop_pre_header
    _
  $region3: #{patch_conv3d_forward.5} parent=0 // loop_header
    %s13 = sphi 0, %s17
    %p14 = scmp.ge.s32.totalorder %s13, 4
    %s23 = sphi 0, %s25
    %s26 = sphi 0, %s23
    %s27 = sphi 0, %s26
    %s43 = sphi 0, %s27
    %s47 = sphi 0, %s47
    %s49 = sphi 0, %s47
    %s50 = sphi 0, %s49
    %s64 = sphi 0, %s50
    %s68 = sphi 0, %s68
    %s70 = sphi 0, %s68
    %s71 = sphi 0, %s70
    %s85 = sphi 0, %s71
    %s89 = sphi 0, %s89
    %s91 = sphi 0, %s89
    %s92 = sphi 0, %s91
    %s106 = sphi 0, %s92
    %s110 = sphi 0, %s110
    %s112 = sphi 0, %s110
    %s113 = sphi 0, %s112
    %s127 = sphi 0, %s113
    %s131 = sphi 0, %s131
    %s133 = sphi 0, %s131
    %s134 = sphi 0, %s133
    %s148 = sphi 0, %s134
    %s152 = sphi 0, %s152
    %s154 = sphi 0, %s152
    %s155 = sphi 0, %s154
    %s169 = sphi 0, %s155
    %s175 = sphi 0, %s177
    %s178 = sphi 0, %s175
    %s179 = sphi 0, %s178
    %s195 = sphi 0, %s179
  $region4: #{patch_conv3d_forward.5} parent=0 // loop_header_branch
    %16 = sbr.rel (%p14) target = $region8
  $region5: #{patch_conv3d_forward.5} parent=0 // loop_body
    %s18 = ssub.s32 %s13, 1
    %s19 = ssub.s32 %s13, 2
    %s20 = sadd.s32 %s13, 1
    %s21 = ssub.s32 %s13, %s20
    %p22 = scmp.eq.s32.totalorder %s21, 0
    %s24 = sadd.s32 %s23, 1
    %s25 = scalar_select %p22, %s23, %s24
    %p28 = pneg %p22
    %p29 = scmp.eq.s32.totalorder %s13, 1
    %p30 = por %p28, %p29
    %p31 = scmp.ne.s32.totalorder %s23, %s26
    %p32 = scmp.eq.s32.totalorder %s13, 0
    %p33 = por %p31, %p32
    %p34 = scmp.ne.s32.totalorder %s23, %s26
    %p35 = scmp.eq.s32.totalorder %s18, 1
    %p36 = por %p34, %p35
    %p37 = scmp.ne.s32.totalorder %s26, %s27
    %p38 = scmp.eq.s32.totalorder %s18, 0
    %p39 = por %p37, %p38
    %p40 = scmp.ne.s32.totalorder %s26, %s27
    %p41 = scmp.eq.s32.totalorder %s19, 1
    %p42 = por %p40, %p41
    %p44 = scmp.ne.s32.totalorder %s27, %s43
    %p45 = scmp.eq.s32.totalorder %s19, 0
    %p46 = por %p44, %p45
    %s48 = sadd.s32 %s47, 1
    %p51 = scmp.eq.s32.totalorder %s13, 1
    %p52 = scmp.ne.s32.totalorder %s47, %s49
    %p53 = scmp.eq.s32.totalorder %s13, 0
    %p54 = por %p52, %p53
    %p55 = scmp.ne.s32.totalorder %s47, %s49
    %p56 = scmp.eq.s32.totalorder %s18, 1
    %p57 = por %p55, %p56
    %p58 = scmp.ne.s32.totalorder %s49, %s50
    %p59 = scmp.eq.s32.totalorder %s18, 0
    %p60 = por %p58, %p59
    %p61 = scmp.ne.s32.totalorder %s49, %s50
    %p62 = scmp.eq.s32.totalorder %s19, 1
    %p63 = por %p61, %p62
    %p65 = scmp.ne.s32.totalorder %s50, %s64
    %p66 = scmp.eq.s32.totalorder %s19, 0
    %p67 = por %p65, %p66
    %s69 = sadd.s32 %s68, 1
    %p72 = scmp.eq.s32.totalorder %s13, 1
    %p73 = scmp.ne.s32.totalorder %s68, %s70
    %p74 = scmp.eq.s32.totalorder %s13, 0
    %p75 = por %p73, %p74
    %p76 = scmp.ne.s32.totalorder %s68, %s70
    %p77 = scmp.eq.s32.totalorder %s18, 1
    %p78 = por %p76, %p77
    %p79 = scmp.ne.s32.totalorder %s70, %s71
    %p80 = scmp.eq.s32.totalorder %s18, 0
    %p81 = por %p79, %p80
    %p82 = scmp.ne.s32.totalorder %s70, %s71
    %p83 = scmp.eq.s32.totalorder %s19, 1
    %p84 = por %p82, %p83
    %p86 = scmp.ne.s32.totalorder %s71, %s85
    %p87 = scmp.eq.s32.totalorder %s19, 0
    %p88 = por %p86, %p87
    %s90 = sadd.s32 %s89, 1
    %p93 = scmp.eq.s32.totalorder %s13, 1
    %p94 = scmp.ne.s32.totalorder %s89, %s91
    %p95 = scmp.eq.s32.totalorder %s13, 0
    %p96 = por %p94, %p95
    %p97 = scmp.ne.s32.totalorder %s89, %s91
    %p98 = scmp.eq.s32.totalorder %s18, 1
    %p99 = por %p97, %p98
    %p100 = scmp.ne.s32.totalorder %s91, %s92
    %p101 = scmp.eq.s32.totalorder %s18, 0
    %p102 = por %p100, %p101
    %p103 = scmp.ne.s32.totalorder %s91, %s92
    %p104 = scmp.eq.s32.totalorder %s19, 1
    %p105 = por %p103, %p104
    %p107 = scmp.ne.s32.totalorder %s92, %s106
    %p108 = scmp.eq.s32.totalorder %s19, 0
    %p109 = por %p107, %p108
    %s111 = sadd.s32 %s110, 1
    %p114 = scmp.eq.s32.totalorder %s13, 1
    %p115 = scmp.ne.s32.totalorder %s110, %s112
    %p116 = scmp.eq.s32.totalorder %s13, 0
    %p117 = por %p115, %p116
    %p118 = scmp.ne.s32.totalorder %s110, %s112
    %p119 = scmp.eq.s32.totalorder %s18, 1
    %p120 = por %p118, %p119
    %p121 = scmp.ne.s32.totalorder %s112, %s113
    %p122 = scmp.eq.s32.totalorder %s18, 0
    %p123 = por %p121, %p122
    %p124 = scmp.ne.s32.totalorder %s112, %s113
    %p125 = scmp.eq.s32.totalorder %s19, 1
    %p126 = por %p124, %p125
    %p128 = scmp.ne.s32.totalorder %s113, %s127
    %p129 = scmp.eq.s32.totalorder %s19, 0
    %p130 = por %p128, %p129
    %s132 = sadd.s32 %s131, 1
    %p135 = scmp.eq.s32.totalorder %s13, 1
    %p136 = scmp.ne.s32.totalorder %s131, %s133
    %p137 = scmp.eq.s32.totalorder %s13, 0
    %p138 = por %p136, %p137
    %p139 = scmp.ne.s32.totalorder %s131, %s133
    %p140 = scmp.eq.s32.totalorder %s18, 1
    %p141 = por %p139, %p140
    %p142 = scmp.ne.s32.totalorder %s133, %s134
    %p143 = scmp.eq.s32.totalorder %s18, 0
    %p144 = por %p142, %p143
    %p145 = scmp.ne.s32.totalorder %s133, %s134
    %p146 = scmp.eq.s32.totalorder %s19, 1
    %p147 = por %p145, %p146
    %p149 = scmp.ne.s32.totalorder %s134, %s148
    %p150 = scmp.eq.s32.totalorder %s19, 0
    %p151 = por %p149, %p150
    %s153 = sadd.s32 %s152, 1
    %p156 = scmp.eq.s32.totalorder %s13, 1
    %p157 = scmp.ne.s32.totalorder %s152, %s154
    %p158 = scmp.eq.s32.totalorder %s13, 0
    %p159 = por %p157, %p158
    %p160 = scmp.ne.s32.totalorder %s152, %s154
    %p161 = scmp.eq.s32.totalorder %s18, 1
    %p162 = por %p160, %p161
    %p163 = scmp.ne.s32.totalorder %s154, %s155
    %p164 = scmp.eq.s32.totalorder %s18, 0
    %p165 = por %p163, %p164
    %p166 = scmp.ne.s32.totalorder %s154, %s155
    %p167 = scmp.eq.s32.totalorder %s19, 1
    %p168 = por %p166, %p167
    %p170 = scmp.ne.s32.totalorder %s155, %s169
    %p171 = scmp.eq.s32.totalorder %s19, 0
    %p172 = por %p170, %p171
    %s173 = ssub.s32 %s13, %s20
    %p174 = scmp.eq.s32.totalorder %s173, 0
    %s176 = sadd.s32 %s175, 1
    %s177 = scalar_select %p174, %s175, %s176
    %p180 = pneg %p174
    %p181 = scmp.eq.s32.totalorder %s13, 1
    %p182 = por %p180, %p181
    %p183 = scmp.ne.s32.totalorder %s175, %s178
    %p184 = scmp.eq.s32.totalorder %s13, 0
    %p185 = por %p183, %p184
    %p186 = scmp.ne.s32.totalorder %s175, %s178
    %p187 = scmp.eq.s32.totalorder %s18, 1
    %p188 = por %p186, %p187
    %p189 = scmp.ne.s32.totalorder %s178, %s179
    %p190 = scmp.eq.s32.totalorder %s18, 0
    %p191 = por %p189, %p190
    %p192 = scmp.ne.s32.totalorder %s178, %s179
    %p193 = scmp.eq.s32.totalorder %s19, 1
    %p194 = por %p192, %p193
    %p196 = scmp.ne.s32.totalorder %s179, %s195
    %p197 = scmp.eq.s32.totalorder %s19, 0
    %p198 = por %p196, %p197
    %p199 = scmp.le.s32.totalorder 1, %s13
    %p200 = scmp.lt.s32.totalorder %s13, 3
    %p201 = pnand %p199, %p200
    %p202 = pneg %p201
    // Predicated region
    $region9: #{patch_conv3d_forward.5} parent=5 // pred_check
      _
    $region10: #{patch_conv3d_forward.5} parent=5 // pred_check_branch
      %204 = sbr.rel (%p201) target = $region12
    $region11: #{patch_conv3d_forward.5} parent=5 // pred_region
      %s205 = ssub.s32 %s13, 1
      // Predicated region
      $region13: #{patch_conv3d_forward.5} parent=11 // pred_check
        %p206 = pneg %p60
      $region14: #{patch_conv3d_forward.5} parent=11 // pred_check_branch
        %208 = sbr.rel (%p206) target = $region16
      $region15: #{patch_conv3d_forward.5} parent=11 // pred_region
        _
      $region16: #{patch_conv3d_forward.5} parent=11 // pred_fallthru
        _
      // Predicated region
      $region17: #{patch_conv3d_forward.5} parent=11 // pred_check
        %p209 = pneg %p81
      $region18: #{patch_conv3d_forward.5} parent=11 // pred_check_branch
        %211 = sbr.rel (%p209) target = $region20
      $region19: #{patch_conv3d_forward.5} parent=11 // pred_region
        _
      $region20: #{patch_conv3d_forward.5} parent=11 // pred_fallthru
        _
      // Predicated region
      $region21: #{patch_conv3d_forward.5} parent=11 // pred_check
        %p212 = pneg %p102
      $region22: #{patch_conv3d_forward.5} parent=11 // pred_check_branch
        %214 = sbr.rel (%p212) target = $region24
      $region23: #{patch_conv3d_forward.5} parent=11 // pred_region
        _
      $region24: #{patch_conv3d_forward.5} parent=11 // pred_fallthru
        _
      // Predicated region
      $region25: #{patch_conv3d_forward.5} parent=11 // pred_check
        %p215 = pneg %p123
      $region26: #{patch_conv3d_forward.5} parent=11 // pred_check_branch
        %217 = sbr.rel (%p215) target = $region28
      $region27: #{patch_conv3d_forward.5} parent=11 // pred_region
        _
      $region28: #{patch_conv3d_forward.5} parent=11 // pred_fallthru
        _
      // Predicated region
      $region29: #{patch_conv3d_forward.5} parent=11 // pred_check
        %p218 = pneg %p144
      $region30: #{patch_conv3d_forward.5} parent=11 // pred_check_branch
        %220 = sbr.rel (%p218) target = $region32
      $region31: #{patch_conv3d_forward.5} parent=11 // pred_region
        _
      $region32: #{patch_conv3d_forward.5} parent=11 // pred_fallthru
        _
      // Predicated region
      $region33: #{patch_conv3d_forward.5} parent=11 // pred_check
        %p221 = pneg %p165
      $region34: #{patch_conv3d_forward.5} parent=11 // pred_check_branch
        %223 = sbr.rel (%p221) target = $region36
      $region35: #{patch_conv3d_forward.5} parent=11 // pred_region
        _
      $region36: #{patch_conv3d_forward.5} parent=11 // pred_fallthru
        _
    $region12: #{patch_conv3d_forward.5} parent=5 // pred_fallthru
      _
    %p224 = scmp.lt.s32.totalorder %s13, 2
    // Predicated region
    $region37: #{patch_conv3d_forward.5} parent=5 // pred_check
      %p225 = pneg %p224
    $region38: #{patch_conv3d_forward.5} parent=5 // pred_check_branch
      %227 = sbr.rel (%p225) target = $region40
    $region39: #{patch_conv3d_forward.5} parent=5 // pred_region
      // Predicated region
      $region41: #{patch_conv3d_forward.5} parent=39 // pred_check
        %p228 = pneg %p33
      $region42: #{patch_conv3d_forward.5} parent=39 // pred_check_branch
        %230 = sbr.rel (%p228) target = $region44
      $region43: #{patch_conv3d_forward.5} parent=39 // pred_region
        %p231 = scmp.lt.s32.totalorder %s13, 1
        %s232 = scalar_select %p231, %s13, 1
        %s233 = smul.addr %s232, 16
        %s234 = smul.addr %s233, 8
        %s235 = scalar_lea.vmem %s0, %s234
      $region44: #{patch_conv3d_forward.5} parent=39 // pred_fallthru
        _
    $region40: #{patch_conv3d_forward.5} parent=5 // pred_fallthru
      _
    %p236 = scmp.le.s32.totalorder 1, %s13
    %p237 = scmp.lt.s32.totalorder %s13, 3
    %p238 = pnand %p236, %p237
    %p239 = pneg %p238
    // Predicated region
    $region45: #{patch_conv3d_forward.5} parent=5 // pred_check
      _
    $region46: #{patch_conv3d_forward.5} parent=5 // pred_check_branch
      %241 = sbr.rel (%p238) target = $region48
    $region47: #{patch_conv3d_forward.5} parent=5 // pred_region
      %s242 = ssub.s32 %s13, 1
      %p243 = scmp.lt.s32.totalorder %s18, 1
      %s244 = scalar_select %p243, %s18, 1
      %s245 = smul.addr %s244, 16
      %s246 = smul.addr %s245, 8
      %s247 = scalar_lea.vmem %s0, %s246
      %p248 = pneg %p39
      %p249 = pneg %p36
      %p250 = pneg %p60
      %p251 = pneg %p57
      %p252 = pneg %p81
      %p253 = pneg %p78
      %p254 = pneg %p102
      %p255 = pneg %p99
      %p256 = pneg %p123
      %p257 = pneg %p120
      %p258 = pneg %p144
      %p259 = pneg %p141
      %p260 = pneg %p165
      %p261 = pneg %p162
      %p262 = pneg %p191
      %p263 = pneg %p188
      %p264 = scmp.lt.s32.totalorder %s18, 1
      %s265 = scalar_select %p264, %s18, 1
      %s266 = smul.addr %s265, 4
      %s267 = smul.addr %s266, 8
      %s268 = scalar_lea.vmem %s7, %s267
      %p269 = scmp.lt.s32.totalorder %s18, 1
      %s270 = scalar_select %p269, %s18, 1
      %s271 = smul.addr %s270, 16
      %s272 = smul.addr %s271, 8
      %s273 = scalar_lea.vmem %s0, %s272
      %p274 = scmp.lt.s32.totalorder %s18, 1
      %s275 = scalar_select %p274, %s18, 1
      %s276 = smul.addr %s275, 4
      %s277 = smul.addr %s276, 8
      %s278 = scalar_lea.vmem %s7, %s277
      %v279 = vld [vmem:[%s273] sm:$0xff]
      %v280 = vld [vmem:[%s273 + $0x8] sm:$0xff]
      %v281 = vld [vmem:[%s273 + $0x10] sm:$0x1]
      %v282 = vld [vmem:[%s273 + $0x18] sm:$0x1]
      %v283 = vld [vmem:[%s1] sm:$0xff]
      %v284 = vld [vmem:[%s1 + $0x8] sm:$0xff]
      %v285 = vld [vmem:[%s1 + $0x10] sm:$0xff]
      %v286 = vld [vmem:[%s1 + $0x18] sm:$0xff]
      %v287 = vld [vmem:[%s1 + $0x20] sm:$0xff]
      %v288 = vld [vmem:[%s1 + $0x28] sm:$0xff]
      %v289 = vld [vmem:[%s1 + $0x30] sm:$0xff]
      %v290 = vld [vmem:[%s1 + $0x38] sm:$0xff]
      %v291 = vld [vmem:[%s1 + $0x40] sm:$0xff]
      %v292 = vld [vmem:[%s1 + $0x48] sm:$0xff]
      %v293 = vld [vmem:[%s1 + $0x50] sm:$0xff]
      %v294 = vld [vmem:[%s1 + $0x58] sm:$0xff]
      %v295 = vld [vmem:[%s1 + $0x60] sm:$0xff]
      %v296 = vld [vmem:[%s1 + $0x68] sm:$0xff]
      %v297 = vld [vmem:[%s1 + $0x70] sm:$0xff]
      %v298 = vld [vmem:[%s1 + $0x78] sm:$0xff]
      %v299 = vld [vmem:[%s1 + $0x80] sm:$0xff]
      %v300 = vld [vmem:[%s1 + $0x88] sm:$0xff]
      %s301 = scalar_lea.vmem %s273, 32
      %v302 = vld [vmem:[%s301] sm:$0xff]
      %v303 = vld [vmem:[%s301 + $0x8] sm:$0xff]
      %v304 = vld [vmem:[%s301 + $0x10] sm:$0x1]
      %v305 = vld [vmem:[%s301 + $0x18] sm:$0x1]
      %s306 = scalar_lea.vmem %s1, 144
      %v307 = vld [vmem:[%s306] sm:$0xff]
      %v308 = vld [vmem:[%s306 + $0x8] sm:$0xff]
      %v309 = vld [vmem:[%s306 + $0x10] sm:$0xff]
      %v310 = vld [vmem:[%s306 + $0x18] sm:$0xff]
      %v311 = vld [vmem:[%s306 + $0x20] sm:$0xff]
      %v312 = vld [vmem:[%s306 + $0x28] sm:$0xff]
      %v313 = vld [vmem:[%s306 + $0x30] sm:$0xff]
      %v314 = vld [vmem:[%s306 + $0x38] sm:$0xff]
      %v315 = vld [vmem:[%s306 + $0x40] sm:$0xff]
      %v316 = vld [vmem:[%s306 + $0x48] sm:$0xff]
      %v317 = vld [vmem:[%s306 + $0x50] sm:$0xff]
      %v318 = vld [vmem:[%s306 + $0x58] sm:$0xff]
      %v319 = vld [vmem:[%s306 + $0x60] sm:$0xff]
      %v320 = vld [vmem:[%s306 + $0x68] sm:$0xff]
      %v321 = vld [vmem:[%s306 + $0x70] sm:$0xff]
      %v322 = vld [vmem:[%s306 + $0x78] sm:$0xff]
      %v323 = vld [vmem:[%s306 + $0x80] sm:$0xff]
      %v324 = vld [vmem:[%s306 + $0x88] sm:$0xff]
      %vm325 = vcmask 130048
      %v327 = vsel %vm325, %v303, 0
      %v330 = vsel %vm325, %v305, 0
      %332 = vmatprep.subr.mxu0 0.0
      %333 = vmatpush1.msra.mxu0 %v322
      %334 = vmatprep.subr.mxu0 0.0
      %335 = vmatpush1.msra.mxu0 %v321
      %336 = vmatprep.subr.mxu0 0.0
      %337 = vmatpush1.msra.mxu0 %v320
      %338 = vmatprep.subr.mxu0 0.0
      %339 = vmatpush1.msra.mxu0 %v319
      %340 = vmatprep.subr.mxu0 0.0
      %341 = vmatpush1.msra.mxu0 %v318
      %342 = vmatprep.subr.mxu0 0.0
      %343 = vmatpush1.msra.mxu0 %v317
      %344 = vmatprep.subr.mxu0 0.0
      %345 = vmatpush1.msra.mxu0 %v316
      %346 = vmatprep.subr.mxu0 0.0
      %347 = vmatpush1.msra.mxu0 %v315
      %348 = vmatprep.subr.mxu0 0.0
      %349 = vmatpush1.msra.mxu0 %v314
      %350 = vmatprep.subr.mxu0 0.0
      %351 = vmatpush1.msra.mxu0 %v313
      %352 = vmatprep.subr.mxu0 0.0
      %353 = vmatpush1.msra.mxu0 %v312
      %354 = vmatprep.subr.mxu0 0.0
      %355 = vmatpush1.msra.mxu0 %v311
      %356 = vmatprep.subr.mxu0 0.0
      %357 = vmatpush1.msra.mxu0 %v310
      %358 = vmatprep.subr.mxu0 0.0
      %359 = vmatpush1.msra.mxu0 %v309
      %360 = vmatprep.subr.mxu0 0.0
      %361 = vmatpush1.msra.mxu0 %v308
      %362 = vmatprep.subr.mxu0 0.0
      %363 = vmatpush1.msra.mxu0 %v307
      %364 = vmatprep.subr.mxu0 0.0
      %365 = vmatpush2.msra.mxu0 0.0
      %366 = vmatprep.subr.mxu0 0.0
      %367 = vmatpush2.msra.mxu0 0.0
      %368 = vmatprep.subr.mxu0 0.0
      %369 = vmatpush2.msra.mxu0 0.0
      %370 = vmatprep.subr.mxu0 0.0
      %371 = vmatpush2.msra.mxu0 0.0
      %372 = vmatprep.subr.mxu0 0.0
      %373 = vmatpush2.msra.mxu0 0.0
      %374 = vmatprep.subr.mxu0 0.0
      %375 = vmatpush2.msra.mxu0 0.0
      %376 = vmatprep.subr.mxu0 0.0
      %377 = vmatpush2.msra.mxu0 0.0
      %378 = vmatprep.subr.mxu0 0.0
      %379 = vmatpush2.msra.mxu0 0.0
      %380 = vmatprep.subr.mxu0 0.0
      %381 = vmatpush2.msra.mxu0 0.0
      %382 = vmatprep.subr.mxu0 0.0
      %383 = vmatpush2.msra.mxu0 0.0
      %384 = vmatprep.subr.mxu0 0.0
      %385 = vmatpush2.msra.mxu0 0.0
      %386 = vmatprep.subr.mxu0 0.0
      %387 = vmatpush2.msra.mxu0 0.0
      %388 = vmatprep.subr.mxu0 0.0
      %389 = vmatpush2.msra.mxu0 0.0
      %390 = vmatprep.subr.mxu0 0.0
      %391 = vmatpush2.msra.mxu0 0.0
      %392 = vmatprep.subr.mxu0 0.0
      %393 = vmatpush2.msra.mxu0 %v324
      %394 = vmatprep.subr.mxu0 0.0
      %395 = vmatpush2.msra.mxu0 %v323
      %396 = vmatprep.mubr.f32.mxu0 %v327
      %397 = vmatmul.mubr.f32.gmra.mxu0 %v302
      %v398 = vpop.f32.mrf.mxu0
      %v399 = vadd.f32 0.0, %v398
      %v400 = vpop.f32.mrf.mxu0
      %401 = vmatprep.mubr.f32.mxu0 %v330
      %402 = vmatmul.mubr.f32.gmra.mxu0 %v304
      %v403 = vpop.f32.mrf.mxu0
      %v404 = vadd.f32 0.0, %v403
      %v405 = vpop.f32.mrf.mxu0
      %406 = vdwg.mxu0
      %v408 = vsel %vm325, %v280, 0
      %v411 = vsel %vm325, %v282, 0
      %413 = vmatprep.subr.mxu0 0.0
      %414 = vmatpush1.msra.mxu0 %v298
      %415 = vmatprep.subr.mxu0 0.0
      %416 = vmatpush1.msra.mxu0 %v297
      %417 = vmatprep.subr.mxu0 0.0
      %418 = vmatpush1.msra.mxu0 %v296
      %419 = vmatprep.subr.mxu0 0.0
      %420 = vmatpush1.msra.mxu0 %v295
      %421 = vmatprep.subr.mxu0 0.0
      %422 = vmatpush1.msra.mxu0 %v294
      %423 = vmatprep.subr.mxu0 0.0
      %424 = vmatpush1.msra.mxu0 %v293
      %425 = vmatprep.subr.mxu0 0.0
      %426 = vmatpush1.msra.mxu0 %v292
      %427 = vmatprep.subr.mxu0 0.0
      %428 = vmatpush1.msra.mxu0 %v291
      %429 = vmatprep.subr.mxu0 0.0
      %430 = vmatpush1.msra.mxu0 %v290
      %431 = vmatprep.subr.mxu0 0.0
      %432 = vmatpush1.msra.mxu0 %v289
      %433 = vmatprep.subr.mxu0 0.0
      %434 = vmatpush1.msra.mxu0 %v288
      %435 = vmatprep.subr.mxu0 0.0
      %436 = vmatpush1.msra.mxu0 %v287
      %437 = vmatprep.subr.mxu0 0.0
      %438 = vmatpush1.msra.mxu0 %v286
      %439 = vmatprep.subr.mxu0 0.0
      %440 = vmatpush1.msra.mxu0 %v285
      %441 = vmatprep.subr.mxu0 0.0
      %442 = vmatpush1.msra.mxu0 %v284
      %443 = vmatprep.subr.mxu0 0.0
      %444 = vmatpush1.msra.mxu0 %v283
      %445 = vmatprep.subr.mxu0 0.0
      %446 = vmatpush2.msra.mxu0 0.0
      %447 = vmatprep.subr.mxu0 0.0
      %448 = vmatpush2.msra.mxu0 0.0
      %449 = vmatprep.subr.mxu0 0.0
      %450 = vmatpush2.msra.mxu0 0.0
      %451 = vmatprep.subr.mxu0 0.0
      %452 = vmatpush2.msra.mxu0 0.0
      %453 = vmatprep.subr.mxu0 0.0
      %454 = vmatpush2.msra.mxu0 0.0
      %455 = vmatprep.subr.mxu0 0.0
      %456 = vmatpush2.msra.mxu0 0.0
      %457 = vmatprep.subr.mxu0 0.0
      %458 = vmatpush2.msra.mxu0 0.0
      %459 = vmatprep.subr.mxu0 0.0
      %460 = vmatpush2.msra.mxu0 0.0
      %461 = vmatprep.subr.mxu0 0.0
      %462 = vmatpush2.msra.mxu0 0.0
      %463 = vmatprep.subr.mxu0 0.0
      %464 = vmatpush2.msra.mxu0 0.0
      %465 = vmatprep.subr.mxu0 0.0
      %466 = vmatpush2.msra.mxu0 0.0
      %467 = vmatprep.subr.mxu0 0.0
      %468 = vmatpush2.msra.mxu0 0.0
      %469 = vmatprep.subr.mxu0 0.0
      %470 = vmatpush2.msra.mxu0 0.0
      %471 = vmatprep.subr.mxu0 0.0
      %472 = vmatpush2.msra.mxu0 0.0
      %473 = vmatprep.subr.mxu0 0.0
      %474 = vmatpush2.msra.mxu0 %v300
      %475 = vmatprep.subr.mxu0 0.0
      %476 = vmatpush2.msra.mxu0 %v299
      %477 = vmatprep.mubr.f32.mxu0 %v408
      %478 = vmatmul.mubr.f32.gmra.mxu0 %v279
      %v479 = vpop.f32.mrf.mxu0
      %v480 = vadd.f32 %v399, %v479
      %v481 = vpop.f32.mrf.mxu0
      %482 = vmatprep.mubr.f32.mxu0 %v411
      %483 = vmatmul.mubr.f32.gmra.mxu0 %v281
      %v484 = vpop.f32.mrf.mxu0
      %v485 = vadd.f32 %v404, %v484
      %v486 = vpop.f32.mrf.mxu0
      %487 = vdwg.mxu0
      %s488 = scalar_lea.vmem %s273, 64
      %v489 = vld [vmem:[%s488] sm:$0xff]
      %v490 = vld [vmem:[%s488 + $0x8] sm:$0xff]
      %v491 = vld [vmem:[%s488 + $0x10] sm:$0x1]
      %v492 = vld [vmem:[%s488 + $0x18] sm:$0x1]
      %s493 = scalar_lea.vmem %s1, 288
      %v494 = vld [vmem:[%s493] sm:$0xff]
      %v495 = vld [vmem:[%s493 + $0x8] sm:$0xff]
      %v496 = vld [vmem:[%s493 + $0x10] sm:$0xff]
      %v497 = vld [vmem:[%s493 + $0x18] sm:$0xff]
      %v498 = vld [vmem:[%s493 + $0x20] sm:$0xff]
      %v499 = vld [vmem:[%s493 + $0x28] sm:$0xff]
      %v500 = vld [vmem:[%s493 + $0x30] sm:$0xff]
      %v501 = vld [vmem:[%s493 + $0x38] sm:$0xff]
      %v502 = vld [vmem:[%s493 + $0x40] sm:$0xff]
      %v503 = vld [vmem:[%s493 + $0x48] sm:$0xff]
      %v504 = vld [vmem:[%s493 + $0x50] sm:$0xff]
      %v505 = vld [vmem:[%s493 + $0x58] sm:$0xff]
      %v506 = vld [vmem:[%s493 + $0x60] sm:$0xff]
      %v507 = vld [vmem:[%s493 + $0x68] sm:$0xff]
      %v508 = vld [vmem:[%s493 + $0x70] sm:$0xff]
      %v509 = vld [vmem:[%s493 + $0x78] sm:$0xff]
      %v510 = vld [vmem:[%s493 + $0x80] sm:$0xff]
      %v511 = vld [vmem:[%s493 + $0x88] sm:$0xff]
      %v513 = vsel %vm325, %v490, 0
      %v516 = vsel %vm325, %v492, 0
      %518 = vmatprep.subr.mxu0 0.0
      %519 = vmatpush1.msra.mxu0 %v509
      %520 = vmatprep.subr.mxu0 0.0
      %521 = vmatpush1.msra.mxu0 %v508
      %522 = vmatprep.subr.mxu0 0.0
      %523 = vmatpush1.msra.mxu0 %v507
      %524 = vmatprep.subr.mxu0 0.0
      %525 = vmatpush1.msra.mxu0 %v506
      %526 = vmatprep.subr.mxu0 0.0
      %527 = vmatpush1.msra.mxu0 %v505
      %528 = vmatprep.subr.mxu0 0.0
      %529 = vmatpush1.msra.mxu0 %v504
      %530 = vmatprep.subr.mxu0 0.0
      %531 = vmatpush1.msra.mxu0 %v503
      %532 = vmatprep.subr.mxu0 0.0
      %533 = vmatpush1.msra.mxu0 %v502
      %534 = vmatprep.subr.mxu0 0.0
      %535 = vmatpush1.msra.mxu0 %v501
      %536 = vmatprep.subr.mxu0 0.0
      %537 = vmatpush1.msra.mxu0 %v500
      %538 = vmatprep.subr.mxu0 0.0
      %539 = vmatpush1.msra.mxu0 %v499
      %540 = vmatprep.subr.mxu0 0.0
      %541 = vmatpush1.msra.mxu0 %v498
      %542 = vmatprep.subr.mxu0 0.0
      %543 = vmatpush1.msra.mxu0 %v497
      %544 = vmatprep.subr.mxu0 0.0
      %545 = vmatpush1.msra.mxu0 %v496
      %546 = vmatprep.subr.mxu0 0.0
      %547 = vmatpush1.msra.mxu0 %v495
      %548 = vmatprep.subr.mxu0 0.0
      %549 = vmatpush1.msra.mxu0 %v494
      %550 = vmatprep.subr.mxu0 0.0
      %551 = vmatpush2.msra.mxu0 0.0
      %552 = vmatprep.subr.mxu0 0.0
      %553 = vmatpush2.msra.mxu0 0.0
      %554 = vmatprep.subr.mxu0 0.0
      %555 = vmatpush2.msra.mxu0 0.0
      %556 = vmatprep.subr.mxu0 0.0
      %557 = vmatpush2.msra.mxu0 0.0
      %558 = vmatprep.subr.mxu0 0.0
      %559 = vmatpush2.msra.mxu0 0.0
      %560 = vmatprep.subr.mxu0 0.0
      %561 = vmatpush2.msra.mxu0 0.0
      %562 = vmatprep.subr.mxu0 0.0
      %563 = vmatpush2.msra.mxu0 0.0
      %564 = vmatprep.subr.mxu0 0.0
      %565 = vmatpush2.msra.mxu0 0.0
      %566 = vmatprep.subr.mxu0 0.0
      %567 = vmatpush2.msra.mxu0 0.0
      %568 = vmatprep.subr.mxu0 0.0
      %569 = vmatpush2.msra.mxu0 0.0
      %570 = vmatprep.subr.mxu0 0.0
      %571 = vmatpush2.msra.mxu0 0.0
      %572 = vmatprep.subr.mxu0 0.0
      %573 = vmatpush2.msra.mxu0 0.0
      %574 = vmatprep.subr.mxu0 0.0
      %575 = vmatpush2.msra.mxu0 0.0
      %576 = vmatprep.subr.mxu0 0.0
      %577 = vmatpush2.msra.mxu0 0.0
      %578 = vmatprep.subr.mxu0 0.0
      %579 = vmatpush2.msra.mxu0 %v511
      %580 = vmatprep.subr.mxu0 0.0
      %581 = vmatpush2.msra.mxu0 %v510
      %582 = vmatprep.mubr.f32.mxu0 %v513
      %583 = vmatmul.mubr.f32.gmra.mxu0 %v489
      %v584 = vpop.f32.mrf.mxu0
      %v585 = vadd.f32 0.0, %v584
      %v586 = vpop.f32.mrf.mxu0
      %587 = vmatprep.mubr.f32.mxu0 %v516
      %588 = vmatmul.mubr.f32.gmra.mxu0 %v491
      %v589 = vpop.f32.mrf.mxu0
      %v590 = vadd.f32 0.0, %v589
      %v591 = vpop.f32.mrf.mxu0
      %592 = vdwg.mxu0
      %v593 = vadd.f32 %v480, %v585
      %v594 = vadd.f32 %v485, %v590
      %v595 = vld [vmem:[%s2] sm:$0x1]
      %v597 = vlaneseq
      %v598 = vshrl.u32 %v597, 7
      %v599 = vsub.s32 0, %v598
      %v600 = vrot.slane %v595, %v599
      %v602 = vadd.f32 %v593, %v600
      %v603 = vadd.f32 %v594, %v600
      %vm604 = vcmask 261120
      %605 = vst.msk [vmem:[%s278] sm:$0xff] %vm604, %v602
      %vm606 = vcmask 253952
      %607 = vst.msk [vmem:[%s278 + $0x8] sm:$0x1] %vm606, %v603
      %v608 = vsel %vm604, %v602, 0.0
      %v609 = vsel %vm606, %v603, 0.0
      %v610 = vadd.f32 %v608, %v609
      %v611 = vrot.slane %v610, 4
      %v612 = vadd.f32 %v610, %v611
      %v613 = vrot.slane %v612, 2
      %v614 = vadd.f32 %v612, %v613
      %v615 = vrot.slane %v614, 1
      %v616 = vadd.f32 %v614, %v615
      %v617 = vadd.f32 %v616, 0.0
      %v618 = vmul.f32 %v602, %v602
      %v619 = vmul.f32 %v603, %v603
      %v620 = vsel %vm604, %v618, 0.0
      %v621 = vsel %vm606, %v619, 0.0
      %v622 = vadd.f32 %v620, %v621
      %v623 = vrot.slane %v622, 4
      %v624 = vadd.f32 %v622, %v623
      %v625 = vrot.slane %v624, 2
      %v626 = vadd.f32 %v624, %v625
      %v627 = vrot.slane %v626, 1
      %v628 = vadd.f32 %v626, %v627
      %v629 = vadd.f32 %v628, 0.0
      %v630 = vld [vmem:[%s301] sm:$0xff]
      %v631 = vld [vmem:[%s301 + $0x8] sm:$0xff]
      %v632 = vld [vmem:[%s301 + $0x10] sm:$0x1]
      %v633 = vld [vmem:[%s301 + $0x18] sm:$0x1]
      %v634 = vld [vmem:[%s1] sm:$0xff]
      %v635 = vld [vmem:[%s1 + $0x8] sm:$0xff]
      %v636 = vld [vmem:[%s1 + $0x10] sm:$0xff]
      %v637 = vld [vmem:[%s1 + $0x18] sm:$0xff]
      %v638 = vld [vmem:[%s1 + $0x20] sm:$0xff]
      %v639 = vld [vmem:[%s1 + $0x28] sm:$0xff]
      %v640 = vld [vmem:[%s1 + $0x30] sm:$0xff]
      %v641 = vld [vmem:[%s1 + $0x38] sm:$0xff]
      %v642 = vld [vmem:[%s1 + $0x40] sm:$0xff]
      %v643 = vld [vmem:[%s1 + $0x48] sm:$0xff]
      %v644 = vld [vmem:[%s1 + $0x50] sm:$0xff]
      %v645 = vld [vmem:[%s1 + $0x58] sm:$0xff]
      %v646 = vld [vmem:[%s1 + $0x60] sm:$0xff]
      %v647 = vld [vmem:[%s1 + $0x68] sm:$0xff]
      %v648 = vld [vmem:[%s1 + $0x70] sm:$0xff]
      %v649 = vld [vmem:[%s1 + $0x78] sm:$0xff]
      %v650 = vld [vmem:[%s1 + $0x80] sm:$0xff]
      %v651 = vld [vmem:[%s1 + $0x88] sm:$0xff]
      %v652 = vld [vmem:[%s488] sm:$0xff]
      %v653 = vld [vmem:[%s488 + $0x8] sm:$0xff]
      %v654 = vld [vmem:[%s488 + $0x10] sm:$0x1]
      %v655 = vld [vmem:[%s488 + $0x18] sm:$0x1]
      %v656 = vld [vmem:[%s306] sm:$0xff]
      %v657 = vld [vmem:[%s306 + $0x8] sm:$0xff]
      %v658 = vld [vmem:[%s306 + $0x10] sm:$0xff]
      %v659 = vld [vmem:[%s306 + $0x18] sm:$0xff]
      %v660 = vld [vmem:[%s306 + $0x20] sm:$0xff]
      %v661 = vld [vmem:[%s306 + $0x28] sm:$0xff]
      %v662 = vld [vmem:[%s306 + $0x30] sm:$0xff]
      %v663 = vld [vmem:[%s306 + $0x38] sm:$0xff]
      %v664 = vld [vmem:[%s306 + $0x40] sm:$0xff]
      %v665 = vld [vmem:[%s306 + $0x48] sm:$0xff]
      %v666 = vld [vmem:[%s306 + $0x50] sm:$0xff]
      %v667 = vld [vmem:[%s306 + $0x58] sm:$0xff]
      %v668 = vld [vmem:[%s306 + $0x60] sm:$0xff]
      %v669 = vld [vmem:[%s306 + $0x68] sm:$0xff]
      %v670 = vld [vmem:[%s306 + $0x70] sm:$0xff]
      %v671 = vld [vmem:[%s306 + $0x78] sm:$0xff]
      %v672 = vld [vmem:[%s306 + $0x80] sm:$0xff]
      %v673 = vld [vmem:[%s306 + $0x88] sm:$0xff]
      %v675 = vsel %vm325, %v653, 0
      %v678 = vsel %vm325, %v655, 0
      %680 = vmatprep.subr.mxu0 0.0
      %681 = vmatpush1.msra.mxu0 %v671
      %682 = vmatprep.subr.mxu0 0.0
      %683 = vmatpush1.msra.mxu0 %v670
      %684 = vmatprep.subr.mxu0 0.0
      %685 = vmatpush1.msra.mxu0 %v669
      %686 = vmatprep.subr.mxu0 0.0
      %687 = vmatpush1.msra.mxu0 %v668
      %688 = vmatprep.subr.mxu0 0.0
      %689 = vmatpush1.msra.mxu0 %v667
      %690 = vmatprep.subr.mxu0 0.0
      %691 = vmatpush1.msra.mxu0 %v666
      %692 = vmatprep.subr.mxu0 0.0
      %693 = vmatpush1.msra.mxu0 %v665
      %694 = vmatprep.subr.mxu0 0.0
      %695 = vmatpush1.msra.mxu0 %v664
      %696 = vmatprep.subr.mxu0 0.0
      %697 = vmatpush1.msra.mxu0 %v663
      %698 = vmatprep.subr.mxu0 0.0
      %699 = vmatpush1.msra.mxu0 %v662
      %700 = vmatprep.subr.mxu0 0.0
      %701 = vmatpush1.msra.mxu0 %v661
      %702 = vmatprep.subr.mxu0 0.0
      %703 = vmatpush1.msra.mxu0 %v660
      %704 = vmatprep.subr.mxu0 0.0
      %705 = vmatpush1.msra.mxu0 %v659
      %706 = vmatprep.subr.mxu0 0.0
      %707 = vmatpush1.msra.mxu0 %v658
      %708 = vmatprep.subr.mxu0 0.0
      %709 = vmatpush1.msra.mxu0 %v657
      %710 = vmatprep.subr.mxu0 0.0
      %711 = vmatpush1.msra.mxu0 %v656
      %712 = vmatprep.subr.mxu0 0.0
      %713 = vmatpush2.msra.mxu0 0.0
      %714 = vmatprep.subr.mxu0 0.0
      %715 = vmatpush2.msra.mxu0 0.0
      %716 = vmatprep.subr.mxu0 0.0
      %717 = vmatpush2.msra.mxu0 0.0
      %718 = vmatprep.subr.mxu0 0.0
      %719 = vmatpush2.msra.mxu0 0.0
      %720 = vmatprep.subr.mxu0 0.0
      %721 = vmatpush2.msra.mxu0 0.0
      %722 = vmatprep.subr.mxu0 0.0
      %723 = vmatpush2.msra.mxu0 0.0
      %724 = vmatprep.subr.mxu0 0.0
      %725 = vmatpush2.msra.mxu0 0.0
      %726 = vmatprep.subr.mxu0 0.0
      %727 = vmatpush2.msra.mxu0 0.0
      %728 = vmatprep.subr.mxu0 0.0
      %729 = vmatpush2.msra.mxu0 0.0
      %730 = vmatprep.subr.mxu0 0.0
      %731 = vmatpush2.msra.mxu0 0.0
      %732 = vmatprep.subr.mxu0 0.0
      %733 = vmatpush2.msra.mxu0 0.0
      %734 = vmatprep.subr.mxu0 0.0
      %735 = vmatpush2.msra.mxu0 0.0
      %736 = vmatprep.subr.mxu0 0.0
      %737 = vmatpush2.msra.mxu0 0.0
      %738 = vmatprep.subr.mxu0 0.0
      %739 = vmatpush2.msra.mxu0 0.0
      %740 = vmatprep.subr.mxu0 0.0
      %741 = vmatpush2.msra.mxu0 %v673
      %742 = vmatprep.subr.mxu0 0.0
      %743 = vmatpush2.msra.mxu0 %v672
      %744 = vmatprep.mubr.f32.mxu0 %v675
      %745 = vmatmul.mubr.f32.gmra.mxu0 %v652
      %v746 = vpop.f32.mrf.mxu0
      %v747 = vadd.f32 0.0, %v746
      %v748 = vpop.f32.mrf.mxu0
      %749 = vmatprep.mubr.f32.mxu0 %v678
      %750 = vmatmul.mubr.f32.gmra.mxu0 %v654
      %v751 = vpop.f32.mrf.mxu0
      %v752 = vadd.f32 0.0, %v751
      %v753 = vpop.f32.mrf.mxu0
      %754 = vdwg.mxu0
      %v756 = vsel %vm325, %v631, 0
      %v759 = vsel %vm325, %v633, 0
      %761 = vmatprep.subr.mxu0 0.0
      %762 = vmatpush1.msra.mxu0 %v649
      %763 = vmatprep.subr.mxu0 0.0
      %764 = vmatpush1.msra.mxu0 %v648
      %765 = vmatprep.subr.mxu0 0.0
      %766 = vmatpush1.msra.mxu0 %v647
      %767 = vmatprep.subr.mxu0 0.0
      %768 = vmatpush1.msra.mxu0 %v646
      %769 = vmatprep.subr.mxu0 0.0
      %770 = vmatpush1.msra.mxu0 %v645
      %771 = vmatprep.subr.mxu0 0.0
      %772 = vmatpush1.msra.mxu0 %v644
      %773 = vmatprep.subr.mxu0 0.0
      %774 = vmatpush1.msra.mxu0 %v643
      %775 = vmatprep.subr.mxu0 0.0
      %776 = vmatpush1.msra.mxu0 %v642
      %777 = vmatprep.subr.mxu0 0.0
      %778 = vmatpush1.msra.mxu0 %v641
      %779 = vmatprep.subr.mxu0 0.0
      %780 = vmatpush1.msra.mxu0 %v640
      %781 = vmatprep.subr.mxu0 0.0
      %782 = vmatpush1.msra.mxu0 %v639
      %783 = vmatprep.subr.mxu0 0.0
      %784 = vmatpush1.msra.mxu0 %v638
      %785 = vmatprep.subr.mxu0 0.0
      %786 = vmatpush1.msra.mxu0 %v637
      %787 = vmatprep.subr.mxu0 0.0
      %788 = vmatpush1.msra.mxu0 %v636
      %789 = vmatprep.subr.mxu0 0.0
      %790 = vmatpush1.msra.mxu0 %v635
      %791 = vmatprep.subr.mxu0 0.0
      %792 = vmatpush1.msra.mxu0 %v634
      %793 = vmatprep.subr.mxu0 0.0
      %794 = vmatpush2.msra.mxu0 0.0
      %795 = vmatprep.subr.mxu0 0.0
      %796 = vmatpush2.msra.mxu0 0.0
      %797 = vmatprep.subr.mxu0 0.0
      %798 = vmatpush2.msra.mxu0 0.0
      %799 = vmatprep.subr.mxu0 0.0
      %800 = vmatpush2.msra.mxu0 0.0
      %801 = vmatprep.subr.mxu0 0.0
      %802 = vmatpush2.msra.mxu0 0.0
      %803 = vmatprep.subr.mxu0 0.0
      %804 = vmatpush2.msra.mxu0 0.0
      %805 = vmatprep.subr.mxu0 0.0
      %806 = vmatpush2.msra.mxu0 0.0
      %807 = vmatprep.subr.mxu0 0.0
      %808 = vmatpush2.msra.mxu0 0.0
      %809 = vmatprep.subr.mxu0 0.0
      %810 = vmatpush2.msra.mxu0 0.0
      %811 = vmatprep.subr.mxu0 0.0
      %812 = vmatpush2.msra.mxu0 0.0
      %813 = vmatprep.subr.mxu0 0.0
      %814 = vmatpush2.msra.mxu0 0.0
      %815 = vmatprep.subr.mxu0 0.0
      %816 = vmatpush2.msra.mxu0 0.0
      %817 = vmatprep.subr.mxu0 0.0
      %818 = vmatpush2.msra.mxu0 0.0
      %819 = vmatprep.subr.mxu0 0.0
      %820 = vmatpush2.msra.mxu0 0.0
      %821 = vmatprep.subr.mxu0 0.0
      %822 = vmatpush2.msra.mxu0 %v651
      %823 = vmatprep.subr.mxu0 0.0
      %824 = vmatpush2.msra.mxu0 %v650
      %825 = vmatprep.mubr.f32.mxu0 %v756
      %826 = vmatmul.mubr.f32.gmra.mxu0 %v630
      %v827 = vpop.f32.mrf.mxu0
      %v828 = vadd.f32 %v747, %v827
      %v829 = vpop.f32.mrf.mxu0
      %830 = vmatprep.mubr.f32.mxu0 %v759
      %831 = vmatmul.mubr.f32.gmra.mxu0 %v632
      %v832 = vpop.f32.mrf.mxu0
      %v833 = vadd.f32 %v752, %v832
      %v834 = vpop.f32.mrf.mxu0
      %835 = vdwg.mxu0
      %s836 = scalar_lea.vmem %s273, 96
      %v837 = vld [vmem:[%s836] sm:$0xff]
      %v838 = vld [vmem:[%s836 + $0x8] sm:$0xff]
      %v839 = vld [vmem:[%s836 + $0x10] sm:$0x1]
      %v840 = vld [vmem:[%s836 + $0x18] sm:$0x1]
      %v841 = vld [vmem:[%s493] sm:$0xff]
      %v842 = vld [vmem:[%s493 + $0x8] sm:$0xff]
      %v843 = vld [vmem:[%s493 + $0x10] sm:$0xff]
      %v844 = vld [vmem:[%s493 + $0x18] sm:$0xff]
      %v845 = vld [vmem:[%s493 + $0x20] sm:$0xff]
      %v846 = vld [vmem:[%s493 + $0x28] sm:$0xff]
      %v847 = vld [vmem:[%s493 + $0x30] sm:$0xff]
      %v848 = vld [vmem:[%s493 + $0x38] sm:$0xff]
      %v849 = vld [vmem:[%s493 + $0x40] sm:$0xff]
      %v850 = vld [vmem:[%s493 + $0x48] sm:$0xff]
      %v851 = vld [vmem:[%s493 + $0x50] sm:$0xff]
      %v852 = vld [vmem:[%s493 + $0x58] sm:$0xff]
      %v853 = vld [vmem:[%s493 + $0x60] sm:$0xff]
      %v854 = vld [vmem:[%s493 + $0x68] sm:$0xff]
      %v855 = vld [vmem:[%s493 + $0x70] sm:$0xff]
      %v856 = vld [vmem:[%s493 + $0x78] sm:$0xff]
      %v857 = vld [vmem:[%s493 + $0x80] sm:$0xff]
      %v858 = vld [vmem:[%s493 + $0x88] sm:$0xff]
      %v860 = vsel %vm325, %v838, 0
      %v863 = vsel %vm325, %v840, 0
      %865 = vmatprep.subr.mxu0 0.0
      %866 = vmatpush1.msra.mxu0 %v856
      %867 = vmatprep.subr.mxu0 0.0
      %868 = vmatpush1.msra.mxu0 %v855
      %869 = vmatprep.subr.mxu0 0.0
      %870 = vmatpush1.msra.mxu0 %v854
      %871 = vmatprep.subr.mxu0 0.0
      %872 = vmatpush1.msra.mxu0 %v853
      %873 = vmatprep.subr.mxu0 0.0
      %874 = vmatpush1.msra.mxu0 %v852
      %875 = vmatprep.subr.mxu0 0.0
      %876 = vmatpush1.msra.mxu0 %v851
      %877 = vmatprep.subr.mxu0 0.0
      %878 = vmatpush1.msra.mxu0 %v850
      %879 = vmatprep.subr.mxu0 0.0
      %880 = vmatpush1.msra.mxu0 %v849
      %881 = vmatprep.subr.mxu0 0.0
      %882 = vmatpush1.msra.mxu0 %v848
      %883 = vmatprep.subr.mxu0 0.0
      %884 = vmatpush1.msra.mxu0 %v847
      %885 = vmatprep.subr.mxu0 0.0
      %886 = vmatpush1.msra.mxu0 %v846
      %887 = vmatprep.subr.mxu0 0.0
      %888 = vmatpush1.msra.mxu0 %v845
      %889 = vmatprep.subr.mxu0 0.0
      %890 = vmatpush1.msra.mxu0 %v844
      %891 = vmatprep.subr.mxu0 0.0
      %892 = vmatpush1.msra.mxu0 %v843
      %893 = vmatprep.subr.mxu0 0.0
      %894 = vmatpush1.msra.mxu0 %v842
      %895 = vmatprep.subr.mxu0 0.0
      %896 = vmatpush1.msra.mxu0 %v841
      %897 = vmatprep.subr.mxu0 0.0
      %898 = vmatpush2.msra.mxu0 0.0
      %899 = vmatprep.subr.mxu0 0.0
      %900 = vmatpush2.msra.mxu0 0.0
      %901 = vmatprep.subr.mxu0 0.0
      %902 = vmatpush2.msra.mxu0 0.0
      %903 = vmatprep.subr.mxu0 0.0
      %904 = vmatpush2.msra.mxu0 0.0
      %905 = vmatprep.subr.mxu0 0.0
      %906 = vmatpush2.msra.mxu0 0.0
      %907 = vmatprep.subr.mxu0 0.0
      %908 = vmatpush2.msra.mxu0 0.0
      %909 = vmatprep.subr.mxu0 0.0
      %910 = vmatpush2.msra.mxu0 0.0
      %911 = vmatprep.subr.mxu0 0.0
      %912 = vmatpush2.msra.mxu0 0.0
      %913 = vmatprep.subr.mxu0 0.0
      %914 = vmatpush2.msra.mxu0 0.0
      %915 = vmatprep.subr.mxu0 0.0
      %916 = vmatpush2.msra.mxu0 0.0
      %917 = vmatprep.subr.mxu0 0.0
      %918 = vmatpush2.msra.mxu0 0.0
      %919 = vmatprep.subr.mxu0 0.0
      %920 = vmatpush2.msra.mxu0 0.0
      %921 = vmatprep.subr.mxu0 0.0
      %922 = vmatpush2.msra.mxu0 0.0
      %923 = vmatprep.subr.mxu0 0.0
      %924 = vmatpush2.msra.mxu0 0.0
      %925 = vmatprep.subr.mxu0 0.0
      %926 = vmatpush2.msra.mxu0 %v858
      %927 = vmatprep.subr.mxu0 0.0
      %928 = vmatpush2.msra.mxu0 %v857
      %929 = vmatprep.mubr.f32.mxu0 %v860
      %930 = vmatmul.mubr.f32.gmra.mxu0 %v837
      %v931 = vpop.f32.mrf.mxu0
      %v932 = vadd.f32 0.0, %v931
      %v933 = vpop.f32.mrf.mxu0
      %934 = vmatprep.mubr.f32.mxu0 %v863
      %935 = vmatmul.mubr.f32.gmra.mxu0 %v839
      %v936 = vpop.f32.mrf.mxu0
      %v937 = vadd.f32 0.0, %v936
      %v938 = vpop.f32.mrf.mxu0
      %939 = vdwg.mxu0
      %v940 = vadd.f32 %v828, %v932
      %v941 = vadd.f32 %v833, %v937
      %v942 = vld [vmem:[%s2] sm:$0x1]
      %v944 = vlaneseq
      %v945 = vshrl.u32 %v944, 7
      %v946 = vsub.s32 0, %v945
      %v947 = vrot.slane %v942, %v946
      %v949 = vadd.f32 %v940, %v947
      %v950 = vadd.f32 %v941, %v947
      %s951 = scalar_lea.vmem %s278, 16
      %952 = vst.msk [vmem:[%s951] sm:$0xff] %vm604, %v949
      %953 = vst.msk [vmem:[%s951 + $0x8] sm:$0x1] %vm606, %v950
      %v954 = vsel %vm604, %v949, 0.0
      %v955 = vsel %vm606, %v950, 0.0
      %v956 = vadd.f32 %v954, %v955
      %v957 = vrot.slane %v956, 4
      %v958 = vadd.f32 %v956, %v957
      %v959 = vrot.slane %v958, 2
      %v960 = vadd.f32 %v958, %v959
      %v961 = vrot.slane %v960, 1
      %v962 = vadd.f32 %v960, %v961
      %v963 = vadd.f32 %v617, %v962
      %v964 = vmul.f32 %v949, %v949
      %v965 = vmul.f32 %v950, %v950
      %v966 = vsel %vm604, %v964, 0.0
      %v967 = vsel %vm606, %v965, 0.0
      %v968 = vadd.f32 %v966, %v967
      %v969 = vrot.slane %v968, 4
      %v970 = vadd.f32 %v968, %v969
      %v971 = vrot.slane %v970, 2
      %v972 = vadd.f32 %v970, %v971
      %v973 = vrot.slane %v972, 1
      %v974 = vadd.f32 %v972, %v973
      %v975 = vadd.f32 %v629, %v974
      %v976 = vmul.f32 %v963, 0.055555556
      %v977 = vmul.f32 %v975, 0.055555556
      %v978 = vmul.f32 %v976, %v976
      %v979 = vsub.f32 %v977, %v978
      %v980 = vadd.f32 %v979, 1e-05
      %v981 = vrsqrt.pop %v980
      %v982 = vld [vmem:[%s3] sm:$0x1]
      %v983 = vmul.f32 %v981, %v982
      %v984 = vld [vmem:[%s4] sm:$0x1]
      %v985 = vmul.f32 %v976, %v983
      %v986 = vsub.f32 %v984, %v985
      %v987 = vld [vmem:[%s278] sm:$0xff]
      %v988 = vld [vmem:[%s278 + $0x8] sm:$0x1]
      %v989 = vlaneseq
      %v990 = vshrl.u32 %v989, 7
      %v991 = vsub.s32 0, %v990
      %v992 = vrot.slane %v983, %v991
      %v993 = vmul.f32 %v987, %v992
      %v994 = vmul.f32 %v988, %v992
      %v996 = vlaneseq
      %v997 = vshrl.u32 %v996, 7
      %v998 = vsub.s32 0, %v997
      %v999 = vrot.slane %v986, %v998
      %v1001 = vadd.f32 %v993, %v999
      %v1002 = vadd.f32 %v994, %v999
      %v1003 = vmax.f32 %v1001, 0.0
      %v1004 = vmax.f32 %v1002, 0.0
      %v1005 = vld [vmem:[%s5] sm:$0xff]
      %v1006 = vld [vmem:[%s5 + $0x8] sm:$0xff]
      %v1007 = vld [vmem:[%s5 + $0x10] sm:$0xff]
      %v1008 = vld [vmem:[%s5 + $0x18] sm:$0xff]
      %v1009 = vld [vmem:[%s6] sm:$0x1]
      %v1011 = vlaneseq
      %v1012 = vshrl.u32 %v1011, 7
      %v1013 = vsub.s32 0, %v1012
      %v1014 = vrot.slane %v1009, %v1013
      %v1017 = vsel %vm604, %v1003, 0
      %v1020 = vsel %vm604, %v1004, 0
      %1022 = vmatprep.subr.mxu0 0.0
      %1023 = vmatpush1.msra.mxu0 0.0
      %1024 = vmatprep.subr.mxu0 0.0
      %1025 = vmatpush1.msra.mxu0 0.0
      %1026 = vmatprep.subr.mxu0 0.0
      %1027 = vmatpush1.msra.mxu0 0.0
      %1028 = vmatprep.subr.mxu0 0.0
      %1029 = vmatpush1.msra.mxu0 0.0
      %1030 = vmatprep.subr.mxu0 0.0
      %1031 = vmatpush1.msra.mxu0 0.0
      %1032 = vmatprep.subr.mxu0 0.0
      %1033 = vmatpush1.msra.mxu0 0.0
      %1034 = vmatprep.subr.mxu0 0.0
      %1035 = vmatpush1.msra.mxu0 0.0
      %1036 = vmatprep.subr.mxu0 0.0
      %1037 = vmatpush1.msra.mxu0 0.0
      %1038 = vmatprep.subr.mxu0 0.0
      %1039 = vmatpush1.msra.mxu0 0.0
      %1040 = vmatprep.subr.mxu0 0.0
      %1041 = vmatpush1.msra.mxu0 0.0
      %1042 = vmatprep.subr.mxu0 0.0
      %1043 = vmatpush1.msra.mxu0 0.0
      %1044 = vmatprep.subr.mxu0 0.0
      %1045 = vmatpush1.msra.mxu0 0.0
      %1046 = vmatprep.subr.mxu0 0.0
      %1047 = vmatpush1.msra.mxu0 %v1008
      %1048 = vmatprep.subr.mxu0 0.0
      %1049 = vmatpush1.msra.mxu0 %v1007
      %1050 = vmatprep.subr.mxu0 0.0
      %1051 = vmatpush1.msra.mxu0 %v1006
      %1052 = vmatprep.subr.mxu0 0.0
      %1053 = vmatpush1.msra.mxu0 %v1005
      %1054 = vmatprep.subr.mxu0 0.0
      %1055 = vmatpush2.msra.mxu0 0.0
      %1056 = vmatprep.subr.mxu0 0.0
      %1057 = vmatpush2.msra.mxu0 0.0
      %1058 = vmatprep.subr.mxu0 0.0
      %1059 = vmatpush2.msra.mxu0 0.0
      %1060 = vmatprep.subr.mxu0 0.0
      %1061 = vmatpush2.msra.mxu0 0.0
      %1062 = vmatprep.subr.mxu0 0.0
      %1063 = vmatpush2.msra.mxu0 0.0
      %1064 = vmatprep.subr.mxu0 0.0
      %1065 = vmatpush2.msra.mxu0 0.0
      %1066 = vmatprep.subr.mxu0 0.0
      %1067 = vmatpush2.msra.mxu0 0.0
      %1068 = vmatprep.subr.mxu0 0.0
      %1069 = vmatpush2.msra.mxu0 0.0
      %1070 = vmatprep.subr.mxu0 0.0
      %1071 = vmatpush2.msra.mxu0 0.0
      %1072 = vmatprep.subr.mxu0 0.0
      %1073 = vmatpush2.msra.mxu0 0.0
      %1074 = vmatprep.subr.mxu0 0.0
      %1075 = vmatpush2.msra.mxu0 0.0
      %1076 = vmatprep.subr.mxu0 0.0
      %1077 = vmatpush2.msra.mxu0 0.0
      %1078 = vmatprep.subr.mxu0 0.0
      %1079 = vmatpush2.msra.mxu0 0.0
      %1080 = vmatprep.subr.mxu0 0.0
      %1081 = vmatpush2.msra.mxu0 0.0
      %1082 = vmatprep.subr.mxu0 0.0
      %1083 = vmatpush2.msra.mxu0 0.0
      %1084 = vmatprep.subr.mxu0 0.0
      %1085 = vmatpush2.msra.mxu0 0.0
      %1086 = vmatprep.mubr.f32.mxu0 0.0
      %1087 = vmatmul.mubr.f32.gmra.mxu0 %v1017
      %v1088 = vpop.f32.mrf.mxu0
      %v1089 = vadd.f32 %v1014, %v1088
      %v1090 = vpop.f32.mrf.mxu0
      %1091 = vmatprep.mubr.f32.mxu0 0.0
      %1092 = vmatmul.mubr.f32.gmra.mxu0 %v1020
      %v1093 = vpop.f32.mrf.mxu0
      %v1094 = vadd.f32 %v1014, %v1093
      %v1095 = vpop.f32.mrf.mxu0
      %1096 = vdwg.mxu0
      %1097 = vst.msk [vmem:[%s278] sm:$0xff] %vm604, %v1089
      %1098 = vst.msk [vmem:[%s278 + $0x8] sm:$0x1] %vm606, %v1094
      %v1099 = vld [vmem:[%s951] sm:$0xff]
      %v1100 = vld [vmem:[%s951 + $0x8] sm:$0x1]
      %v1101 = vmul.f32 %v1099, %v992
      %v1102 = vmul.f32 %v1100, %v992
      %v1103 = vadd.f32 %v1101, %v999
      %v1104 = vadd.f32 %v1102, %v999
      %v1105 = vmax.f32 %v1103, 0.0
      %v1106 = vmax.f32 %v1104, 0.0
      %v1107 = vld [vmem:[%s5] sm:$0xff]
      %v1108 = vld [vmem:[%s5 + $0x8] sm:$0xff]
      %v1109 = vld [vmem:[%s5 + $0x10] sm:$0xff]
      %v1110 = vld [vmem:[%s5 + $0x18] sm:$0xff]
      %v1111 = vld [vmem:[%s6] sm:$0x1]
      %v1113 = vlaneseq
      %v1114 = vshrl.u32 %v1113, 7
      %v1115 = vsub.s32 0, %v1114
      %v1116 = vrot.slane %v1111, %v1115
      %v1119 = vsel %vm604, %v1105, 0
      %v1122 = vsel %vm604, %v1106, 0
      %1124 = vmatprep.subr.mxu0 0.0
      %1125 = vmatpush1.msra.mxu0 0.0
      %1126 = vmatprep.subr.mxu0 0.0
      %1127 = vmatpush1.msra.mxu0 0.0
      %1128 = vmatprep.subr.mxu0 0.0
      %1129 = vmatpush1.msra.mxu0 0.0
      %1130 = vmatprep.subr.mxu0 0.0
      %1131 = vmatpush1.msra.mxu0 0.0
      %1132 = vmatprep.subr.mxu0 0.0
      %1133 = vmatpush1.msra.mxu0 0.0
      %1134 = vmatprep.subr.mxu0 0.0
      %1135 = vmatpush1.msra.mxu0 0.0
      %1136 = vmatprep.subr.mxu0 0.0
      %1137 = vmatpush1.msra.mxu0 0.0
      %1138 = vmatprep.subr.mxu0 0.0
      %1139 = vmatpush1.msra.mxu0 0.0
      %1140 = vmatprep.subr.mxu0 0.0
      %1141 = vmatpush1.msra.mxu0 0.0
      %1142 = vmatprep.subr.mxu0 0.0
      %1143 = vmatpush1.msra.mxu0 0.0
      %1144 = vmatprep.subr.mxu0 0.0
      %1145 = vmatpush1.msra.mxu0 0.0
      %1146 = vmatprep.subr.mxu0 0.0
      %1147 = vmatpush1.msra.mxu0 0.0
      %1148 = vmatprep.subr.mxu0 0.0
      %1149 = vmatpush1.msra.mxu0 %v1110
      %1150 = vmatprep.subr.mxu0 0.0
      %1151 = vmatpush1.msra.mxu0 %v1109
      %1152 = vmatprep.subr.mxu0 0.0
      %1153 = vmatpush1.msra.mxu0 %v1108
      %1154 = vmatprep.subr.mxu0 0.0
      %1155 = vmatpush1.msra.mxu0 %v1107
      %1156 = vmatprep.subr.mxu0 0.0
      %1157 = vmatpush2.msra.mxu0 0.0
      %1158 = vmatprep.subr.mxu0 0.0
      %1159 = vmatpush2.msra.mxu0 0.0
      %1160 = vmatprep.subr.mxu0 0.0
      %1161 = vmatpush2.msra.mxu0 0.0
      %1162 = vmatprep.subr.mxu0 0.0
      %1163 = vmatpush2.msra.mxu0 0.0
      %1164 = vmatprep.subr.mxu0 0.0
      %1165 = vmatpush2.msra.mxu0 0.0
      %1166 = vmatprep.subr.mxu0 0.0
      %1167 = vmatpush2.msra.mxu0 0.0
      %1168 = vmatprep.subr.mxu0 0.0
      %1169 = vmatpush2.msra.mxu0 0.0
      %1170 = vmatprep.subr.mxu0 0.0
      %1171 = vmatpush2.msra.mxu0 0.0
      %1172 = vmatprep.subr.mxu0 0.0
      %1173 = vmatpush2.msra.mxu0 0.0
      %1174 = vmatprep.subr.mxu0 0.0
      %1175 = vmatpush2.msra.mxu0 0.0
      %1176 = vmatprep.subr.mxu0 0.0
      %1177 = vmatpush2.msra.mxu0 0.0
      %1178 = vmatprep.subr.mxu0 0.0
      %1179 = vmatpush2.msra.mxu0 0.0
      %1180 = vmatprep.subr.mxu0 0.0
      %1181 = vmatpush2.msra.mxu0 0.0
      %1182 = vmatprep.subr.mxu0 0.0
      %1183 = vmatpush2.msra.mxu0 0.0
      %1184 = vmatprep.subr.mxu0 0.0
      %1185 = vmatpush2.msra.mxu0 0.0
      %1186 = vmatprep.subr.mxu0 0.0
      %1187 = vmatpush2.msra.mxu0 0.0
      %1188 = vmatprep.mubr.f32.mxu0 0.0
      %1189 = vmatmul.mubr.f32.gmra.mxu0 %v1119
      %v1190 = vpop.f32.mrf.mxu0
      %v1191 = vadd.f32 %v1116, %v1190
      %v1192 = vpop.f32.mrf.mxu0
      %1193 = vmatprep.mubr.f32.mxu0 0.0
      %1194 = vmatmul.mubr.f32.gmra.mxu0 %v1122
      %v1195 = vpop.f32.mrf.mxu0
      %v1196 = vadd.f32 %v1116, %v1195
      %v1197 = vpop.f32.mrf.mxu0
      %1198 = vdwg.mxu0
      %1199 = vst.msk [vmem:[%s951] sm:$0xff] %vm604, %v1191
      %1200 = vst.msk [vmem:[%s951 + $0x8] sm:$0x1] %vm606, %v1196
      %p1201 = scmp.lt.s32.totalorder %s18, 1
      %s1202 = scalar_select %p1201, %s18, 1
      %s1203 = smul.addr %s1202, 4
      %s1204 = smul.addr %s1203, 8
      %s1205 = scalar_lea.vmem %s7, %s1204
      // Predicated region
      $region49: #{patch_conv3d_forward.5} parent=47 // pred_check
        %p1206 = pneg %p188
      $region50: #{patch_conv3d_forward.5} parent=47 // pred_check_branch
        %1208 = sbr.rel (%p1206) target = $region52
      $region51: #{patch_conv3d_forward.5} parent=47 // pred_region
        _
      $region52: #{patch_conv3d_forward.5} parent=47 // pred_fallthru
        _
    $region48: #{patch_conv3d_forward.5} parent=5 // pred_fallthru
      _
    %p1209 = scmp.le.s32.totalorder 2, %s13
    // Predicated region
    $region53: #{patch_conv3d_forward.5} parent=5 // pred_check
      %p1210 = pneg %p1209
    $region54: #{patch_conv3d_forward.5} parent=5 // pred_check_branch
      %1212 = sbr.rel (%p1210) target = $region56
    $region55: #{patch_conv3d_forward.5} parent=5 // pred_region
      %s1213 = ssub.s32 %s13, 2
      // Predicated region
      $region57: #{patch_conv3d_forward.5} parent=55 // pred_check
        %p1214 = pneg %p194
      $region58: #{patch_conv3d_forward.5} parent=55 // pred_check_branch
        %1216 = sbr.rel (%p1214) target = $region60
      $region59: #{patch_conv3d_forward.5} parent=55 // pred_region
        %p1217 = scmp.lt.s32.totalorder %s19, 1
        %s1218 = scalar_select %p1217, %s19, 1
        %s1219 = smul.addr %s1218, 4
        %s1220 = smul.addr %s1219, 8
        %s1221 = scalar_lea.vmem %s7, %s1220
      $region60: #{patch_conv3d_forward.5} parent=55 // pred_fallthru
        _
    $region56: #{patch_conv3d_forward.5} parent=5 // pred_fallthru
      _
  $region6: #{patch_conv3d_forward.5} parent=0 // loop_footer
    %s17 = sadd.s32 1, %s13
  $region7: #{patch_conv3d_forward.5} parent=0 // loop_footer_branch
    %12 = sbr.rel target = $region3
  $region8: #{patch_conv3d_forward.5} parent=0 // loop_exit
    _

</llo_original>
